<compile_context>
chip_gen: v5e
topology: v5e:2x2
jax: 0.10.0
libtpu: 0.0.40
codegen_flags: <defaults>
</compile_context>

<pallas_src>
import jax
import jax.numpy as jnp
from jax.experimental import pallas as pl
from jax.experimental.pallas import tpu as pltpu

N_AGE = 9
N_GENDER = 2
N_HEAD = N_AGE + N_GENDER
MAX_B_TILE = 512  # sized so weights (~2.2 MiB bf16) + 2x double-buffered x tiles fit
                  # the default scoped VMEM on all of v5e/v6e/v7x.


def _argmax_last(logits):
    """First-occurrence argmax along the last axis, keepdims, int32."""
    m = jnp.max(logits, axis=-1, keepdims=True)
    idx = jax.lax.broadcasted_iota(jnp.int32, logits.shape, logits.ndim - 1)
    big = jnp.iinfo(jnp.int32).max
    cand = jnp.where(logits == m, idx, big)
    return jnp.min(cand, axis=-1, keepdims=True)


def age_gender_kernel(x_ref, w1_ref, b1_ref, w2_ref, b2_ref, w3_ref, b3_ref,
                      wh_ref, bh_ref, out_ref):
    # MXU operands in bf16 (weights already stored bf16), f32 accumulate;
    # bias/ReLU/argmax on the f32 accumulator output.
    x = x_ref[...].astype(jnp.bfloat16)

    # intermediate: Linear(2048,512) -> ReLU -> Dropout -> Linear(512,128)
    #               -> ReLU -> Dropout -> Linear(128,64) -> ReLU
    h = jnp.dot(x, w1_ref[...], preferred_element_type=jnp.float32) + b1_ref[...]
    h = jnp.maximum(h, 0.0)
    # TODO(synk): Dropout(p=0.4) layers are identity here (eval-mode semantics);
    # training-mode stochastic dropout is not reproduced.
    h = jnp.dot(h.astype(jnp.bfloat16), w2_ref[...],
                preferred_element_type=jnp.float32) + b2_ref[...]
    h = jnp.maximum(h, 0.0)
    h = jnp.dot(h.astype(jnp.bfloat16), w3_ref[...],
                preferred_element_type=jnp.float32) + b3_ref[...]
    h = jnp.maximum(h, 0.0)

    # Fused heads: single (64, 11) matmul, then slice age/gender logits.
    logits = jnp.dot(h.astype(jnp.bfloat16), wh_ref[...],
                     preferred_element_type=jnp.float32) + bh_ref[...]
    age_logits = logits[:, :N_AGE]
    gen_logits = logits[:, N_AGE:N_HEAD]

    age = _argmax_last(age_logits)                                        # (Bt, 1)
    # 2-class argmax as a compare; strict > keeps first-occurrence tie-break.
    gender = (gen_logits[:, 1:2] > gen_logits[:, 0:1]).astype(jnp.int32)  # (Bt, 1)

    out_ref[...] = jnp.concatenate([gender, age], axis=-1)


def prepare_params(params):
    """One-time conversion of PyTorch-layout params to kernel layout.

    Transposes to (in, out), casts weights to bf16, fuses the two heads into a
    single (64, 11) weight / (1, 11) bias. Do this once at init, not per call.
    """
    (w1, b1), (w2, b2), (w3, b3), (wa, ba), (wg, bg) = params
    wh = jnp.concatenate([wa, wg], axis=0)   # (11, 64), rows: [age(9) | gender(2)]
    bh = jnp.concatenate([ba, bg], axis=0)   # (11,)
    return (
        jnp.asarray(w1.T, jnp.bfloat16), b1[None, :].astype(jnp.float32),
        jnp.asarray(w2.T, jnp.bfloat16), b2[None, :].astype(jnp.float32),
        jnp.asarray(w3.T, jnp.bfloat16), b3[None, :].astype(jnp.float32),
        jnp.asarray(wh.T, jnp.bfloat16), bh[None, :].astype(jnp.float32),
    )


def age_gender_forward(x, prep):
    """Whole forward pass in one pallas_call.

    x: (B, 2048) float32
    prep: output of prepare_params.
    Returns (gender, age): int32 arrays of shape (B,).
    """
    w1, b1, w2, b2, w3, b3, wh, bh = prep
    B, F = x.shape

    # Pad batch to a multiple of 8 (sublane granularity); padded rows discarded.
    pad = (-B) % 8
    if pad:
        x = jnp.pad(x, ((0, pad), (0, 0)))
    Bp = x.shape[0]

    # Single grid step at small B (no extra per-step overhead); batch-tile only
    # when B is large, keeping weights VMEM-resident via constant index_maps.
    b_tile = Bp
    if Bp > MAX_B_TILE and Bp % MAX_B_TILE == 0:
        b_tile = MAX_B_TILE
    grid = (Bp // b_tile,)

    def const_spec(a):
        return pl.BlockSpec(a.shape, lambda i: (0,) * a.ndim)

    in_specs = [pl.BlockSpec((b_tile, F), lambda i: (i, 0))] + [
        const_spec(a) for a in (w1, b1, w2, b2, w3, b3, wh, bh)
    ]
    out_specs = pl.BlockSpec((b_tile, 2), lambda i: (i, 0))
    out_shape = jax.ShapeDtypeStruct((Bp, 2), jnp.int32)

    out = pl.pallas_call(
        age_gender_kernel,
        grid=grid,
        in_specs=in_specs,
        out_specs=out_specs,
        out_shape=out_shape,
        compiler_params=pltpu.CompilerParams(
            dimension_semantics=("parallel",)),
    )(x, w1, b1, w2, b2, w3, b3, wh, bh)

    return out[:B, 0], out[:B, 1]


def init_params(key):
    """Deterministic init matching the PyTorch layer shapes (out, in)."""
    layer_dims = [(2048, 512), (512, 128), (128, 64), (64, 9), (64, 2)]
    params = []
    for fan_in, fan_out in layer_dims:
        key, kw, kb = jax.random.split(key, 3)
        bound = 1.0 / (fan_in ** 0.5)
        w = jax.random.uniform(kw, (fan_out, fan_in), jnp.float32, -bound, bound)
        b = jax.random.uniform(kb, (fan_out,), jnp.float32, -bound, bound)
        params.append((w, b))
    return params


def reference_forward(x, params):
    """Plain-JAX reference of the PyTorch forward (eval mode), mirroring the
    kernel's precision (bf16 matmul operands, f32 accumulate) so argmax does
    not flip on near-ties."""
    (w1, b1), (w2, b2), (w3, b3), (wa, ba), (wg, bg) = params

    def lin(h, w, b):
        return jnp.dot(h.astype(jnp.bfloat16), w.T.astype(jnp.bfloat16),
                       preferred_element_type=jnp.float32) + b

    h = jnp.maximum(lin(x, w1, b1), 0.0)
    h = jnp.maximum(lin(h, w2, b2), 0.0)
    h = jnp.maximum(lin(h, w3, b3), 0.0)
    age = jnp.argmax(lin(h, wa, ba), axis=1).astype(jnp.int32)
    gender = jnp.argmax(lin(h, wg, bg), axis=1).astype(jnp.int32)
    return gender, age


if __name__ == "__main__":
    key = jax.random.PRNGKey(0)
    kx, kp = jax.random.split(key)

    B = 8
    x = jax.random.normal(kx, (B, 2048), dtype=jnp.float32)
    params = init_params(kp)
    prep = prepare_params(params)   # one-time layout/dtype conversion (not per-call)

    gender, age = age_gender_forward(x, prep)
    jax.block_until_ready((gender, age))

    ref_gender, ref_age = reference_forward(x, params)
    assert gender.shape == (B,) and age.shape == (B,)
    assert bool(jnp.all(gender == ref_gender)), "gender mismatch vs reference"
    assert bool(jnp.all(age == ref_age)), "age mismatch vs reference"

    print("KERNEL_OK")
</pallas_src>

<mosaic_0001>
module attributes {stable_mosaic.version = 11 : i64} {
  func.func @age_gender_kernel(%arg0: i32, %arg1: memref<8x2048xf32, #tpu.memory_space<vmem>>, %arg2: memref<2048x512xbf16, #tpu.memory_space<vmem>>, %arg3: memref<1x512xf32, #tpu.memory_space<vmem>>, %arg4: memref<512x128xbf16, #tpu.memory_space<vmem>>, %arg5: memref<1x128xf32, #tpu.memory_space<vmem>>, %arg6: memref<128x64xbf16, #tpu.memory_space<vmem>>, %arg7: memref<1x64xf32, #tpu.memory_space<vmem>>, %arg8: memref<64x11xbf16, #tpu.memory_space<vmem>>, %arg9: memref<1x11xf32, #tpu.memory_space<vmem>>, %arg10: memref<8x2xi32, #tpu.memory_space<vmem>>) attributes {dimension_semantics = [#tpu.dimension_semantics<parallel>], iteration_bounds = array<i64: 1>, scalar_prefetch = 0 : i64, scratch_operands = 0 : i64, tpu.core_type = #tpu.core_type<tc>, window_params = [{transform_indices = @transform_0, window_bounds = array<i64: 8, 2048>}, {pipeline_mode = #tpu.pipeline_mode<synchronous>, transform_indices = @transform_1, window_bounds = array<i64: 2048, 512>}, {pipeline_mode = #tpu.pipeline_mode<synchronous>, transform_indices = @transform_2, window_bounds = array<i64: 1, 512>}, {pipeline_mode = #tpu.pipeline_mode<synchronous>, transform_indices = @transform_3, window_bounds = array<i64: 512, 128>}, {pipeline_mode = #tpu.pipeline_mode<synchronous>, transform_indices = @transform_4, window_bounds = array<i64: 1, 128>}, {pipeline_mode = #tpu.pipeline_mode<synchronous>, transform_indices = @transform_5, window_bounds = array<i64: 128, 64>}, {pipeline_mode = #tpu.pipeline_mode<synchronous>, transform_indices = @transform_6, window_bounds = array<i64: 1, 64>}, {pipeline_mode = #tpu.pipeline_mode<synchronous>, transform_indices = @transform_7, window_bounds = array<i64: 64, 11>}, {pipeline_mode = #tpu.pipeline_mode<synchronous>, transform_indices = @transform_8, window_bounds = array<i64: 1, 11>}, {transform_indices = @transform_9, window_bounds = array<i64: 8, 2>}]} {
    %c0 = arith.constant 0 : index
    %c0_0 = arith.constant 0 : index
    %0 = vector.load %arg1[%c0, %c0_0] : memref<8x2048xf32, #tpu.memory_space<vmem>>, vector<8x2048xf32>
    %1 = arith.truncf %0 : vector<8x2048xf32> to vector<8x2048xbf16>
    %c0_1 = arith.constant 0 : index
    %c0_2 = arith.constant 0 : index
    %2 = vector.load %arg2[%c0_1, %c0_2] : memref<2048x512xbf16, #tpu.memory_space<vmem>>, vector<2048x512xbf16>
    %cst = arith.constant dense<0.000000e+00> : vector<8x512xf32>
    %3 = tpu.matmul %1, %2, %cst {dimension_numbers = #tpu.dot_dimension_numbers<[1], [0], [0], [1], [0, 0, 1, 1], [], []>} : vector<8x2048xbf16>, vector<2048x512xbf16>, vector<8x512xf32> -> vector<8x512xf32>
    %c0_3 = arith.constant 0 : index
    %c0_4 = arith.constant 0 : index
    %4 = vector.load %arg3[%c0_3, %c0_4] : memref<1x512xf32, #tpu.memory_space<vmem>>, vector<1x512xf32>
    %5 = vector.broadcast %4 : vector<1x512xf32> to vector<8x512xf32>
    %6 = arith.addf %3, %5 : vector<8x512xf32>
    %cst_5 = arith.constant 0.000000e+00 : f32
    %7 = vector.broadcast %cst_5 : f32 to vector<8x512xf32>
    %8 = arith.maximumf %6, %7 : vector<8x512xf32>
    %9 = arith.truncf %8 : vector<8x512xf32> to vector<8x512xbf16>
    %c0_6 = arith.constant 0 : index
    %c0_7 = arith.constant 0 : index
    %10 = vector.load %arg4[%c0_6, %c0_7] : memref<512x128xbf16, #tpu.memory_space<vmem>>, vector<512x128xbf16>
    %cst_8 = arith.constant dense<0.000000e+00> : vector<8x128xf32>
    %11 = tpu.matmul %9, %10, %cst_8 {dimension_numbers = #tpu.dot_dimension_numbers<[1], [0], [0], [1], [0, 0, 1, 1], [], []>} : vector<8x512xbf16>, vector<512x128xbf16>, vector<8x128xf32> -> vector<8x128xf32>
    %c0_9 = arith.constant 0 : index
    %c0_10 = arith.constant 0 : index
    %12 = vector.load %arg5[%c0_9, %c0_10] : memref<1x128xf32, #tpu.memory_space<vmem>>, vector<1x128xf32>
    %13 = vector.broadcast %12 : vector<1x128xf32> to vector<8x128xf32>
    %14 = arith.addf %11, %13 : vector<8x128xf32>
    %cst_11 = arith.constant 0.000000e+00 : f32
    %15 = vector.broadcast %cst_11 : f32 to vector<8x128xf32>
    %16 = arith.maximumf %14, %15 : vector<8x128xf32>
    %17 = arith.truncf %16 : vector<8x128xf32> to vector<8x128xbf16>
    %c0_12 = arith.constant 0 : index
    %c0_13 = arith.constant 0 : index
    %18 = vector.load %arg6[%c0_12, %c0_13] : memref<128x64xbf16, #tpu.memory_space<vmem>>, vector<128x64xbf16>
    %cst_14 = arith.constant dense<0.000000e+00> : vector<8x64xf32>
    %19 = tpu.matmul %17, %18, %cst_14 {dimension_numbers = #tpu.dot_dimension_numbers<[1], [0], [0], [1], [0, 0, 1, 1], [], []>} : vector<8x128xbf16>, vector<128x64xbf16>, vector<8x64xf32> -> vector<8x64xf32>
    %c0_15 = arith.constant 0 : index
    %c0_16 = arith.constant 0 : index
    %20 = vector.load %arg7[%c0_15, %c0_16] : memref<1x64xf32, #tpu.memory_space<vmem>>, vector<1x64xf32>
    %21 = vector.broadcast %20 : vector<1x64xf32> to vector<8x64xf32>
    %22 = arith.addf %19, %21 : vector<8x64xf32>
    %cst_17 = arith.constant 0.000000e+00 : f32
    %23 = vector.broadcast %cst_17 : f32 to vector<8x64xf32>
    %24 = arith.maximumf %22, %23 : vector<8x64xf32>
    %25 = arith.truncf %24 : vector<8x64xf32> to vector<8x64xbf16>
    %c0_18 = arith.constant 0 : index
    %c0_19 = arith.constant 0 : index
    %26 = vector.load %arg8[%c0_18, %c0_19] : memref<64x11xbf16, #tpu.memory_space<vmem>>, vector<64x11xbf16>
    %cst_20 = arith.constant dense<0.000000e+00> : vector<8x11xf32>
    %27 = tpu.matmul %25, %26, %cst_20 {dimension_numbers = #tpu.dot_dimension_numbers<[1], [0], [0], [1], [0, 0, 1, 1], [], []>} : vector<8x64xbf16>, vector<64x11xbf16>, vector<8x11xf32> -> vector<8x11xf32>
    %c0_21 = arith.constant 0 : index
    %c0_22 = arith.constant 0 : index
    %28 = vector.load %arg9[%c0_21, %c0_22] : memref<1x11xf32, #tpu.memory_space<vmem>>, vector<1x11xf32>
    %29 = vector.broadcast %28 : vector<1x11xf32> to vector<8x11xf32>
    %30 = arith.addf %27, %29 : vector<8x11xf32>
    %31 = vector.extract_strided_slice %30 {offsets = [0, 0], sizes = [8, 9], strides = [1, 1]} : vector<8x11xf32> to vector<8x9xf32>
    %32 = vector.extract_strided_slice %30 {offsets = [0, 9], sizes = [8, 2], strides = [1, 1]} : vector<8x11xf32> to vector<8x2xf32>
    %cst_23 = arith.constant dense<0xFF800000> : vector<8xf32>
    %33 = vector.multi_reduction <maximumf>, %31, %cst_23 [1] : vector<8x9xf32> to vector<8xf32>
    %34 = vector.shape_cast %33 : vector<8xf32> to vector<8x1xf32>
    %35 = tpu.iota {dimensions = array<i32: 1>} : vector<8x9xi32>
    %36 = vector.broadcast %34 : vector<8x1xf32> to vector<8x9xf32>
    %37 = arith.cmpf oeq, %31, %36 : vector<8x9xf32>
    %c2147483647_i32 = arith.constant 2147483647 : i32
    %38 = vector.broadcast %c2147483647_i32 : i32 to vector<8x9xi32>
    %39 = arith.select %37, %35, %38 : vector<8x9xi1>, vector<8x9xi32>
    %cst_24 = arith.constant dense<2147483647> : vector<8xi32>
    %40 = vector.multi_reduction <minsi>, %39, %cst_24 [1] : vector<8x9xi32> to vector<8xi32>
    %41 = vector.shape_cast %40 : vector<8xi32> to vector<8x1xi32>
    %42 = vector.extract_strided_slice %32 {offsets = [0, 1], sizes = [8, 1], strides = [1, 1]} : vector<8x2xf32> to vector<8x1xf32>
    %43 = vector.extract_strided_slice %32 {offsets = [0, 0], sizes = [8, 1], strides = [1, 1]} : vector<8x2xf32> to vector<8x1xf32>
    %44 = arith.cmpf ogt, %42, %43 : vector<8x1xf32>
    %45 = arith.extui %44 : vector<8x1xi1> to vector<8x1xi32>
    %46 = tpu.concatenate %45, %41 in 1 : vector<8x1xi32>, vector<8x1xi32> -> vector<8x2xi32>
    %c0_25 = arith.constant 0 : index
    %c0_26 = arith.constant 0 : index
    %47 = vector.load %arg10[%c0_25, %c0_26] : memref<8x2xi32, #tpu.memory_space<vmem>>, vector<8x2xi32>
    tpu.vector_store %arg10[%c0_25, %c0_26], %46 {strides = array<i32>} : memref<8x2xi32, #tpu.memory_space<vmem>>, vector<8x2xi32>,
    return
  }
  func.func @transform_0(%arg0: i32) -> (i32, i32) {
    %c0_i32 = arith.constant 0 : i32
    %c0_i32_0 = arith.constant 0 : i32
    return %arg0, %c0_i32 : i32, i32
  }
  func.func @transform_1(%arg0: i32) -> (i32, i32) {
    %c0_i32 = arith.constant 0 : i32
    %c0_i32_0 = arith.constant 0 : i32
    %c0_i32_1 = arith.constant 0 : i32
    return %c0_i32, %c0_i32_0 : i32, i32
  }
  func.func @transform_2(%arg0: i32) -> (i32, i32) {
    %c0_i32 = arith.constant 0 : i32
    %c0_i32_0 = arith.constant 0 : i32
    %c0_i32_1 = arith.constant 0 : i32
    return %c0_i32, %c0_i32_0 : i32, i32
  }
  func.func @transform_3(%arg0: i32) -> (i32, i32) {
    %c0_i32 = arith.constant 0 : i32
    %c0_i32_0 = arith.constant 0 : i32
    %c0_i32_1 = arith.constant 0 : i32
    return %c0_i32, %c0_i32_0 : i32, i32
  }
  func.func @transform_4(%arg0: i32) -> (i32, i32) {
    %c0_i32 = arith.constant 0 : i32
    %c0_i32_0 = arith.constant 0 : i32
    %c0_i32_1 = arith.constant 0 : i32
    return %c0_i32, %c0_i32_0 : i32, i32
  }
  func.func @transform_5(%arg0: i32) -> (i32, i32) {
    %c0_i32 = arith.constant 0 : i32
    %c0_i32_0 = arith.constant 0 : i32
    %c0_i32_1 = arith.constant 0 : i32
    return %c0_i32, %c0_i32_0 : i32, i32
  }
  func.func @transform_6(%arg0: i32) -> (i32, i32) {
    %c0_i32 = arith.constant 0 : i32
    %c0_i32_0 = arith.constant 0 : i32
    %c0_i32_1 = arith.constant 0 : i32
    return %c0_i32, %c0_i32_0 : i32, i32
  }
  func.func @transform_7(%arg0: i32) -> (i32, i32) {
    %c0_i32 = arith.constant 0 : i32
    %c0_i32_0 = arith.constant 0 : i32
    %c0_i32_1 = arith.constant 0 : i32
    return %c0_i32, %c0_i32_0 : i32, i32
  }
  func.func @transform_8(%arg0: i32) -> (i32, i32) {
    %c0_i32 = arith.constant 0 : i32
    %c0_i32_0 = arith.constant 0 : i32
    %c0_i32_1 = arith.constant 0 : i32
    return %c0_i32, %c0_i32_0 : i32, i32
  }
  func.func @transform_9(%arg0: i32) -> (i32, i32) {
    %c0_i32 = arith.constant 0 : i32
    %c0_i32_0 = arith.constant 0 : i32
    return %arg0, %c0_i32 : i32, i32
  }
}

</mosaic_0001>

<llo_original>
// kernel: tpu_custom_call.1
$region0: #{tpu_custom_call.1}
  #allocation0 [shape = 'u32[]', space=smem, size = 0x4, offset = 0x4, fixed_abs, tag = 'smem constant byte address 0x4 - core index']
  #allocation1 [shape = 'u32[72,128]{1,0:T(1,128)}', space=vmem, size = 0x9000, scoped, tag = 'internal scratch']
  %s0 = inlined_call_operand.hbm [shape: f32[8,2048], index: 0, kind: input, shape index: {}]
  %s1 = inlined_call_operand.hbm [shape: bf16[2048,512], index: 1, kind: input, shape index: {}]
  %s2 = inlined_call_operand.hbm [shape: f32[1,512], index: 2, kind: input, shape index: {}]
  %s3 = inlined_call_operand.hbm [shape: bf16[512,128], index: 3, kind: input, shape index: {}]
  %s4 = inlined_call_operand.hbm [shape: f32[1,128], index: 4, kind: input, shape index: {}]
  %s5 = inlined_call_operand.vmem [shape: bf16[128,64], index: 5, kind: input, shape index: {}]
  %s6 = inlined_call_operand.hbm [shape: f32[1,64], index: 6, kind: input, shape index: {}]
  %s7 = inlined_call_operand.vmem [shape: bf16[64,11], index: 7, kind: input, shape index: {}]
  %s8 = inlined_call_operand.hbm [shape: f32[1,11], index: 8, kind: input, shape index: {}]
  %s9 = inlined_call_operand.vmem [shape: s32[8,2], index: 9, kind: output, shape index: {}]
  %s10 = sld [smem:[#allocation0]]
  $region74: #{tpu_custom_call.1} parent=0
    _
  %s12 = ssub.s32 1, %s10
  %s13 = scalar_select 0, %s12, %s10
  $region1: #{tpu_custom_call.1} parent=0
    #allocation2 [shape = 'u8[65536]{0}', space=vmem, size = 0x10000, scoped, tag = 'input window, operand 0, single buffered']
    #allocation3 [shape = 's32[1]{0}', space=sflag, size = 0x4, scoped, tag = 'scoped memory for tpu_custom_call.1']
    #allocation4 [shape = 'u8[2097152]{0}', space=vmem, size = 0x200000, scoped, tag = 'input window, operand 1, single buffered']
    #allocation5 [shape = 's32[1]{0}', space=sflag, size = 0x4, scoped, tag = 'scoped memory for tpu_custom_call.1']
    #allocation6 [shape = 'u8[2048]{0}', space=vmem, size = 0x800, scoped, tag = 'input window, operand 2, single buffered']
    #allocation7 [shape = 'u8[131072]{0}', space=vmem, size = 0x20000, scoped, tag = 'input window, operand 3, single buffered']
    #allocation8 [shape = 's32[1]{0}', space=sflag, size = 0x4, scoped, tag = 'scoped memory for tpu_custom_call.1']
    #allocation9 [shape = 'u8[512]{0}', space=vmem, size = 0x400, scoped, tag = 'input window, operand 4, single buffered']
    #allocation10 [shape = 'u8[512]{0}', space=vmem, size = 0x400, scoped, tag = 'input window, operand 6, single buffered']
    #allocation11 [shape = 's32[1]{0}', space=sflag, size = 0x4, scoped, tag = 'scoped memory for tpu_custom_call.1']
    #allocation12 [shape = 'u8[512]{0}', space=vmem, size = 0x400, scoped, tag = 'input window, operand 8, single buffered']
    %14 = vsyncpa [#allocation3], 0
    %15 = vsyncpa [#allocation5], 0
    %16 = vsyncpa [#allocation8], 0
    %17 = vsyncpa [#allocation11], 0
    // Predicated region
    $region2: #{tpu_custom_call.1} parent=1 // pred_check
      _
    $region3: #{tpu_custom_call.1} parent=1 // pred_check_branch
      %19 = sbr.rel (0) target = $region5
    $region4: #{tpu_custom_call.1} parent=1 // pred_region
      %21 = vsyncadd [#allocation3], 0
      %s23 = sshll.u32 %s0, 4
      %s24 = int_to_ptr.hbm [resolvable:$true] %s23
      %s25 = sshll.u32 [#allocation2], 4
      %s26 = int_to_ptr.vmem [resolvable:$true] %s25
      %28 = dma.hbm_to_vmem [thread:$0]  %s24, 2048, %s26, [#allocation3]
    $region5: #{tpu_custom_call.1} parent=1 // pred_fallthru
      _
    // Predicated region
    $region6: #{tpu_custom_call.1} parent=1 // pred_check
      _
    $region7: #{tpu_custom_call.1} parent=1 // pred_check_branch
      %30 = sbr.rel (0) target = $region9
    $region8: #{tpu_custom_call.1} parent=1 // pred_region
      %32 = vsyncadd [#allocation5], 0
      %s33 = sshll.u32 %s1, 4
      %s34 = int_to_ptr.hbm [resolvable:$true] %s33
      %s35 = sshll.u32 [#allocation4], 4
      %s36 = int_to_ptr.vmem [resolvable:$true] %s35
      %41 = dma.hbm_to_vmem [thread:$0]  %s34, 65536, %s36, [#allocation5], 256, 256, 16
    $region9: #{tpu_custom_call.1} parent=1 // pred_fallthru
      _
    // Predicated region
    $region10: #{tpu_custom_call.1} parent=1 // pred_check
      _
    $region11: #{tpu_custom_call.1} parent=1 // pred_check_branch
      %43 = sbr.rel (0) target = $region13
    $region12: #{tpu_custom_call.1} parent=1 // pred_region
      %45 = vsyncadd [#allocation5], 0
      %s47 = sshll.u32 %s2, 4
      %s48 = int_to_ptr.hbm [resolvable:$true] %s47
      %s49 = sshll.u32 [#allocation6], 4
      %s50 = int_to_ptr.vmem [resolvable:$true] %s49
      %52 = dma.hbm_to_vmem [thread:$0]  %s48, 64, %s50, [#allocation5]
    $region13: #{tpu_custom_call.1} parent=1 // pred_fallthru
      _
    // Predicated region
    $region14: #{tpu_custom_call.1} parent=1 // pred_check
      _
    $region15: #{tpu_custom_call.1} parent=1 // pred_check_branch
      %54 = sbr.rel (0) target = $region17
    $region16: #{tpu_custom_call.1} parent=1 // pred_region
      %56 = vsyncadd [#allocation8], 0
      %s57 = sshll.u32 %s3, 4
      %s58 = int_to_ptr.hbm [resolvable:$true] %s57
      %s59 = sshll.u32 [#allocation7], 4
      %s60 = int_to_ptr.vmem [resolvable:$true] %s59
      %65 = dma.hbm_to_vmem [thread:$0]  %s58, 4096, %s60, [#allocation8], 64, 64, 4
    $region17: #{tpu_custom_call.1} parent=1 // pred_fallthru
      _
    // Predicated region
    $region18: #{tpu_custom_call.1} parent=1 // pred_check
      _
    $region19: #{tpu_custom_call.1} parent=1 // pred_check_branch
      %67 = sbr.rel (0) target = $region21
    $region20: #{tpu_custom_call.1} parent=1 // pred_region
      %69 = vsyncadd [#allocation8], 0
      %s71 = sshll.u32 %s4, 4
      %s72 = int_to_ptr.hbm [resolvable:$true] %s71
      %s73 = sshll.u32 [#allocation9], 4
      %s74 = int_to_ptr.vmem [resolvable:$true] %s73
      %76 = dma.hbm_to_vmem [thread:$0]  %s72, 16, %s74, [#allocation8]
    $region21: #{tpu_custom_call.1} parent=1 // pred_fallthru
      _
    // Predicated region
    $region22: #{tpu_custom_call.1} parent=1 // pred_check
      _
    $region23: #{tpu_custom_call.1} parent=1 // pred_check_branch
      %78 = sbr.rel (0) target = $region25
    $region24: #{tpu_custom_call.1} parent=1 // pred_region
      _
    $region25: #{tpu_custom_call.1} parent=1 // pred_fallthru
      _
    // Predicated region
    $region26: #{tpu_custom_call.1} parent=1 // pred_check
      _
    $region27: #{tpu_custom_call.1} parent=1 // pred_check_branch
      %80 = sbr.rel (0) target = $region29
    $region28: #{tpu_custom_call.1} parent=1 // pred_region
      %82 = vsyncadd [#allocation11], 0
      %s84 = sshll.u32 %s6, 4
      %s85 = int_to_ptr.hbm [resolvable:$true] %s84
      %s86 = sshll.u32 [#allocation10], 4
      %s87 = int_to_ptr.vmem [resolvable:$true] %s86
      %89 = dma.hbm_to_vmem [thread:$0]  %s85, 16, %s87, [#allocation11]
    $region29: #{tpu_custom_call.1} parent=1 // pred_fallthru
      _
    // Predicated region
    $region30: #{tpu_custom_call.1} parent=1 // pred_check
      _
    $region31: #{tpu_custom_call.1} parent=1 // pred_check_branch
      %91 = sbr.rel (0) target = $region33
    $region32: #{tpu_custom_call.1} parent=1 // pred_region
      _
    $region33: #{tpu_custom_call.1} parent=1 // pred_fallthru
      _
    // Predicated region
    $region34: #{tpu_custom_call.1} parent=1 // pred_check
      _
    $region35: #{tpu_custom_call.1} parent=1 // pred_check_branch
      %93 = sbr.rel (0) target = $region37
    $region36: #{tpu_custom_call.1} parent=1 // pred_region
      %95 = vsyncadd [#allocation11], 0
      %s97 = sshll.u32 %s8, 4
      %s98 = int_to_ptr.hbm [resolvable:$true] %s97
      %s99 = sshll.u32 [#allocation12], 4
      %s100 = int_to_ptr.vmem [resolvable:$true] %s99
      %102 = dma.hbm_to_vmem [thread:$0]  %s98, 16, %s100, [#allocation11]
    $region37: #{tpu_custom_call.1} parent=1 // pred_fallthru
      _
    // Predicated region
    $region38: #{tpu_custom_call.1} parent=1 // pred_check
      _
    $region39: #{tpu_custom_call.1} parent=1 // pred_check_branch
      %104 = sbr.rel (0) target = $region41
    $region40: #{tpu_custom_call.1} parent=1 // pred_region
      %106 = dma.done [#allocation3], 2048
    $region41: #{tpu_custom_call.1} parent=1 // pred_fallthru
      _
    // Predicated region
    $region42: #{tpu_custom_call.1} parent=1 // pred_check
      _
    $region43: #{tpu_custom_call.1} parent=1 // pred_check_branch
      %108 = sbr.rel (0) target = $region45
    $region44: #{tpu_custom_call.1} parent=1 // pred_region
      %110 = dma.done [#allocation5], 65536
    $region45: #{tpu_custom_call.1} parent=1 // pred_fallthru
      _
    // Predicated region
    $region46: #{tpu_custom_call.1} parent=1 // pred_check
      _
    $region47: #{tpu_custom_call.1} parent=1 // pred_check_branch
      %112 = sbr.rel (0) target = $region49
    $region48: #{tpu_custom_call.1} parent=1 // pred_region
      %114 = dma.done [#allocation5], 64
    $region49: #{tpu_custom_call.1} parent=1 // pred_fallthru
      _
    // Predicated region
    $region50: #{tpu_custom_call.1} parent=1 // pred_check
      _
    $region51: #{tpu_custom_call.1} parent=1 // pred_check_branch
      %116 = sbr.rel (0) target = $region53
    $region52: #{tpu_custom_call.1} parent=1 // pred_region
      %118 = dma.done [#allocation8], 4096
    $region53: #{tpu_custom_call.1} parent=1 // pred_fallthru
      _
    // Predicated region
    $region54: #{tpu_custom_call.1} parent=1 // pred_check
      _
    $region55: #{tpu_custom_call.1} parent=1 // pred_check_branch
      %120 = sbr.rel (0) target = $region57
    $region56: #{tpu_custom_call.1} parent=1 // pred_region
      %122 = dma.done [#allocation8], 16
    $region57: #{tpu_custom_call.1} parent=1 // pred_fallthru
      _
    // Predicated region
    $region58: #{tpu_custom_call.1} parent=1 // pred_check
      _
    $region59: #{tpu_custom_call.1} parent=1 // pred_check_branch
      %124 = sbr.rel (0) target = $region61
    $region60: #{tpu_custom_call.1} parent=1 // pred_region
      %126 = dma.done [#allocation11], 16
    $region61: #{tpu_custom_call.1} parent=1 // pred_fallthru
      _
    // Predicated region
    $region62: #{tpu_custom_call.1} parent=1 // pred_check
      _
    $region63: #{tpu_custom_call.1} parent=1 // pred_check_branch
      %128 = sbr.rel (0) target = $region65
    $region64: #{tpu_custom_call.1} parent=1 // pred_region
      %130 = dma.done [#allocation11], 16
    $region65: #{tpu_custom_call.1} parent=1 // pred_fallthru
      _
    %v132 = vld [vmem:[#allocation2] sm:$0xff]
    %v133 = vld [vmem:[#allocation2 + $0x8] sm:$0xff]
    %v134 = vld [vmem:[#allocation2 + $0x10] sm:$0xff]
    %v135 = vld [vmem:[#allocation2 + $0x18] sm:$0xff]
    %v136 = vld [vmem:[#allocation2 + $0x20] sm:$0xff]
    %v137 = vld [vmem:[#allocation2 + $0x28] sm:$0xff]
    %v138 = vld [vmem:[#allocation2 + $0x30] sm:$0xff]
    %v139 = vld [vmem:[#allocation2 + $0x38] sm:$0xff]
    %v140 = vld [vmem:[#allocation2 + $0x40] sm:$0xff]
    %v141 = vld [vmem:[#allocation2 + $0x48] sm:$0xff]
    %v142 = vld [vmem:[#allocation2 + $0x50] sm:$0xff]
    %v143 = vld [vmem:[#allocation2 + $0x58] sm:$0xff]
    %v144 = vld [vmem:[#allocation2 + $0x60] sm:$0xff]
    %v145 = vld [vmem:[#allocation2 + $0x68] sm:$0xff]
    %v146 = vld [vmem:[#allocation2 + $0x70] sm:$0xff]
    %v147 = vld [vmem:[#allocation2 + $0x78] sm:$0xff]
    %v148 = vpack.c.bf16 %v132, %v132
    %v149 = vpack.c.bf16 %v133, %v133
    %v150 = vpack.c.bf16 %v134, %v134
    %v151 = vpack.c.bf16 %v135, %v135
    %v152 = vpack.c.bf16 %v136, %v136
    %v153 = vpack.c.bf16 %v137, %v137
    %v154 = vpack.c.bf16 %v138, %v138
    %v155 = vpack.c.bf16 %v139, %v139
    %v156 = vpack.c.bf16 %v140, %v140
    %v157 = vpack.c.bf16 %v141, %v141
    %v158 = vpack.c.bf16 %v142, %v142
    %v159 = vpack.c.bf16 %v143, %v143
    %v160 = vpack.c.bf16 %v144, %v144
    %v161 = vpack.c.bf16 %v145, %v145
    %v162 = vpack.c.bf16 %v146, %v146
    %v163 = vpack.c.bf16 %v147, %v147
    %v164 = vld [vmem:[#allocation4] sm:$0xff]
    %v165 = vld [vmem:[#allocation4 + $0x8] sm:$0xff]
    %v166 = vld [vmem:[#allocation4 + $0x10] sm:$0xff]
    %v167 = vld [vmem:[#allocation4 + $0x18] sm:$0xff]
    %v168 = vld [vmem:[#allocation4 + $0x20] sm:$0xff]
    %v169 = vld [vmem:[#allocation4 + $0x28] sm:$0xff]
    %v170 = vld [vmem:[#allocation4 + $0x30] sm:$0xff]
    %v171 = vld [vmem:[#allocation4 + $0x38] sm:$0xff]
    %v172 = vld [vmem:[#allocation4 + $0x40] sm:$0xff]
    %v173 = vld [vmem:[#allocation4 + $0x48] sm:$0xff]
    %v174 = vld [vmem:[#allocation4 + $0x50] sm:$0xff]
    %v175 = vld [vmem:[#allocation4 + $0x58] sm:$0xff]
    %v176 = vld [vmem:[#allocation4 + $0x60] sm:$0xff]
    %v177 = vld [vmem:[#allocation4 + $0x68] sm:$0xff]
    %v178 = vld [vmem:[#allocation4 + $0x70] sm:$0xff]
    %v179 = vld [vmem:[#allocation4 + $0x78] sm:$0xff]
    %v180 = vld [vmem:[#allocation4 + $0x80] sm:$0xff]
    %v181 = vld [vmem:[#allocation4 + $0x88] sm:$0xff]
    %v182 = vld [vmem:[#allocation4 + $0x90] sm:$0xff]
    %v183 = vld [vmem:[#allocation4 + $0x98] sm:$0xff]
    %v184 = vld [vmem:[#allocation4 + $0xa0] sm:$0xff]
    %v185 = vld [vmem:[#allocation4 + $0xa8] sm:$0xff]
    %v186 = vld [vmem:[#allocation4 + $0xb0] sm:$0xff]
    %v187 = vld [vmem:[#allocation4 + $0xb8] sm:$0xff]
    %v188 = vld [vmem:[#allocation4 + $0xc0] sm:$0xff]
    %v189 = vld [vmem:[#allocation4 + $0xc8] sm:$0xff]
    %v190 = vld [vmem:[#allocation4 + $0xd0] sm:$0xff]
    %v191 = vld [vmem:[#allocation4 + $0xd8] sm:$0xff]
    %v192 = vld [vmem:[#allocation4 + $0xe0] sm:$0xff]
    %v193 = vld [vmem:[#allocation4 + $0xe8] sm:$0xff]
    %v194 = vld [vmem:[#allocation4 + $0xf0] sm:$0xff]
    %v195 = vld [vmem:[#allocation4 + $0xf8] sm:$0xff]
    %v196 = vld [vmem:[#allocation4 + $0x100] sm:$0xff]
    %v197 = vld [vmem:[#allocation4 + $0x108] sm:$0xff]
    %v198 = vld [vmem:[#allocation4 + $0x110] sm:$0xff]
    %v199 = vld [vmem:[#allocation4 + $0x118] sm:$0xff]
    %v200 = vld [vmem:[#allocation4 + $0x120] sm:$0xff]
    %v201 = vld [vmem:[#allocation4 + $0x128] sm:$0xff]
    %v202 = vld [vmem:[#allocation4 + $0x130] sm:$0xff]
    %v203 = vld [vmem:[#allocation4 + $0x138] sm:$0xff]
    %v204 = vld [vmem:[#allocation4 + $0x140] sm:$0xff]
    %v205 = vld [vmem:[#allocation4 + $0x148] sm:$0xff]
    %v206 = vld [vmem:[#allocation4 + $0x150] sm:$0xff]
    %v207 = vld [vmem:[#allocation4 + $0x158] sm:$0xff]
    %v208 = vld [vmem:[#allocation4 + $0x160] sm:$0xff]
    %v209 = vld [vmem:[#allocation4 + $0x168] sm:$0xff]
    %v210 = vld [vmem:[#allocation4 + $0x170] sm:$0xff]
    %v211 = vld [vmem:[#allocation4 + $0x178] sm:$0xff]
    %v212 = vld [vmem:[#allocation4 + $0x180] sm:$0xff]
    %v213 = vld [vmem:[#allocation4 + $0x188] sm:$0xff]
    %v214 = vld [vmem:[#allocation4 + $0x190] sm:$0xff]
    %v215 = vld [vmem:[#allocation4 + $0x198] sm:$0xff]
    %v216 = vld [vmem:[#allocation4 + $0x1a0] sm:$0xff]
    %v217 = vld [vmem:[#allocation4 + $0x1a8] sm:$0xff]
    %v218 = vld [vmem:[#allocation4 + $0x1b0] sm:$0xff]
    %v219 = vld [vmem:[#allocation4 + $0x1b8] sm:$0xff]
    %v220 = vld [vmem:[#allocation4 + $0x1c0] sm:$0xff]
    %v221 = vld [vmem:[#allocation4 + $0x1c8] sm:$0xff]
    %v222 = vld [vmem:[#allocation4 + $0x1d0] sm:$0xff]
    %v223 = vld [vmem:[#allocation4 + $0x1d8] sm:$0xff]
    %v224 = vld [vmem:[#allocation4 + $0x1e0] sm:$0xff]
    %v225 = vld [vmem:[#allocation4 + $0x1e8] sm:$0xff]
    %v226 = vld [vmem:[#allocation4 + $0x1f0] sm:$0xff]
    %v227 = vld [vmem:[#allocation4 + $0x1f8] sm:$0xff]
    %v228 = vld [vmem:[#allocation4 + $0x200] sm:$0xff]
    %v229 = vld [vmem:[#allocation4 + $0x208] sm:$0xff]
    %v230 = vld [vmem:[#allocation4 + $0x210] sm:$0xff]
    %v231 = vld [vmem:[#allocation4 + $0x218] sm:$0xff]
    %v232 = vld [vmem:[#allocation4 + $0x220] sm:$0xff]
    %v233 = vld [vmem:[#allocation4 + $0x228] sm:$0xff]
    %v234 = vld [vmem:[#allocation4 + $0x230] sm:$0xff]
    %v235 = vld [vmem:[#allocation4 + $0x238] sm:$0xff]
    %v236 = vld [vmem:[#allocation4 + $0x240] sm:$0xff]
    %v237 = vld [vmem:[#allocation4 + $0x248] sm:$0xff]
    %v238 = vld [vmem:[#allocation4 + $0x250] sm:$0xff]
    %v239 = vld [vmem:[#allocation4 + $0x258] sm:$0xff]
    %v240 = vld [vmem:[#allocation4 + $0x260] sm:$0xff]
    %v241 = vld [vmem:[#allocation4 + $0x268] sm:$0xff]
    %v242 = vld [vmem:[#allocation4 + $0x270] sm:$0xff]
    %v243 = vld [vmem:[#allocation4 + $0x278] sm:$0xff]
    %v244 = vld [vmem:[#allocation4 + $0x280] sm:$0xff]
    %v245 = vld [vmem:[#allocation4 + $0x288] sm:$0xff]
    %v246 = vld [vmem:[#allocation4 + $0x290] sm:$0xff]
    %v247 = vld [vmem:[#allocation4 + $0x298] sm:$0xff]
    %v248 = vld [vmem:[#allocation4 + $0x2a0] sm:$0xff]
    %v249 = vld [vmem:[#allocation4 + $0x2a8] sm:$0xff]
    %v250 = vld [vmem:[#allocation4 + $0x2b0] sm:$0xff]
    %v251 = vld [vmem:[#allocation4 + $0x2b8] sm:$0xff]
    %v252 = vld [vmem:[#allocation4 + $0x2c0] sm:$0xff]
    %v253 = vld [vmem:[#allocation4 + $0x2c8] sm:$0xff]
    %v254 = vld [vmem:[#allocation4 + $0x2d0] sm:$0xff]
    %v255 = vld [vmem:[#allocation4 + $0x2d8] sm:$0xff]
    %v256 = vld [vmem:[#allocation4 + $0x2e0] sm:$0xff]
    %v257 = vld [vmem:[#allocation4 + $0x2e8] sm:$0xff]
    %v258 = vld [vmem:[#allocation4 + $0x2f0] sm:$0xff]
    %v259 = vld [vmem:[#allocation4 + $0x2f8] sm:$0xff]
    %v260 = vld [vmem:[#allocation4 + $0x300] sm:$0xff]
    %v261 = vld [vmem:[#allocation4 + $0x308] sm:$0xff]
    %v262 = vld [vmem:[#allocation4 + $0x310] sm:$0xff]
    %v263 = vld [vmem:[#allocation4 + $0x318] sm:$0xff]
    %v264 = vld [vmem:[#allocation4 + $0x320] sm:$0xff]
    %v265 = vld [vmem:[#allocation4 + $0x328] sm:$0xff]
    %v266 = vld [vmem:[#allocation4 + $0x330] sm:$0xff]
    %v267 = vld [vmem:[#allocation4 + $0x338] sm:$0xff]
    %v268 = vld [vmem:[#allocation4 + $0x340] sm:$0xff]
    %v269 = vld [vmem:[#allocation4 + $0x348] sm:$0xff]
    %v270 = vld [vmem:[#allocation4 + $0x350] sm:$0xff]
    %v271 = vld [vmem:[#allocation4 + $0x358] sm:$0xff]
    %v272 = vld [vmem:[#allocation4 + $0x360] sm:$0xff]
    %v273 = vld [vmem:[#allocation4 + $0x368] sm:$0xff]
    %v274 = vld [vmem:[#allocation4 + $0x370] sm:$0xff]
    %v275 = vld [vmem:[#allocation4 + $0x378] sm:$0xff]
    %v276 = vld [vmem:[#allocation4 + $0x380] sm:$0xff]
    %v277 = vld [vmem:[#allocation4 + $0x388] sm:$0xff]
    %v278 = vld [vmem:[#allocation4 + $0x390] sm:$0xff]
    %v279 = vld [vmem:[#allocation4 + $0x398] sm:$0xff]
    %v280 = vld [vmem:[#allocation4 + $0x3a0] sm:$0xff]
    %v281 = vld [vmem:[#allocation4 + $0x3a8] sm:$0xff]
    %v282 = vld [vmem:[#allocation4 + $0x3b0] sm:$0xff]
    %v283 = vld [vmem:[#allocation4 + $0x3b8] sm:$0xff]
    %v284 = vld [vmem:[#allocation4 + $0x3c0] sm:$0xff]
    %v285 = vld [vmem:[#allocation4 + $0x3c8] sm:$0xff]
    %v286 = vld [vmem:[#allocation4 + $0x3d0] sm:$0xff]
    %v287 = vld [vmem:[#allocation4 + $0x3d8] sm:$0xff]
    %v288 = vld [vmem:[#allocation4 + $0x3e0] sm:$0xff]
    %v289 = vld [vmem:[#allocation4 + $0x3e8] sm:$0xff]
    %v290 = vld [vmem:[#allocation4 + $0x3f0] sm:$0xff]
    %v291 = vld [vmem:[#allocation4 + $0x3f8] sm:$0xff]
    %v292 = vld [vmem:[#allocation4 + $0x400] sm:$0xff]
    %v293 = vld [vmem:[#allocation4 + $0x408] sm:$0xff]
    %v294 = vld [vmem:[#allocation4 + $0x410] sm:$0xff]
    %v295 = vld [vmem:[#allocation4 + $0x418] sm:$0xff]
    %v296 = vld [vmem:[#allocation4 + $0x420] sm:$0xff]
    %v297 = vld [vmem:[#allocation4 + $0x428] sm:$0xff]
    %v298 = vld [vmem:[#allocation4 + $0x430] sm:$0xff]
    %v299 = vld [vmem:[#allocation4 + $0x438] sm:$0xff]
    %v300 = vld [vmem:[#allocation4 + $0x440] sm:$0xff]
    %v301 = vld [vmem:[#allocation4 + $0x448] sm:$0xff]
    %v302 = vld [vmem:[#allocation4 + $0x450] sm:$0xff]
    %v303 = vld [vmem:[#allocation4 + $0x458] sm:$0xff]
    %v304 = vld [vmem:[#allocation4 + $0x460] sm:$0xff]
    %v305 = vld [vmem:[#allocation4 + $0x468] sm:$0xff]
    %v306 = vld [vmem:[#allocation4 + $0x470] sm:$0xff]
    %v307 = vld [vmem:[#allocation4 + $0x478] sm:$0xff]
    %v308 = vld [vmem:[#allocation4 + $0x480] sm:$0xff]
    %v309 = vld [vmem:[#allocation4 + $0x488] sm:$0xff]
    %v310 = vld [vmem:[#allocation4 + $0x490] sm:$0xff]
    %v311 = vld [vmem:[#allocation4 + $0x498] sm:$0xff]
    %v312 = vld [vmem:[#allocation4 + $0x4a0] sm:$0xff]
    %v313 = vld [vmem:[#allocation4 + $0x4a8] sm:$0xff]
    %v314 = vld [vmem:[#allocation4 + $0x4b0] sm:$0xff]
    %v315 = vld [vmem:[#allocation4 + $0x4b8] sm:$0xff]
    %v316 = vld [vmem:[#allocation4 + $0x4c0] sm:$0xff]
    %v317 = vld [vmem:[#allocation4 + $0x4c8] sm:$0xff]
    %v318 = vld [vmem:[#allocation4 + $0x4d0] sm:$0xff]
    %v319 = vld [vmem:[#allocation4 + $0x4d8] sm:$0xff]
    %v320 = vld [vmem:[#allocation4 + $0x4e0] sm:$0xff]
    %v321 = vld [vmem:[#allocation4 + $0x4e8] sm:$0xff]
    %v322 = vld [vmem:[#allocation4 + $0x4f0] sm:$0xff]
    %v323 = vld [vmem:[#allocation4 + $0x4f8] sm:$0xff]
    %v324 = vld [vmem:[#allocation4 + $0x500] sm:$0xff]
    %v325 = vld [vmem:[#allocation4 + $0x508] sm:$0xff]
    %v326 = vld [vmem:[#allocation4 + $0x510] sm:$0xff]
    %v327 = vld [vmem:[#allocation4 + $0x518] sm:$0xff]
    %v328 = vld [vmem:[#allocation4 + $0x520] sm:$0xff]
    %v329 = vld [vmem:[#allocation4 + $0x528] sm:$0xff]
    %v330 = vld [vmem:[#allocation4 + $0x530] sm:$0xff]
    %v331 = vld [vmem:[#allocation4 + $0x538] sm:$0xff]
    %v332 = vld [vmem:[#allocation4 + $0x540] sm:$0xff]
    %v333 = vld [vmem:[#allocation4 + $0x548] sm:$0xff]
    %v334 = vld [vmem:[#allocation4 + $0x550] sm:$0xff]
    %v335 = vld [vmem:[#allocation4 + $0x558] sm:$0xff]
    %v336 = vld [vmem:[#allocation4 + $0x560] sm:$0xff]
    %v337 = vld [vmem:[#allocation4 + $0x568] sm:$0xff]
    %v338 = vld [vmem:[#allocation4 + $0x570] sm:$0xff]
    %v339 = vld [vmem:[#allocation4 + $0x578] sm:$0xff]
    %v340 = vld [vmem:[#allocation4 + $0x580] sm:$0xff]
    %v341 = vld [vmem:[#allocation4 + $0x588] sm:$0xff]
    %v342 = vld [vmem:[#allocation4 + $0x590] sm:$0xff]
    %v343 = vld [vmem:[#allocation4 + $0x598] sm:$0xff]
    %v344 = vld [vmem:[#allocation4 + $0x5a0] sm:$0xff]
    %v345 = vld [vmem:[#allocation4 + $0x5a8] sm:$0xff]
    %v346 = vld [vmem:[#allocation4 + $0x5b0] sm:$0xff]
    %v347 = vld [vmem:[#allocation4 + $0x5b8] sm:$0xff]
    %v348 = vld [vmem:[#allocation4 + $0x5c0] sm:$0xff]
    %v349 = vld [vmem:[#allocation4 + $0x5c8] sm:$0xff]
    %v350 = vld [vmem:[#allocation4 + $0x5d0] sm:$0xff]
    %v351 = vld [vmem:[#allocation4 + $0x5d8] sm:$0xff]
    %v352 = vld [vmem:[#allocation4 + $0x5e0] sm:$0xff]
    %v353 = vld [vmem:[#allocation4 + $0x5e8] sm:$0xff]
    %v354 = vld [vmem:[#allocation4 + $0x5f0] sm:$0xff]
    %v355 = vld [vmem:[#allocation4 + $0x5f8] sm:$0xff]
    %v356 = vld [vmem:[#allocation4 + $0x600] sm:$0xff]
    %v357 = vld [vmem:[#allocation4 + $0x608] sm:$0xff]
    %v358 = vld [vmem:[#allocation4 + $0x610] sm:$0xff]
    %v359 = vld [vmem:[#allocation4 + $0x618] sm:$0xff]
    %v360 = vld [vmem:[#allocation4 + $0x620] sm:$0xff]
    %v361 = vld [vmem:[#allocation4 + $0x628] sm:$0xff]
    %v362 = vld [vmem:[#allocation4 + $0x630] sm:$0xff]
    %v363 = vld [vmem:[#allocation4 + $0x638] sm:$0xff]
    %v364 = vld [vmem:[#allocation4 + $0x640] sm:$0xff]
    %v365 = vld [vmem:[#allocation4 + $0x648] sm:$0xff]
    %v366 = vld [vmem:[#allocation4 + $0x650] sm:$0xff]
    %v367 = vld [vmem:[#allocation4 + $0x658] sm:$0xff]
    %v368 = vld [vmem:[#allocation4 + $0x660] sm:$0xff]
    %v369 = vld [vmem:[#allocation4 + $0x668] sm:$0xff]
    %v370 = vld [vmem:[#allocation4 + $0x670] sm:$0xff]
    %v371 = vld [vmem:[#allocation4 + $0x678] sm:$0xff]
    %v372 = vld [vmem:[#allocation4 + $0x680] sm:$0xff]
    %v373 = vld [vmem:[#allocation4 + $0x688] sm:$0xff]
    %v374 = vld [vmem:[#allocation4 + $0x690] sm:$0xff]
    %v375 = vld [vmem:[#allocation4 + $0x698] sm:$0xff]
    %v376 = vld [vmem:[#allocation4 + $0x6a0] sm:$0xff]
    %v377 = vld [vmem:[#allocation4 + $0x6a8] sm:$0xff]
    %v378 = vld [vmem:[#allocation4 + $0x6b0] sm:$0xff]
    %v379 = vld [vmem:[#allocation4 + $0x6b8] sm:$0xff]
    %v380 = vld [vmem:[#allocation4 + $0x6c0] sm:$0xff]
    %v381 = vld [vmem:[#allocation4 + $0x6c8] sm:$0xff]
    %v382 = vld [vmem:[#allocation4 + $0x6d0] sm:$0xff]
    %v383 = vld [vmem:[#allocation4 + $0x6d8] sm:$0xff]
    %v384 = vld [vmem:[#allocation4 + $0x6e0] sm:$0xff]
    %v385 = vld [vmem:[#allocation4 + $0x6e8] sm:$0xff]
    %v386 = vld [vmem:[#allocation4 + $0x6f0] sm:$0xff]
    %v387 = vld [vmem:[#allocation4 + $0x6f8] sm:$0xff]
    %v388 = vld [vmem:[#allocation4 + $0x700] sm:$0xff]
    %v389 = vld [vmem:[#allocation4 + $0x708] sm:$0xff]
    %v390 = vld [vmem:[#allocation4 + $0x710] sm:$0xff]
    %v391 = vld [vmem:[#allocation4 + $0x718] sm:$0xff]
    %v392 = vld [vmem:[#allocation4 + $0x720] sm:$0xff]
    %v393 = vld [vmem:[#allocation4 + $0x728] sm:$0xff]
    %v394 = vld [vmem:[#allocation4 + $0x730] sm:$0xff]
    %v395 = vld [vmem:[#allocation4 + $0x738] sm:$0xff]
    %v396 = vld [vmem:[#allocation4 + $0x740] sm:$0xff]
    %v397 = vld [vmem:[#allocation4 + $0x748] sm:$0xff]
    %v398 = vld [vmem:[#allocation4 + $0x750] sm:$0xff]
    %v399 = vld [vmem:[#allocation4 + $0x758] sm:$0xff]
    %v400 = vld [vmem:[#allocation4 + $0x760] sm:$0xff]
    %v401 = vld [vmem:[#allocation4 + $0x768] sm:$0xff]
    %v402 = vld [vmem:[#allocation4 + $0x770] sm:$0xff]
    %v403 = vld [vmem:[#allocation4 + $0x778] sm:$0xff]
    %v404 = vld [vmem:[#allocation4 + $0x780] sm:$0xff]
    %v405 = vld [vmem:[#allocation4 + $0x788] sm:$0xff]
    %v406 = vld [vmem:[#allocation4 + $0x790] sm:$0xff]
    %v407 = vld [vmem:[#allocation4 + $0x798] sm:$0xff]
    %v408 = vld [vmem:[#allocation4 + $0x7a0] sm:$0xff]
    %v409 = vld [vmem:[#allocation4 + $0x7a8] sm:$0xff]
    %v410 = vld [vmem:[#allocation4 + $0x7b0] sm:$0xff]
    %v411 = vld [vmem:[#allocation4 + $0x7b8] sm:$0xff]
    %v412 = vld [vmem:[#allocation4 + $0x7c0] sm:$0xff]
    %v413 = vld [vmem:[#allocation4 + $0x7c8] sm:$0xff]
    %v414 = vld [vmem:[#allocation4 + $0x7d0] sm:$0xff]
    %v415 = vld [vmem:[#allocation4 + $0x7d8] sm:$0xff]
    %v416 = vld [vmem:[#allocation4 + $0x7e0] sm:$0xff]
    %v417 = vld [vmem:[#allocation4 + $0x7e8] sm:$0xff]
    %v418 = vld [vmem:[#allocation4 + $0x7f0] sm:$0xff]
    %v419 = vld [vmem:[#allocation4 + $0x7f8] sm:$0xff]
    %v420 = vld [vmem:[#allocation4 + $0x800] sm:$0xff]
    %v421 = vld [vmem:[#allocation4 + $0x808] sm:$0xff]
    %v422 = vld [vmem:[#allocation4 + $0x810] sm:$0xff]
    %v423 = vld [vmem:[#allocation4 + $0x818] sm:$0xff]
    %v424 = vld [vmem:[#allocation4 + $0x820] sm:$0xff]
    %v425 = vld [vmem:[#allocation4 + $0x828] sm:$0xff]
    %v426 = vld [vmem:[#allocation4 + $0x830] sm:$0xff]
    %v427 = vld [vmem:[#allocation4 + $0x838] sm:$0xff]
    %v428 = vld [vmem:[#allocation4 + $0x840] sm:$0xff]
    %v429 = vld [vmem:[#allocation4 + $0x848] sm:$0xff]
    %v430 = vld [vmem:[#allocation4 + $0x850] sm:$0xff]
    %v431 = vld [vmem:[#allocation4 + $0x858] sm:$0xff]
    %v432 = vld [vmem:[#allocation4 + $0x860] sm:$0xff]
    %v433 = vld [vmem:[#allocation4 + $0x868] sm:$0xff]
    %v434 = vld [vmem:[#allocation4 + $0x870] sm:$0xff]
    %v435 = vld [vmem:[#allocation4 + $0x878] sm:$0xff]
    %v436 = vld [vmem:[#allocation4 + $0x880] sm:$0xff]
    %v437 = vld [vmem:[#allocation4 + $0x888] sm:$0xff]
    %v438 = vld [vmem:[#allocation4 + $0x890] sm:$0xff]
    %v439 = vld [vmem:[#allocation4 + $0x898] sm:$0xff]
    %v440 = vld [vmem:[#allocation4 + $0x8a0] sm:$0xff]
    %v441 = vld [vmem:[#allocation4 + $0x8a8] sm:$0xff]
    %v442 = vld [vmem:[#allocation4 + $0x8b0] sm:$0xff]
    %v443 = vld [vmem:[#allocation4 + $0x8b8] sm:$0xff]
    %v444 = vld [vmem:[#allocation4 + $0x8c0] sm:$0xff]
    %v445 = vld [vmem:[#allocation4 + $0x8c8] sm:$0xff]
    %v446 = vld [vmem:[#allocation4 + $0x8d0] sm:$0xff]
    %v447 = vld [vmem:[#allocation4 + $0x8d8] sm:$0xff]
    %v448 = vld [vmem:[#allocation4 + $0x8e0] sm:$0xff]
    %v449 = vld [vmem:[#allocation4 + $0x8e8] sm:$0xff]
    %v450 = vld [vmem:[#allocation4 + $0x8f0] sm:$0xff]
    %v451 = vld [vmem:[#allocation4 + $0x8f8] sm:$0xff]
    %v452 = vld [vmem:[#allocation4 + $0x900] sm:$0xff]
    %v453 = vld [vmem:[#allocation4 + $0x908] sm:$0xff]
    %v454 = vld [vmem:[#allocation4 + $0x910] sm:$0xff]
    %v455 = vld [vmem:[#allocation4 + $0x918] sm:$0xff]
    %v456 = vld [vmem:[#allocation4 + $0x920] sm:$0xff]
    %v457 = vld [vmem:[#allocation4 + $0x928] sm:$0xff]
    %v458 = vld [vmem:[#allocation4 + $0x930] sm:$0xff]
    %v459 = vld [vmem:[#allocation4 + $0x938] sm:$0xff]
    %v460 = vld [vmem:[#allocation4 + $0x940] sm:$0xff]
    %v461 = vld [vmem:[#allocation4 + $0x948] sm:$0xff]
    %v462 = vld [vmem:[#allocation4 + $0x950] sm:$0xff]
    %v463 = vld [vmem:[#allocation4 + $0x958] sm:$0xff]
    %v464 = vld [vmem:[#allocation4 + $0x960] sm:$0xff]
    %v465 = vld [vmem:[#allocation4 + $0x968] sm:$0xff]
    %v466 = vld [vmem:[#allocation4 + $0x970] sm:$0xff]
    %v467 = vld [vmem:[#allocation4 + $0x978] sm:$0xff]
    %v468 = vld [vmem:[#allocation4 + $0x980] sm:$0xff]
    %v469 = vld [vmem:[#allocation4 + $0x988] sm:$0xff]
    %v470 = vld [vmem:[#allocation4 + $0x990] sm:$0xff]
    %v471 = vld [vmem:[#allocation4 + $0x998] sm:$0xff]
    %v472 = vld [vmem:[#allocation4 + $0x9a0] sm:$0xff]
    %v473 = vld [vmem:[#allocation4 + $0x9a8] sm:$0xff]
    %v474 = vld [vmem:[#allocation4 + $0x9b0] sm:$0xff]
    %v475 = vld [vmem:[#allocation4 + $0x9b8] sm:$0xff]
    %v476 = vld [vmem:[#allocation4 + $0x9c0] sm:$0xff]
    %v477 = vld [vmem:[#allocation4 + $0x9c8] sm:$0xff]
    %v478 = vld [vmem:[#allocation4 + $0x9d0] sm:$0xff]
    %v479 = vld [vmem:[#allocation4 + $0x9d8] sm:$0xff]
    %v480 = vld [vmem:[#allocation4 + $0x9e0] sm:$0xff]
    %v481 = vld [vmem:[#allocation4 + $0x9e8] sm:$0xff]
    %v482 = vld [vmem:[#allocation4 + $0x9f0] sm:$0xff]
    %v483 = vld [vmem:[#allocation4 + $0x9f8] sm:$0xff]
    %v484 = vld [vmem:[#allocation4 + $0xa00] sm:$0xff]
    %v485 = vld [vmem:[#allocation4 + $0xa08] sm:$0xff]
    %v486 = vld [vmem:[#allocation4 + $0xa10] sm:$0xff]
    %v487 = vld [vmem:[#allocation4 + $0xa18] sm:$0xff]
    %v488 = vld [vmem:[#allocation4 + $0xa20] sm:$0xff]
    %v489 = vld [vmem:[#allocation4 + $0xa28] sm:$0xff]
    %v490 = vld [vmem:[#allocation4 + $0xa30] sm:$0xff]
    %v491 = vld [vmem:[#allocation4 + $0xa38] sm:$0xff]
    %v492 = vld [vmem:[#allocation4 + $0xa40] sm:$0xff]
    %v493 = vld [vmem:[#allocation4 + $0xa48] sm:$0xff]
    %v494 = vld [vmem:[#allocation4 + $0xa50] sm:$0xff]
    %v495 = vld [vmem:[#allocation4 + $0xa58] sm:$0xff]
    %v496 = vld [vmem:[#allocation4 + $0xa60] sm:$0xff]
    %v497 = vld [vmem:[#allocation4 + $0xa68] sm:$0xff]
    %v498 = vld [vmem:[#allocation4 + $0xa70] sm:$0xff]
    %v499 = vld [vmem:[#allocation4 + $0xa78] sm:$0xff]
    %v500 = vld [vmem:[#allocation4 + $0xa80] sm:$0xff]
    %v501 = vld [vmem:[#allocation4 + $0xa88] sm:$0xff]
    %v502 = vld [vmem:[#allocation4 + $0xa90] sm:$0xff]
    %v503 = vld [vmem:[#allocation4 + $0xa98] sm:$0xff]
    %v504 = vld [vmem:[#allocation4 + $0xaa0] sm:$0xff]
    %v505 = vld [vmem:[#allocation4 + $0xaa8] sm:$0xff]
    %v506 = vld [vmem:[#allocation4 + $0xab0] sm:$0xff]
    %v507 = vld [vmem:[#allocation4 + $0xab8] sm:$0xff]
    %v508 = vld [vmem:[#allocation4 + $0xac0] sm:$0xff]
    %v509 = vld [vmem:[#allocation4 + $0xac8] sm:$0xff]
    %v510 = vld [vmem:[#allocation4 + $0xad0] sm:$0xff]
    %v511 = vld [vmem:[#allocation4 + $0xad8] sm:$0xff]
    %v512 = vld [vmem:[#allocation4 + $0xae0] sm:$0xff]
    %v513 = vld [vmem:[#allocation4 + $0xae8] sm:$0xff]
    %v514 = vld [vmem:[#allocation4 + $0xaf0] sm:$0xff]
    %v515 = vld [vmem:[#allocation4 + $0xaf8] sm:$0xff]
    %v516 = vld [vmem:[#allocation4 + $0xb00] sm:$0xff]
    %v517 = vld [vmem:[#allocation4 + $0xb08] sm:$0xff]
    %v518 = vld [vmem:[#allocation4 + $0xb10] sm:$0xff]
    %v519 = vld [vmem:[#allocation4 + $0xb18] sm:$0xff]
    %v520 = vld [vmem:[#allocation4 + $0xb20] sm:$0xff]
    %v521 = vld [vmem:[#allocation4 + $0xb28] sm:$0xff]
    %v522 = vld [vmem:[#allocation4 + $0xb30] sm:$0xff]
    %v523 = vld [vmem:[#allocation4 + $0xb38] sm:$0xff]
    %v524 = vld [vmem:[#allocation4 + $0xb40] sm:$0xff]
    %v525 = vld [vmem:[#allocation4 + $0xb48] sm:$0xff]
    %v526 = vld [vmem:[#allocation4 + $0xb50] sm:$0xff]
    %v527 = vld [vmem:[#allocation4 + $0xb58] sm:$0xff]
    %v528 = vld [vmem:[#allocation4 + $0xb60] sm:$0xff]
    %v529 = vld [vmem:[#allocation4 + $0xb68] sm:$0xff]
    %v530 = vld [vmem:[#allocation4 + $0xb70] sm:$0xff]
    %v531 = vld [vmem:[#allocation4 + $0xb78] sm:$0xff]
    %v532 = vld [vmem:[#allocation4 + $0xb80] sm:$0xff]
    %v533 = vld [vmem:[#allocation4 + $0xb88] sm:$0xff]
    %v534 = vld [vmem:[#allocation4 + $0xb90] sm:$0xff]
    %v535 = vld [vmem:[#allocation4 + $0xb98] sm:$0xff]
    %v536 = vld [vmem:[#allocation4 + $0xba0] sm:$0xff]
    %v537 = vld [vmem:[#allocation4 + $0xba8] sm:$0xff]
    %v538 = vld [vmem:[#allocation4 + $0xbb0] sm:$0xff]
    %v539 = vld [vmem:[#allocation4 + $0xbb8] sm:$0xff]
    %v540 = vld [vmem:[#allocation4 + $0xbc0] sm:$0xff]
    %v541 = vld [vmem:[#allocation4 + $0xbc8] sm:$0xff]
    %v542 = vld [vmem:[#allocation4 + $0xbd0] sm:$0xff]
    %v543 = vld [vmem:[#allocation4 + $0xbd8] sm:$0xff]
    %v544 = vld [vmem:[#allocation4 + $0xbe0] sm:$0xff]
    %v545 = vld [vmem:[#allocation4 + $0xbe8] sm:$0xff]
    %v546 = vld [vmem:[#allocation4 + $0xbf0] sm:$0xff]
    %v547 = vld [vmem:[#allocation4 + $0xbf8] sm:$0xff]
    %v548 = vld [vmem:[#allocation4 + $0xc00] sm:$0xff]
    %v549 = vld [vmem:[#allocation4 + $0xc08] sm:$0xff]
    %v550 = vld [vmem:[#allocation4 + $0xc10] sm:$0xff]
    %v551 = vld [vmem:[#allocation4 + $0xc18] sm:$0xff]
    %v552 = vld [vmem:[#allocation4 + $0xc20] sm:$0xff]
    %v553 = vld [vmem:[#allocation4 + $0xc28] sm:$0xff]
    %v554 = vld [vmem:[#allocation4 + $0xc30] sm:$0xff]
    %v555 = vld [vmem:[#allocation4 + $0xc38] sm:$0xff]
    %v556 = vld [vmem:[#allocation4 + $0xc40] sm:$0xff]
    %v557 = vld [vmem:[#allocation4 + $0xc48] sm:$0xff]
    %v558 = vld [vmem:[#allocation4 + $0xc50] sm:$0xff]
    %v559 = vld [vmem:[#allocation4 + $0xc58] sm:$0xff]
    %v560 = vld [vmem:[#allocation4 + $0xc60] sm:$0xff]
    %v561 = vld [vmem:[#allocation4 + $0xc68] sm:$0xff]
    %v562 = vld [vmem:[#allocation4 + $0xc70] sm:$0xff]
    %v563 = vld [vmem:[#allocation4 + $0xc78] sm:$0xff]
    %v564 = vld [vmem:[#allocation4 + $0xc80] sm:$0xff]
    %v565 = vld [vmem:[#allocation4 + $0xc88] sm:$0xff]
    %v566 = vld [vmem:[#allocation4 + $0xc90] sm:$0xff]
    %v567 = vld [vmem:[#allocation4 + $0xc98] sm:$0xff]
    %v568 = vld [vmem:[#allocation4 + $0xca0] sm:$0xff]
    %v569 = vld [vmem:[#allocation4 + $0xca8] sm:$0xff]
    %v570 = vld [vmem:[#allocation4 + $0xcb0] sm:$0xff]
    %v571 = vld [vmem:[#allocation4 + $0xcb8] sm:$0xff]
    %v572 = vld [vmem:[#allocation4 + $0xcc0] sm:$0xff]
    %v573 = vld [vmem:[#allocation4 + $0xcc8] sm:$0xff]
    %v574 = vld [vmem:[#allocation4 + $0xcd0] sm:$0xff]
    %v575 = vld [vmem:[#allocation4 + $0xcd8] sm:$0xff]
    %v576 = vld [vmem:[#allocation4 + $0xce0] sm:$0xff]
    %v577 = vld [vmem:[#allocation4 + $0xce8] sm:$0xff]
    %v578 = vld [vmem:[#allocation4 + $0xcf0] sm:$0xff]
    %v579 = vld [vmem:[#allocation4 + $0xcf8] sm:$0xff]
    %v580 = vld [vmem:[#allocation4 + $0xd00] sm:$0xff]
    %v581 = vld [vmem:[#allocation4 + $0xd08] sm:$0xff]
    %v582 = vld [vmem:[#allocation4 + $0xd10] sm:$0xff]
    %v583 = vld [vmem:[#allocation4 + $0xd18] sm:$0xff]
    %v584 = vld [vmem:[#allocation4 + $0xd20] sm:$0xff]
    %v585 = vld [vmem:[#allocation4 + $0xd28] sm:$0xff]
    %v586 = vld [vmem:[#allocation4 + $0xd30] sm:$0xff]
    %v587 = vld [vmem:[#allocation4 + $0xd38] sm:$0xff]
    %v588 = vld [vmem:[#allocation4 + $0xd40] sm:$0xff]
    %v589 = vld [vmem:[#allocation4 + $0xd48] sm:$0xff]
    %v590 = vld [vmem:[#allocation4 + $0xd50] sm:$0xff]
    %v591 = vld [vmem:[#allocation4 + $0xd58] sm:$0xff]
    %v592 = vld [vmem:[#allocation4 + $0xd60] sm:$0xff]
    %v593 = vld [vmem:[#allocation4 + $0xd68] sm:$0xff]
    %v594 = vld [vmem:[#allocation4 + $0xd70] sm:$0xff]
    %v595 = vld [vmem:[#allocation4 + $0xd78] sm:$0xff]
    %v596 = vld [vmem:[#allocation4 + $0xd80] sm:$0xff]
    %v597 = vld [vmem:[#allocation4 + $0xd88] sm:$0xff]
    %v598 = vld [vmem:[#allocation4 + $0xd90] sm:$0xff]
    %v599 = vld [vmem:[#allocation4 + $0xd98] sm:$0xff]
    %v600 = vld [vmem:[#allocation4 + $0xda0] sm:$0xff]
    %v601 = vld [vmem:[#allocation4 + $0xda8] sm:$0xff]
    %v602 = vld [vmem:[#allocation4 + $0xdb0] sm:$0xff]
    %v603 = vld [vmem:[#allocation4 + $0xdb8] sm:$0xff]
    %v604 = vld [vmem:[#allocation4 + $0xdc0] sm:$0xff]
    %v605 = vld [vmem:[#allocation4 + $0xdc8] sm:$0xff]
    %v606 = vld [vmem:[#allocation4 + $0xdd0] sm:$0xff]
    %v607 = vld [vmem:[#allocation4 + $0xdd8] sm:$0xff]
    %v608 = vld [vmem:[#allocation4 + $0xde0] sm:$0xff]
    %v609 = vld [vmem:[#allocation4 + $0xde8] sm:$0xff]
    %v610 = vld [vmem:[#allocation4 + $0xdf0] sm:$0xff]
    %v611 = vld [vmem:[#allocation4 + $0xdf8] sm:$0xff]
    %v612 = vld [vmem:[#allocation4 + $0xe00] sm:$0xff]
    %v613 = vld [vmem:[#allocation4 + $0xe08] sm:$0xff]
    %v614 = vld [vmem:[#allocation4 + $0xe10] sm:$0xff]
    %v615 = vld [vmem:[#allocation4 + $0xe18] sm:$0xff]
    %v616 = vld [vmem:[#allocation4 + $0xe20] sm:$0xff]
    %v617 = vld [vmem:[#allocation4 + $0xe28] sm:$0xff]
    %v618 = vld [vmem:[#allocation4 + $0xe30] sm:$0xff]
    %v619 = vld [vmem:[#allocation4 + $0xe38] sm:$0xff]
    %v620 = vld [vmem:[#allocation4 + $0xe40] sm:$0xff]
    %v621 = vld [vmem:[#allocation4 + $0xe48] sm:$0xff]
    %v622 = vld [vmem:[#allocation4 + $0xe50] sm:$0xff]
    %v623 = vld [vmem:[#allocation4 + $0xe58] sm:$0xff]
    %v624 = vld [vmem:[#allocation4 + $0xe60] sm:$0xff]
    %v625 = vld [vmem:[#allocation4 + $0xe68] sm:$0xff]
    %v626 = vld [vmem:[#allocation4 + $0xe70] sm:$0xff]
    %v627 = vld [vmem:[#allocation4 + $0xe78] sm:$0xff]
    %v628 = vld [vmem:[#allocation4 + $0xe80] sm:$0xff]
    %v629 = vld [vmem:[#allocation4 + $0xe88] sm:$0xff]
    %v630 = vld [vmem:[#allocation4 + $0xe90] sm:$0xff]
    %v631 = vld [vmem:[#allocation4 + $0xe98] sm:$0xff]
    %v632 = vld [vmem:[#allocation4 + $0xea0] sm:$0xff]
    %v633 = vld [vmem:[#allocation4 + $0xea8] sm:$0xff]
    %v634 = vld [vmem:[#allocation4 + $0xeb0] sm:$0xff]
    %v635 = vld [vmem:[#allocation4 + $0xeb8] sm:$0xff]
    %v636 = vld [vmem:[#allocation4 + $0xec0] sm:$0xff]
    %v637 = vld [vmem:[#allocation4 + $0xec8] sm:$0xff]
    %v638 = vld [vmem:[#allocation4 + $0xed0] sm:$0xff]
    %v639 = vld [vmem:[#allocation4 + $0xed8] sm:$0xff]
    %v640 = vld [vmem:[#allocation4 + $0xee0] sm:$0xff]
    %v641 = vld [vmem:[#allocation4 + $0xee8] sm:$0xff]
    %v642 = vld [vmem:[#allocation4 + $0xef0] sm:$0xff]
    %v643 = vld [vmem:[#allocation4 + $0xef8] sm:$0xff]
    %v644 = vld [vmem:[#allocation4 + $0xf00] sm:$0xff]
    %v645 = vld [vmem:[#allocation4 + $0xf08] sm:$0xff]
    %v646 = vld [vmem:[#allocation4 + $0xf10] sm:$0xff]
    %v647 = vld [vmem:[#allocation4 + $0xf18] sm:$0xff]
    %v648 = vld [vmem:[#allocation4 + $0xf20] sm:$0xff]
    %v649 = vld [vmem:[#allocation4 + $0xf28] sm:$0xff]
    %v650 = vld [vmem:[#allocation4 + $0xf30] sm:$0xff]
    %v651 = vld [vmem:[#allocation4 + $0xf38] sm:$0xff]
    %v652 = vld [vmem:[#allocation4 + $0xf40] sm:$0xff]
    %v653 = vld [vmem:[#allocation4 + $0xf48] sm:$0xff]
    %v654 = vld [vmem:[#allocation4 + $0xf50] sm:$0xff]
    %v655 = vld [vmem:[#allocation4 + $0xf58] sm:$0xff]
    %v656 = vld [vmem:[#allocation4 + $0xf60] sm:$0xff]
    %v657 = vld [vmem:[#allocation4 + $0xf68] sm:$0xff]
    %v658 = vld [vmem:[#allocation4 + $0xf70] sm:$0xff]
    %v659 = vld [vmem:[#allocation4 + $0xf78] sm:$0xff]
    %v660 = vld [vmem:[#allocation4 + $0xf80] sm:$0xff]
    %v661 = vld [vmem:[#allocation4 + $0xf88] sm:$0xff]
    %v662 = vld [vmem:[#allocation4 + $0xf90] sm:$0xff]
    %v663 = vld [vmem:[#allocation4 + $0xf98] sm:$0xff]
    %v664 = vld [vmem:[#allocation4 + $0xfa0] sm:$0xff]
    %v665 = vld [vmem:[#allocation4 + $0xfa8] sm:$0xff]
    %v666 = vld [vmem:[#allocation4 + $0xfb0] sm:$0xff]
    %v667 = vld [vmem:[#allocation4 + $0xfb8] sm:$0xff]
    %v668 = vld [vmem:[#allocation4 + $0xfc0] sm:$0xff]
    %v669 = vld [vmem:[#allocation4 + $0xfc8] sm:$0xff]
    %v670 = vld [vmem:[#allocation4 + $0xfd0] sm:$0xff]
    %v671 = vld [vmem:[#allocation4 + $0xfd8] sm:$0xff]
    %v672 = vld [vmem:[#allocation4 + $0xfe0] sm:$0xff]
    %v673 = vld [vmem:[#allocation4 + $0xfe8] sm:$0xff]
    %v674 = vld [vmem:[#allocation4 + $0xff0] sm:$0xff]
    %v675 = vld [vmem:[#allocation4 + $0xff8] sm:$0xff]
    %v676 = vld [vmem:[#allocation6] sm:$0xf]
    %v678 = vperm.slane %v676, 0
    %v679 = vperm.slane %v676, 1
    %v680 = vperm.slane %v676, 2
    %v681 = vperm.slane %v676, 3
    %v1198 = vunpack.c.l.b16 %v164
    %v1199 = vunpack.c.h.b16 %v164
    %v1200 = vunpack.c.l.b16 %v165
    %v1201 = vunpack.c.h.b16 %v165
    %v1202 = vunpack.c.l.b16 %v166
    %v1203 = vunpack.c.h.b16 %v166
    %v1204 = vunpack.c.l.b16 %v167
    %v1205 = vunpack.c.h.b16 %v167
    %v1206 = vunpack.c.l.b16 %v168
    %v1207 = vunpack.c.h.b16 %v168
    %v1208 = vunpack.c.l.b16 %v169
    %v1209 = vunpack.c.h.b16 %v169
    %v1210 = vunpack.c.l.b16 %v170
    %v1211 = vunpack.c.h.b16 %v170
    %v1212 = vunpack.c.l.b16 %v171
    %v1213 = vunpack.c.h.b16 %v171
    %v1214 = vunpack.c.l.b16 %v172
    %v1215 = vunpack.c.h.b16 %v172
    %v1216 = vunpack.c.l.b16 %v173
    %v1217 = vunpack.c.h.b16 %v173
    %v1218 = vunpack.c.l.b16 %v174
    %v1219 = vunpack.c.h.b16 %v174
    %v1220 = vunpack.c.l.b16 %v175
    %v1221 = vunpack.c.h.b16 %v175
    %v1222 = vunpack.c.l.b16 %v176
    %v1223 = vunpack.c.h.b16 %v176
    %v1224 = vunpack.c.l.b16 %v177
    %v1225 = vunpack.c.h.b16 %v177
    %v1226 = vunpack.c.l.b16 %v178
    %v1227 = vunpack.c.h.b16 %v178
    %v1228 = vunpack.c.l.b16 %v179
    %v1229 = vunpack.c.h.b16 %v179
    %v1230 = vunpack.c.l.b16 %v180
    %v1231 = vunpack.c.h.b16 %v180
    %v1232 = vunpack.c.l.b16 %v181
    %v1233 = vunpack.c.h.b16 %v181
    %v1234 = vunpack.c.l.b16 %v182
    %v1235 = vunpack.c.h.b16 %v182
    %v1236 = vunpack.c.l.b16 %v183
    %v1237 = vunpack.c.h.b16 %v183
    %v1238 = vunpack.c.l.b16 %v184
    %v1239 = vunpack.c.h.b16 %v184
    %v1240 = vunpack.c.l.b16 %v185
    %v1241 = vunpack.c.h.b16 %v185
    %v1242 = vunpack.c.l.b16 %v186
    %v1243 = vunpack.c.h.b16 %v186
    %v1244 = vunpack.c.l.b16 %v187
    %v1245 = vunpack.c.h.b16 %v187
    %v1246 = vunpack.c.l.b16 %v188
    %v1247 = vunpack.c.h.b16 %v188
    %v1248 = vunpack.c.l.b16 %v189
    %v1249 = vunpack.c.h.b16 %v189
    %v1250 = vunpack.c.l.b16 %v190
    %v1251 = vunpack.c.h.b16 %v190
    %v1252 = vunpack.c.l.b16 %v191
    %v1253 = vunpack.c.h.b16 %v191
    %v1254 = vunpack.c.l.b16 %v192
    %v1255 = vunpack.c.h.b16 %v192
    %v1256 = vunpack.c.l.b16 %v193
    %v1257 = vunpack.c.h.b16 %v193
    %v1258 = vunpack.c.l.b16 %v194
    %v1259 = vunpack.c.h.b16 %v194
    %v1260 = vunpack.c.l.b16 %v195
    %v1261 = vunpack.c.h.b16 %v195
    %v1262 = vunpack.c.l.b16 %v196
    %v1263 = vunpack.c.h.b16 %v196
    %v1264 = vunpack.c.l.b16 %v197
    %v1265 = vunpack.c.h.b16 %v197
    %v1266 = vunpack.c.l.b16 %v198
    %v1267 = vunpack.c.h.b16 %v198
    %v1268 = vunpack.c.l.b16 %v199
    %v1269 = vunpack.c.h.b16 %v199
    %v1270 = vunpack.c.l.b16 %v200
    %v1271 = vunpack.c.h.b16 %v200
    %v1272 = vunpack.c.l.b16 %v201
    %v1273 = vunpack.c.h.b16 %v201
    %v1274 = vunpack.c.l.b16 %v202
    %v1275 = vunpack.c.h.b16 %v202
    %v1276 = vunpack.c.l.b16 %v203
    %v1277 = vunpack.c.h.b16 %v203
    %v1278 = vunpack.c.l.b16 %v204
    %v1279 = vunpack.c.h.b16 %v204
    %v1280 = vunpack.c.l.b16 %v205
    %v1281 = vunpack.c.h.b16 %v205
    %v1282 = vunpack.c.l.b16 %v206
    %v1283 = vunpack.c.h.b16 %v206
    %v1284 = vunpack.c.l.b16 %v207
    %v1285 = vunpack.c.h.b16 %v207
    %v1286 = vunpack.c.l.b16 %v208
    %v1287 = vunpack.c.h.b16 %v208
    %v1288 = vunpack.c.l.b16 %v209
    %v1289 = vunpack.c.h.b16 %v209
    %v1290 = vunpack.c.l.b16 %v210
    %v1291 = vunpack.c.h.b16 %v210
    %v1292 = vunpack.c.l.b16 %v211
    %v1293 = vunpack.c.h.b16 %v211
    %v1294 = vunpack.c.l.b16 %v212
    %v1295 = vunpack.c.h.b16 %v212
    %v1296 = vunpack.c.l.b16 %v213
    %v1297 = vunpack.c.h.b16 %v213
    %v1298 = vunpack.c.l.b16 %v214
    %v1299 = vunpack.c.h.b16 %v214
    %v1300 = vunpack.c.l.b16 %v215
    %v1301 = vunpack.c.h.b16 %v215
    %v1302 = vunpack.c.l.b16 %v216
    %v1303 = vunpack.c.h.b16 %v216
    %v1304 = vunpack.c.l.b16 %v217
    %v1305 = vunpack.c.h.b16 %v217
    %v1306 = vunpack.c.l.b16 %v218
    %v1307 = vunpack.c.h.b16 %v218
    %v1308 = vunpack.c.l.b16 %v219
    %v1309 = vunpack.c.h.b16 %v219
    %v1310 = vunpack.c.l.b16 %v220
    %v1311 = vunpack.c.h.b16 %v220
    %v1312 = vunpack.c.l.b16 %v221
    %v1313 = vunpack.c.h.b16 %v221
    %v1314 = vunpack.c.l.b16 %v222
    %v1315 = vunpack.c.h.b16 %v222
    %v1316 = vunpack.c.l.b16 %v223
    %v1317 = vunpack.c.h.b16 %v223
    %v1318 = vunpack.c.l.b16 %v224
    %v1319 = vunpack.c.h.b16 %v224
    %v1320 = vunpack.c.l.b16 %v225
    %v1321 = vunpack.c.h.b16 %v225
    %v1322 = vunpack.c.l.b16 %v226
    %v1323 = vunpack.c.h.b16 %v226
    %v1324 = vunpack.c.l.b16 %v227
    %v1325 = vunpack.c.h.b16 %v227
    %v1326 = vunpack.c.l.b16 %v228
    %v1327 = vunpack.c.h.b16 %v228
    %v1328 = vunpack.c.l.b16 %v229
    %v1329 = vunpack.c.h.b16 %v229
    %v1330 = vunpack.c.l.b16 %v230
    %v1331 = vunpack.c.h.b16 %v230
    %v1332 = vunpack.c.l.b16 %v231
    %v1333 = vunpack.c.h.b16 %v231
    %v1334 = vunpack.c.l.b16 %v232
    %v1335 = vunpack.c.h.b16 %v232
    %v1336 = vunpack.c.l.b16 %v233
    %v1337 = vunpack.c.h.b16 %v233
    %v1338 = vunpack.c.l.b16 %v234
    %v1339 = vunpack.c.h.b16 %v234
    %v1340 = vunpack.c.l.b16 %v235
    %v1341 = vunpack.c.h.b16 %v235
    %v1342 = vunpack.c.l.b16 %v236
    %v1343 = vunpack.c.h.b16 %v236
    %v1344 = vunpack.c.l.b16 %v237
    %v1345 = vunpack.c.h.b16 %v237
    %v1346 = vunpack.c.l.b16 %v238
    %v1347 = vunpack.c.h.b16 %v238
    %v1348 = vunpack.c.l.b16 %v239
    %v1349 = vunpack.c.h.b16 %v239
    %v1350 = vunpack.c.l.b16 %v240
    %v1351 = vunpack.c.h.b16 %v240
    %v1352 = vunpack.c.l.b16 %v241
    %v1353 = vunpack.c.h.b16 %v241
    %v1354 = vunpack.c.l.b16 %v242
    %v1355 = vunpack.c.h.b16 %v242
    %v1356 = vunpack.c.l.b16 %v243
    %v1357 = vunpack.c.h.b16 %v243
    %v1358 = vunpack.c.l.b16 %v244
    %v1359 = vunpack.c.h.b16 %v244
    %v1360 = vunpack.c.l.b16 %v245
    %v1361 = vunpack.c.h.b16 %v245
    %v1362 = vunpack.c.l.b16 %v246
    %v1363 = vunpack.c.h.b16 %v246
    %v1364 = vunpack.c.l.b16 %v247
    %v1365 = vunpack.c.h.b16 %v247
    %v1366 = vunpack.c.l.b16 %v248
    %v1367 = vunpack.c.h.b16 %v248
    %v1368 = vunpack.c.l.b16 %v249
    %v1369 = vunpack.c.h.b16 %v249
    %v1370 = vunpack.c.l.b16 %v250
    %v1371 = vunpack.c.h.b16 %v250
    %v1372 = vunpack.c.l.b16 %v251
    %v1373 = vunpack.c.h.b16 %v251
    %v1374 = vunpack.c.l.b16 %v252
    %v1375 = vunpack.c.h.b16 %v252
    %v1376 = vunpack.c.l.b16 %v253
    %v1377 = vunpack.c.h.b16 %v253
    %v1378 = vunpack.c.l.b16 %v254
    %v1379 = vunpack.c.h.b16 %v254
    %v1380 = vunpack.c.l.b16 %v255
    %v1381 = vunpack.c.h.b16 %v255
    %v1382 = vunpack.c.l.b16 %v256
    %v1383 = vunpack.c.h.b16 %v256
    %v1384 = vunpack.c.l.b16 %v257
    %v1385 = vunpack.c.h.b16 %v257
    %v1386 = vunpack.c.l.b16 %v258
    %v1387 = vunpack.c.h.b16 %v258
    %v1388 = vunpack.c.l.b16 %v259
    %v1389 = vunpack.c.h.b16 %v259
    %v1390 = vunpack.c.l.b16 %v260
    %v1391 = vunpack.c.h.b16 %v260
    %v1392 = vunpack.c.l.b16 %v261
    %v1393 = vunpack.c.h.b16 %v261
    %v1394 = vunpack.c.l.b16 %v262
    %v1395 = vunpack.c.h.b16 %v262
    %v1396 = vunpack.c.l.b16 %v263
    %v1397 = vunpack.c.h.b16 %v263
    %v1398 = vunpack.c.l.b16 %v264
    %v1399 = vunpack.c.h.b16 %v264
    %v1400 = vunpack.c.l.b16 %v265
    %v1401 = vunpack.c.h.b16 %v265
    %v1402 = vunpack.c.l.b16 %v266
    %v1403 = vunpack.c.h.b16 %v266
    %v1404 = vunpack.c.l.b16 %v267
    %v1405 = vunpack.c.h.b16 %v267
    %v1406 = vunpack.c.l.b16 %v268
    %v1407 = vunpack.c.h.b16 %v268
    %v1408 = vunpack.c.l.b16 %v269
    %v1409 = vunpack.c.h.b16 %v269
    %v1410 = vunpack.c.l.b16 %v270
    %v1411 = vunpack.c.h.b16 %v270
    %v1412 = vunpack.c.l.b16 %v271
    %v1413 = vunpack.c.h.b16 %v271
    %v1414 = vunpack.c.l.b16 %v272
    %v1415 = vunpack.c.h.b16 %v272
    %v1416 = vunpack.c.l.b16 %v273
    %v1417 = vunpack.c.h.b16 %v273
    %v1418 = vunpack.c.l.b16 %v274
    %v1419 = vunpack.c.h.b16 %v274
    %v1420 = vunpack.c.l.b16 %v275
    %v1421 = vunpack.c.h.b16 %v275
    %v1422 = vunpack.c.l.b16 %v276
    %v1423 = vunpack.c.h.b16 %v276
    %v1424 = vunpack.c.l.b16 %v277
    %v1425 = vunpack.c.h.b16 %v277
    %v1426 = vunpack.c.l.b16 %v278
    %v1427 = vunpack.c.h.b16 %v278
    %v1428 = vunpack.c.l.b16 %v279
    %v1429 = vunpack.c.h.b16 %v279
    %v1430 = vunpack.c.l.b16 %v280
    %v1431 = vunpack.c.h.b16 %v280
    %v1432 = vunpack.c.l.b16 %v281
    %v1433 = vunpack.c.h.b16 %v281
    %v1434 = vunpack.c.l.b16 %v282
    %v1435 = vunpack.c.h.b16 %v282
    %v1436 = vunpack.c.l.b16 %v283
    %v1437 = vunpack.c.h.b16 %v283
    %v1438 = vunpack.c.l.b16 %v284
    %v1439 = vunpack.c.h.b16 %v284
    %v1440 = vunpack.c.l.b16 %v285
    %v1441 = vunpack.c.h.b16 %v285
    %v1442 = vunpack.c.l.b16 %v286
    %v1443 = vunpack.c.h.b16 %v286
    %v1444 = vunpack.c.l.b16 %v287
    %v1445 = vunpack.c.h.b16 %v287
    %v1446 = vunpack.c.l.b16 %v288
    %v1447 = vunpack.c.h.b16 %v288
    %v1448 = vunpack.c.l.b16 %v289
    %v1449 = vunpack.c.h.b16 %v289
    %v1450 = vunpack.c.l.b16 %v290
    %v1451 = vunpack.c.h.b16 %v290
    %v1452 = vunpack.c.l.b16 %v291
    %v1453 = vunpack.c.h.b16 %v291
    %v1454 = vunpack.c.l.b16 %v292
    %v1455 = vunpack.c.h.b16 %v292
    %v1456 = vunpack.c.l.b16 %v293
    %v1457 = vunpack.c.h.b16 %v293
    %v1458 = vunpack.c.l.b16 %v294
    %v1459 = vunpack.c.h.b16 %v294
    %v1460 = vunpack.c.l.b16 %v295
    %v1461 = vunpack.c.h.b16 %v295
    %v1462 = vunpack.c.l.b16 %v296
    %v1463 = vunpack.c.h.b16 %v296
    %v1464 = vunpack.c.l.b16 %v297
    %v1465 = vunpack.c.h.b16 %v297
    %v1466 = vunpack.c.l.b16 %v298
    %v1467 = vunpack.c.h.b16 %v298
    %v1468 = vunpack.c.l.b16 %v299
    %v1469 = vunpack.c.h.b16 %v299
    %v1470 = vunpack.c.l.b16 %v300
    %v1471 = vunpack.c.h.b16 %v300
    %v1472 = vunpack.c.l.b16 %v301
    %v1473 = vunpack.c.h.b16 %v301
    %v1474 = vunpack.c.l.b16 %v302
    %v1475 = vunpack.c.h.b16 %v302
    %v1476 = vunpack.c.l.b16 %v303
    %v1477 = vunpack.c.h.b16 %v303
    %v1478 = vunpack.c.l.b16 %v304
    %v1479 = vunpack.c.h.b16 %v304
    %v1480 = vunpack.c.l.b16 %v305
    %v1481 = vunpack.c.h.b16 %v305
    %v1482 = vunpack.c.l.b16 %v306
    %v1483 = vunpack.c.h.b16 %v306
    %v1484 = vunpack.c.l.b16 %v307
    %v1485 = vunpack.c.h.b16 %v307
    %v1486 = vunpack.c.l.b16 %v308
    %v1487 = vunpack.c.h.b16 %v308
    %v1488 = vunpack.c.l.b16 %v309
    %v1489 = vunpack.c.h.b16 %v309
    %v1490 = vunpack.c.l.b16 %v310
    %v1491 = vunpack.c.h.b16 %v310
    %v1492 = vunpack.c.l.b16 %v311
    %v1493 = vunpack.c.h.b16 %v311
    %v1494 = vunpack.c.l.b16 %v312
    %v1495 = vunpack.c.h.b16 %v312
    %v1496 = vunpack.c.l.b16 %v313
    %v1497 = vunpack.c.h.b16 %v313
    %v1498 = vunpack.c.l.b16 %v314
    %v1499 = vunpack.c.h.b16 %v314
    %v1500 = vunpack.c.l.b16 %v315
    %v1501 = vunpack.c.h.b16 %v315
    %v1502 = vunpack.c.l.b16 %v316
    %v1503 = vunpack.c.h.b16 %v316
    %v1504 = vunpack.c.l.b16 %v317
    %v1505 = vunpack.c.h.b16 %v317
    %v1506 = vunpack.c.l.b16 %v318
    %v1507 = vunpack.c.h.b16 %v318
    %v1508 = vunpack.c.l.b16 %v319
    %v1509 = vunpack.c.h.b16 %v319
    %v1510 = vunpack.c.l.b16 %v320
    %v1511 = vunpack.c.h.b16 %v320
    %v1512 = vunpack.c.l.b16 %v321
    %v1513 = vunpack.c.h.b16 %v321
    %v1514 = vunpack.c.l.b16 %v322
    %v1515 = vunpack.c.h.b16 %v322
    %v1516 = vunpack.c.l.b16 %v323
    %v1517 = vunpack.c.h.b16 %v323
    %v1518 = vunpack.c.l.b16 %v324
    %v1519 = vunpack.c.h.b16 %v324
    %v1520 = vunpack.c.l.b16 %v325
    %v1521 = vunpack.c.h.b16 %v325
    %v1522 = vunpack.c.l.b16 %v326
    %v1523 = vunpack.c.h.b16 %v326
    %v1524 = vunpack.c.l.b16 %v327
    %v1525 = vunpack.c.h.b16 %v327
    %v1526 = vunpack.c.l.b16 %v328
    %v1527 = vunpack.c.h.b16 %v328
    %v1528 = vunpack.c.l.b16 %v329
    %v1529 = vunpack.c.h.b16 %v329
    %v1530 = vunpack.c.l.b16 %v330
    %v1531 = vunpack.c.h.b16 %v330
    %v1532 = vunpack.c.l.b16 %v331
    %v1533 = vunpack.c.h.b16 %v331
    %v1534 = vunpack.c.l.b16 %v332
    %v1535 = vunpack.c.h.b16 %v332
    %v1536 = vunpack.c.l.b16 %v333
    %v1537 = vunpack.c.h.b16 %v333
    %v1538 = vunpack.c.l.b16 %v334
    %v1539 = vunpack.c.h.b16 %v334
    %v1540 = vunpack.c.l.b16 %v335
    %v1541 = vunpack.c.h.b16 %v335
    %v1542 = vunpack.c.l.b16 %v336
    %v1543 = vunpack.c.h.b16 %v336
    %v1544 = vunpack.c.l.b16 %v337
    %v1545 = vunpack.c.h.b16 %v337
    %v1546 = vunpack.c.l.b16 %v338
    %v1547 = vunpack.c.h.b16 %v338
    %v1548 = vunpack.c.l.b16 %v339
    %v1549 = vunpack.c.h.b16 %v339
    %v1550 = vunpack.c.l.b16 %v340
    %v1551 = vunpack.c.h.b16 %v340
    %v1552 = vunpack.c.l.b16 %v341
    %v1553 = vunpack.c.h.b16 %v341
    %v1554 = vunpack.c.l.b16 %v342
    %v1555 = vunpack.c.h.b16 %v342
    %v1556 = vunpack.c.l.b16 %v343
    %v1557 = vunpack.c.h.b16 %v343
    %v1558 = vunpack.c.l.b16 %v344
    %v1559 = vunpack.c.h.b16 %v344
    %v1560 = vunpack.c.l.b16 %v345
    %v1561 = vunpack.c.h.b16 %v345
    %v1562 = vunpack.c.l.b16 %v346
    %v1563 = vunpack.c.h.b16 %v346
    %v1564 = vunpack.c.l.b16 %v347
    %v1565 = vunpack.c.h.b16 %v347
    %v1566 = vunpack.c.l.b16 %v348
    %v1567 = vunpack.c.h.b16 %v348
    %v1568 = vunpack.c.l.b16 %v349
    %v1569 = vunpack.c.h.b16 %v349
    %v1570 = vunpack.c.l.b16 %v350
    %v1571 = vunpack.c.h.b16 %v350
    %v1572 = vunpack.c.l.b16 %v351
    %v1573 = vunpack.c.h.b16 %v351
    %v1574 = vunpack.c.l.b16 %v352
    %v1575 = vunpack.c.h.b16 %v352
    %v1576 = vunpack.c.l.b16 %v353
    %v1577 = vunpack.c.h.b16 %v353
    %v1578 = vunpack.c.l.b16 %v354
    %v1579 = vunpack.c.h.b16 %v354
    %v1580 = vunpack.c.l.b16 %v355
    %v1581 = vunpack.c.h.b16 %v355
    %v1582 = vunpack.c.l.b16 %v356
    %v1583 = vunpack.c.h.b16 %v356
    %v1584 = vunpack.c.l.b16 %v357
    %v1585 = vunpack.c.h.b16 %v357
    %v1586 = vunpack.c.l.b16 %v358
    %v1587 = vunpack.c.h.b16 %v358
    %v1588 = vunpack.c.l.b16 %v359
    %v1589 = vunpack.c.h.b16 %v359
    %v1590 = vunpack.c.l.b16 %v360
    %v1591 = vunpack.c.h.b16 %v360
    %v1592 = vunpack.c.l.b16 %v361
    %v1593 = vunpack.c.h.b16 %v361
    %v1594 = vunpack.c.l.b16 %v362
    %v1595 = vunpack.c.h.b16 %v362
    %v1596 = vunpack.c.l.b16 %v363
    %v1597 = vunpack.c.h.b16 %v363
    %v1598 = vunpack.c.l.b16 %v364
    %v1599 = vunpack.c.h.b16 %v364
    %v1600 = vunpack.c.l.b16 %v365
    %v1601 = vunpack.c.h.b16 %v365
    %v1602 = vunpack.c.l.b16 %v366
    %v1603 = vunpack.c.h.b16 %v366
    %v1604 = vunpack.c.l.b16 %v367
    %v1605 = vunpack.c.h.b16 %v367
    %v1606 = vunpack.c.l.b16 %v368
    %v1607 = vunpack.c.h.b16 %v368
    %v1608 = vunpack.c.l.b16 %v369
    %v1609 = vunpack.c.h.b16 %v369
    %v1610 = vunpack.c.l.b16 %v370
    %v1611 = vunpack.c.h.b16 %v370
    %v1612 = vunpack.c.l.b16 %v371
    %v1613 = vunpack.c.h.b16 %v371
    %v1614 = vunpack.c.l.b16 %v372
    %v1615 = vunpack.c.h.b16 %v372
    %v1616 = vunpack.c.l.b16 %v373
    %v1617 = vunpack.c.h.b16 %v373
    %v1618 = vunpack.c.l.b16 %v374
    %v1619 = vunpack.c.h.b16 %v374
    %v1620 = vunpack.c.l.b16 %v375
    %v1621 = vunpack.c.h.b16 %v375
    %v1622 = vunpack.c.l.b16 %v376
    %v1623 = vunpack.c.h.b16 %v376
    %v1624 = vunpack.c.l.b16 %v377
    %v1625 = vunpack.c.h.b16 %v377
    %v1626 = vunpack.c.l.b16 %v378
    %v1627 = vunpack.c.h.b16 %v378
    %v1628 = vunpack.c.l.b16 %v379
    %v1629 = vunpack.c.h.b16 %v379
    %v1630 = vunpack.c.l.b16 %v380
    %v1631 = vunpack.c.h.b16 %v380
    %v1632 = vunpack.c.l.b16 %v381
    %v1633 = vunpack.c.h.b16 %v381
    %v1634 = vunpack.c.l.b16 %v382
    %v1635 = vunpack.c.h.b16 %v382
    %v1636 = vunpack.c.l.b16 %v383
    %v1637 = vunpack.c.h.b16 %v383
    %v1638 = vunpack.c.l.b16 %v384
    %v1639 = vunpack.c.h.b16 %v384
    %v1640 = vunpack.c.l.b16 %v385
    %v1641 = vunpack.c.h.b16 %v385
    %v1642 = vunpack.c.l.b16 %v386
    %v1643 = vunpack.c.h.b16 %v386
    %v1644 = vunpack.c.l.b16 %v387
    %v1645 = vunpack.c.h.b16 %v387
    %v1646 = vunpack.c.l.b16 %v388
    %v1647 = vunpack.c.h.b16 %v388
    %v1648 = vunpack.c.l.b16 %v389
    %v1649 = vunpack.c.h.b16 %v389
    %v1650 = vunpack.c.l.b16 %v390
    %v1651 = vunpack.c.h.b16 %v390
    %v1652 = vunpack.c.l.b16 %v391
    %v1653 = vunpack.c.h.b16 %v391
    %v1654 = vunpack.c.l.b16 %v392
    %v1655 = vunpack.c.h.b16 %v392
    %v1656 = vunpack.c.l.b16 %v393
    %v1657 = vunpack.c.h.b16 %v393
    %v1658 = vunpack.c.l.b16 %v394
    %v1659 = vunpack.c.h.b16 %v394
    %v1660 = vunpack.c.l.b16 %v395
    %v1661 = vunpack.c.h.b16 %v395
    %v1662 = vunpack.c.l.b16 %v396
    %v1663 = vunpack.c.h.b16 %v396
    %v1664 = vunpack.c.l.b16 %v397
    %v1665 = vunpack.c.h.b16 %v397
    %v1666 = vunpack.c.l.b16 %v398
    %v1667 = vunpack.c.h.b16 %v398
    %v1668 = vunpack.c.l.b16 %v399
    %v1669 = vunpack.c.h.b16 %v399
    %v1670 = vunpack.c.l.b16 %v400
    %v1671 = vunpack.c.h.b16 %v400
    %v1672 = vunpack.c.l.b16 %v401
    %v1673 = vunpack.c.h.b16 %v401
    %v1674 = vunpack.c.l.b16 %v402
    %v1675 = vunpack.c.h.b16 %v402
    %v1676 = vunpack.c.l.b16 %v403
    %v1677 = vunpack.c.h.b16 %v403
    %v1678 = vunpack.c.l.b16 %v404
    %v1679 = vunpack.c.h.b16 %v404
    %v1680 = vunpack.c.l.b16 %v405
    %v1681 = vunpack.c.h.b16 %v405
    %v1682 = vunpack.c.l.b16 %v406
    %v1683 = vunpack.c.h.b16 %v406
    %v1684 = vunpack.c.l.b16 %v407
    %v1685 = vunpack.c.h.b16 %v407
    %v1686 = vunpack.c.l.b16 %v408
    %v1687 = vunpack.c.h.b16 %v408
    %v1688 = vunpack.c.l.b16 %v409
    %v1689 = vunpack.c.h.b16 %v409
    %v1690 = vunpack.c.l.b16 %v410
    %v1691 = vunpack.c.h.b16 %v410
    %v1692 = vunpack.c.l.b16 %v411
    %v1693 = vunpack.c.h.b16 %v411
    %v1694 = vunpack.c.l.b16 %v412
    %v1695 = vunpack.c.h.b16 %v412
    %v1696 = vunpack.c.l.b16 %v413
    %v1697 = vunpack.c.h.b16 %v413
    %v1698 = vunpack.c.l.b16 %v414
    %v1699 = vunpack.c.h.b16 %v414
    %v1700 = vunpack.c.l.b16 %v415
    %v1701 = vunpack.c.h.b16 %v415
    %v1702 = vunpack.c.l.b16 %v416
    %v1703 = vunpack.c.h.b16 %v416
    %v1704 = vunpack.c.l.b16 %v417
    %v1705 = vunpack.c.h.b16 %v417
    %v1706 = vunpack.c.l.b16 %v418
    %v1707 = vunpack.c.h.b16 %v418
    %v1708 = vunpack.c.l.b16 %v419
    %v1709 = vunpack.c.h.b16 %v419
    %v1710 = vunpack.c.l.b16 %v420
    %v1711 = vunpack.c.h.b16 %v420
    %v1712 = vunpack.c.l.b16 %v421
    %v1713 = vunpack.c.h.b16 %v421
    %v1714 = vunpack.c.l.b16 %v422
    %v1715 = vunpack.c.h.b16 %v422
    %v1716 = vunpack.c.l.b16 %v423
    %v1717 = vunpack.c.h.b16 %v423
    %v1718 = vunpack.c.l.b16 %v424
    %v1719 = vunpack.c.h.b16 %v424
    %v1720 = vunpack.c.l.b16 %v425
    %v1721 = vunpack.c.h.b16 %v425
    %v1722 = vunpack.c.l.b16 %v426
    %v1723 = vunpack.c.h.b16 %v426
    %v1724 = vunpack.c.l.b16 %v427
    %v1725 = vunpack.c.h.b16 %v427
    %v1726 = vunpack.c.l.b16 %v428
    %v1727 = vunpack.c.h.b16 %v428
    %v1728 = vunpack.c.l.b16 %v429
    %v1729 = vunpack.c.h.b16 %v429
    %v1730 = vunpack.c.l.b16 %v430
    %v1731 = vunpack.c.h.b16 %v430
    %v1732 = vunpack.c.l.b16 %v431
    %v1733 = vunpack.c.h.b16 %v431
    %v1734 = vunpack.c.l.b16 %v432
    %v1735 = vunpack.c.h.b16 %v432
    %v1736 = vunpack.c.l.b16 %v433
    %v1737 = vunpack.c.h.b16 %v433
    %v1738 = vunpack.c.l.b16 %v434
    %v1739 = vunpack.c.h.b16 %v434
    %v1740 = vunpack.c.l.b16 %v435
    %v1741 = vunpack.c.h.b16 %v435
    %v1742 = vunpack.c.l.b16 %v436
    %v1743 = vunpack.c.h.b16 %v436
    %v1744 = vunpack.c.l.b16 %v437
    %v1745 = vunpack.c.h.b16 %v437
    %v1746 = vunpack.c.l.b16 %v438
    %v1747 = vunpack.c.h.b16 %v438
    %v1748 = vunpack.c.l.b16 %v439
    %v1749 = vunpack.c.h.b16 %v439
    %v1750 = vunpack.c.l.b16 %v440
    %v1751 = vunpack.c.h.b16 %v440
    %v1752 = vunpack.c.l.b16 %v441
    %v1753 = vunpack.c.h.b16 %v441
    %v1754 = vunpack.c.l.b16 %v442
    %v1755 = vunpack.c.h.b16 %v442
    %v1756 = vunpack.c.l.b16 %v443
    %v1757 = vunpack.c.h.b16 %v443
    %v1758 = vunpack.c.l.b16 %v444
    %v1759 = vunpack.c.h.b16 %v444
    %v1760 = vunpack.c.l.b16 %v445
    %v1761 = vunpack.c.h.b16 %v445
    %v1762 = vunpack.c.l.b16 %v446
    %v1763 = vunpack.c.h.b16 %v446
    %v1764 = vunpack.c.l.b16 %v447
    %v1765 = vunpack.c.h.b16 %v447
    %v1766 = vunpack.c.l.b16 %v448
    %v1767 = vunpack.c.h.b16 %v448
    %v1768 = vunpack.c.l.b16 %v449
    %v1769 = vunpack.c.h.b16 %v449
    %v1770 = vunpack.c.l.b16 %v450
    %v1771 = vunpack.c.h.b16 %v450
    %v1772 = vunpack.c.l.b16 %v451
    %v1773 = vunpack.c.h.b16 %v451
    %v1774 = vunpack.c.l.b16 %v452
    %v1775 = vunpack.c.h.b16 %v452
    %v1776 = vunpack.c.l.b16 %v453
    %v1777 = vunpack.c.h.b16 %v453
    %v1778 = vunpack.c.l.b16 %v454
    %v1779 = vunpack.c.h.b16 %v454
    %v1780 = vunpack.c.l.b16 %v455
    %v1781 = vunpack.c.h.b16 %v455
    %v1782 = vunpack.c.l.b16 %v456
    %v1783 = vunpack.c.h.b16 %v456
    %v1784 = vunpack.c.l.b16 %v457
    %v1785 = vunpack.c.h.b16 %v457
    %v1786 = vunpack.c.l.b16 %v458
    %v1787 = vunpack.c.h.b16 %v458
    %v1788 = vunpack.c.l.b16 %v459
    %v1789 = vunpack.c.h.b16 %v459
    %v1790 = vunpack.c.l.b16 %v460
    %v1791 = vunpack.c.h.b16 %v460
    %v1792 = vunpack.c.l.b16 %v461
    %v1793 = vunpack.c.h.b16 %v461
    %v1794 = vunpack.c.l.b16 %v462
    %v1795 = vunpack.c.h.b16 %v462
    %v1796 = vunpack.c.l.b16 %v463
    %v1797 = vunpack.c.h.b16 %v463
    %v1798 = vunpack.c.l.b16 %v464
    %v1799 = vunpack.c.h.b16 %v464
    %v1800 = vunpack.c.l.b16 %v465
    %v1801 = vunpack.c.h.b16 %v465
    %v1802 = vunpack.c.l.b16 %v466
    %v1803 = vunpack.c.h.b16 %v466
    %v1804 = vunpack.c.l.b16 %v467
    %v1805 = vunpack.c.h.b16 %v467
    %v1806 = vunpack.c.l.b16 %v468
    %v1807 = vunpack.c.h.b16 %v468
    %v1808 = vunpack.c.l.b16 %v469
    %v1809 = vunpack.c.h.b16 %v469
    %v1810 = vunpack.c.l.b16 %v470
    %v1811 = vunpack.c.h.b16 %v470
    %v1812 = vunpack.c.l.b16 %v471
    %v1813 = vunpack.c.h.b16 %v471
    %v1814 = vunpack.c.l.b16 %v472
    %v1815 = vunpack.c.h.b16 %v472
    %v1816 = vunpack.c.l.b16 %v473
    %v1817 = vunpack.c.h.b16 %v473
    %v1818 = vunpack.c.l.b16 %v474
    %v1819 = vunpack.c.h.b16 %v474
    %v1820 = vunpack.c.l.b16 %v475
    %v1821 = vunpack.c.h.b16 %v475
    %v1822 = vunpack.c.l.b16 %v476
    %v1823 = vunpack.c.h.b16 %v476
    %v1824 = vunpack.c.l.b16 %v477
    %v1825 = vunpack.c.h.b16 %v477
    %v1826 = vunpack.c.l.b16 %v478
    %v1827 = vunpack.c.h.b16 %v478
    %v1828 = vunpack.c.l.b16 %v479
    %v1829 = vunpack.c.h.b16 %v479
    %v1830 = vunpack.c.l.b16 %v480
    %v1831 = vunpack.c.h.b16 %v480
    %v1832 = vunpack.c.l.b16 %v481
    %v1833 = vunpack.c.h.b16 %v481
    %v1834 = vunpack.c.l.b16 %v482
    %v1835 = vunpack.c.h.b16 %v482
    %v1836 = vunpack.c.l.b16 %v483
    %v1837 = vunpack.c.h.b16 %v483
    %v1838 = vunpack.c.l.b16 %v484
    %v1839 = vunpack.c.h.b16 %v484
    %v1840 = vunpack.c.l.b16 %v485
    %v1841 = vunpack.c.h.b16 %v485
    %v1842 = vunpack.c.l.b16 %v486
    %v1843 = vunpack.c.h.b16 %v486
    %v1844 = vunpack.c.l.b16 %v487
    %v1845 = vunpack.c.h.b16 %v487
    %v1846 = vunpack.c.l.b16 %v488
    %v1847 = vunpack.c.h.b16 %v488
    %v1848 = vunpack.c.l.b16 %v489
    %v1849 = vunpack.c.h.b16 %v489
    %v1850 = vunpack.c.l.b16 %v490
    %v1851 = vunpack.c.h.b16 %v490
    %v1852 = vunpack.c.l.b16 %v491
    %v1853 = vunpack.c.h.b16 %v491
    %v1854 = vunpack.c.l.b16 %v492
    %v1855 = vunpack.c.h.b16 %v492
    %v1856 = vunpack.c.l.b16 %v493
    %v1857 = vunpack.c.h.b16 %v493
    %v1858 = vunpack.c.l.b16 %v494
    %v1859 = vunpack.c.h.b16 %v494
    %v1860 = vunpack.c.l.b16 %v495
    %v1861 = vunpack.c.h.b16 %v495
    %v1862 = vunpack.c.l.b16 %v496
    %v1863 = vunpack.c.h.b16 %v496
    %v1864 = vunpack.c.l.b16 %v497
    %v1865 = vunpack.c.h.b16 %v497
    %v1866 = vunpack.c.l.b16 %v498
    %v1867 = vunpack.c.h.b16 %v498
    %v1868 = vunpack.c.l.b16 %v499
    %v1869 = vunpack.c.h.b16 %v499
    %v1870 = vunpack.c.l.b16 %v500
    %v1871 = vunpack.c.h.b16 %v500
    %v1872 = vunpack.c.l.b16 %v501
    %v1873 = vunpack.c.h.b16 %v501
    %v1874 = vunpack.c.l.b16 %v502
    %v1875 = vunpack.c.h.b16 %v502
    %v1876 = vunpack.c.l.b16 %v503
    %v1877 = vunpack.c.h.b16 %v503
    %v1878 = vunpack.c.l.b16 %v504
    %v1879 = vunpack.c.h.b16 %v504
    %v1880 = vunpack.c.l.b16 %v505
    %v1881 = vunpack.c.h.b16 %v505
    %v1882 = vunpack.c.l.b16 %v506
    %v1883 = vunpack.c.h.b16 %v506
    %v1884 = vunpack.c.l.b16 %v507
    %v1885 = vunpack.c.h.b16 %v507
    %v1886 = vunpack.c.l.b16 %v508
    %v1887 = vunpack.c.h.b16 %v508
    %v1888 = vunpack.c.l.b16 %v509
    %v1889 = vunpack.c.h.b16 %v509
    %v1890 = vunpack.c.l.b16 %v510
    %v1891 = vunpack.c.h.b16 %v510
    %v1892 = vunpack.c.l.b16 %v511
    %v1893 = vunpack.c.h.b16 %v511
    %v1894 = vunpack.c.l.b16 %v512
    %v1895 = vunpack.c.h.b16 %v512
    %v1896 = vunpack.c.l.b16 %v513
    %v1897 = vunpack.c.h.b16 %v513
    %v1898 = vunpack.c.l.b16 %v514
    %v1899 = vunpack.c.h.b16 %v514
    %v1900 = vunpack.c.l.b16 %v515
    %v1901 = vunpack.c.h.b16 %v515
    %v1902 = vunpack.c.l.b16 %v516
    %v1903 = vunpack.c.h.b16 %v516
    %v1904 = vunpack.c.l.b16 %v517
    %v1905 = vunpack.c.h.b16 %v517
    %v1906 = vunpack.c.l.b16 %v518
    %v1907 = vunpack.c.h.b16 %v518
    %v1908 = vunpack.c.l.b16 %v519
    %v1909 = vunpack.c.h.b16 %v519
    %v1910 = vunpack.c.l.b16 %v520
    %v1911 = vunpack.c.h.b16 %v520
    %v1912 = vunpack.c.l.b16 %v521
    %v1913 = vunpack.c.h.b16 %v521
    %v1914 = vunpack.c.l.b16 %v522
    %v1915 = vunpack.c.h.b16 %v522
    %v1916 = vunpack.c.l.b16 %v523
    %v1917 = vunpack.c.h.b16 %v523
    %v1918 = vunpack.c.l.b16 %v524
    %v1919 = vunpack.c.h.b16 %v524
    %v1920 = vunpack.c.l.b16 %v525
    %v1921 = vunpack.c.h.b16 %v525
    %v1922 = vunpack.c.l.b16 %v526
    %v1923 = vunpack.c.h.b16 %v526
    %v1924 = vunpack.c.l.b16 %v527
    %v1925 = vunpack.c.h.b16 %v527
    %v1926 = vunpack.c.l.b16 %v528
    %v1927 = vunpack.c.h.b16 %v528
    %v1928 = vunpack.c.l.b16 %v529
    %v1929 = vunpack.c.h.b16 %v529
    %v1930 = vunpack.c.l.b16 %v530
    %v1931 = vunpack.c.h.b16 %v530
    %v1932 = vunpack.c.l.b16 %v531
    %v1933 = vunpack.c.h.b16 %v531
    %v1934 = vunpack.c.l.b16 %v532
    %v1935 = vunpack.c.h.b16 %v532
    %v1936 = vunpack.c.l.b16 %v533
    %v1937 = vunpack.c.h.b16 %v533
    %v1938 = vunpack.c.l.b16 %v534
    %v1939 = vunpack.c.h.b16 %v534
    %v1940 = vunpack.c.l.b16 %v535
    %v1941 = vunpack.c.h.b16 %v535
    %v1942 = vunpack.c.l.b16 %v536
    %v1943 = vunpack.c.h.b16 %v536
    %v1944 = vunpack.c.l.b16 %v537
    %v1945 = vunpack.c.h.b16 %v537
    %v1946 = vunpack.c.l.b16 %v538
    %v1947 = vunpack.c.h.b16 %v538
    %v1948 = vunpack.c.l.b16 %v539
    %v1949 = vunpack.c.h.b16 %v539
    %v1950 = vunpack.c.l.b16 %v540
    %v1951 = vunpack.c.h.b16 %v540
    %v1952 = vunpack.c.l.b16 %v541
    %v1953 = vunpack.c.h.b16 %v541
    %v1954 = vunpack.c.l.b16 %v542
    %v1955 = vunpack.c.h.b16 %v542
    %v1956 = vunpack.c.l.b16 %v543
    %v1957 = vunpack.c.h.b16 %v543
    %v1958 = vunpack.c.l.b16 %v544
    %v1959 = vunpack.c.h.b16 %v544
    %v1960 = vunpack.c.l.b16 %v545
    %v1961 = vunpack.c.h.b16 %v545
    %v1962 = vunpack.c.l.b16 %v546
    %v1963 = vunpack.c.h.b16 %v546
    %v1964 = vunpack.c.l.b16 %v547
    %v1965 = vunpack.c.h.b16 %v547
    %v1966 = vunpack.c.l.b16 %v548
    %v1967 = vunpack.c.h.b16 %v548
    %v1968 = vunpack.c.l.b16 %v549
    %v1969 = vunpack.c.h.b16 %v549
    %v1970 = vunpack.c.l.b16 %v550
    %v1971 = vunpack.c.h.b16 %v550
    %v1972 = vunpack.c.l.b16 %v551
    %v1973 = vunpack.c.h.b16 %v551
    %v1974 = vunpack.c.l.b16 %v552
    %v1975 = vunpack.c.h.b16 %v552
    %v1976 = vunpack.c.l.b16 %v553
    %v1977 = vunpack.c.h.b16 %v553
    %v1978 = vunpack.c.l.b16 %v554
    %v1979 = vunpack.c.h.b16 %v554
    %v1980 = vunpack.c.l.b16 %v555
    %v1981 = vunpack.c.h.b16 %v555
    %v1982 = vunpack.c.l.b16 %v556
    %v1983 = vunpack.c.h.b16 %v556
    %v1984 = vunpack.c.l.b16 %v557
    %v1985 = vunpack.c.h.b16 %v557
    %v1986 = vunpack.c.l.b16 %v558
    %v1987 = vunpack.c.h.b16 %v558
    %v1988 = vunpack.c.l.b16 %v559
    %v1989 = vunpack.c.h.b16 %v559
    %v1990 = vunpack.c.l.b16 %v560
    %v1991 = vunpack.c.h.b16 %v560
    %v1992 = vunpack.c.l.b16 %v561
    %v1993 = vunpack.c.h.b16 %v561
    %v1994 = vunpack.c.l.b16 %v562
    %v1995 = vunpack.c.h.b16 %v562
    %v1996 = vunpack.c.l.b16 %v563
    %v1997 = vunpack.c.h.b16 %v563
    %v1998 = vunpack.c.l.b16 %v564
    %v1999 = vunpack.c.h.b16 %v564
    %v2000 = vunpack.c.l.b16 %v565
    %v2001 = vunpack.c.h.b16 %v565
    %v2002 = vunpack.c.l.b16 %v566
    %v2003 = vunpack.c.h.b16 %v566
    %v2004 = vunpack.c.l.b16 %v567
    %v2005 = vunpack.c.h.b16 %v567
    %v2006 = vunpack.c.l.b16 %v568
    %v2007 = vunpack.c.h.b16 %v568
    %v2008 = vunpack.c.l.b16 %v569
    %v2009 = vunpack.c.h.b16 %v569
    %v2010 = vunpack.c.l.b16 %v570
    %v2011 = vunpack.c.h.b16 %v570
    %v2012 = vunpack.c.l.b16 %v571
    %v2013 = vunpack.c.h.b16 %v571
    %v2014 = vunpack.c.l.b16 %v572
    %v2015 = vunpack.c.h.b16 %v572
    %v2016 = vunpack.c.l.b16 %v573
    %v2017 = vunpack.c.h.b16 %v573
    %v2018 = vunpack.c.l.b16 %v574
    %v2019 = vunpack.c.h.b16 %v574
    %v2020 = vunpack.c.l.b16 %v575
    %v2021 = vunpack.c.h.b16 %v575
    %v2022 = vunpack.c.l.b16 %v576
    %v2023 = vunpack.c.h.b16 %v576
    %v2024 = vunpack.c.l.b16 %v577
    %v2025 = vunpack.c.h.b16 %v577
    %v2026 = vunpack.c.l.b16 %v578
    %v2027 = vunpack.c.h.b16 %v578
    %v2028 = vunpack.c.l.b16 %v579
    %v2029 = vunpack.c.h.b16 %v579
    %v2030 = vunpack.c.l.b16 %v580
    %v2031 = vunpack.c.h.b16 %v580
    %v2032 = vunpack.c.l.b16 %v581
    %v2033 = vunpack.c.h.b16 %v581
    %v2034 = vunpack.c.l.b16 %v582
    %v2035 = vunpack.c.h.b16 %v582
    %v2036 = vunpack.c.l.b16 %v583
    %v2037 = vunpack.c.h.b16 %v583
    %v2038 = vunpack.c.l.b16 %v584
    %v2039 = vunpack.c.h.b16 %v584
    %v2040 = vunpack.c.l.b16 %v585
    %v2041 = vunpack.c.h.b16 %v585
    %v2042 = vunpack.c.l.b16 %v586
    %v2043 = vunpack.c.h.b16 %v586
    %v2044 = vunpack.c.l.b16 %v587
    %v2045 = vunpack.c.h.b16 %v587
    %v2046 = vunpack.c.l.b16 %v588
    %v2047 = vunpack.c.h.b16 %v588
    %v2048 = vunpack.c.l.b16 %v589
    %v2049 = vunpack.c.h.b16 %v589
    %v2050 = vunpack.c.l.b16 %v590
    %v2051 = vunpack.c.h.b16 %v590
    %v2052 = vunpack.c.l.b16 %v591
    %v2053 = vunpack.c.h.b16 %v591
    %v2054 = vunpack.c.l.b16 %v592
    %v2055 = vunpack.c.h.b16 %v592
    %v2056 = vunpack.c.l.b16 %v593
    %v2057 = vunpack.c.h.b16 %v593
    %v2058 = vunpack.c.l.b16 %v594
    %v2059 = vunpack.c.h.b16 %v594
    %v2060 = vunpack.c.l.b16 %v595
    %v2061 = vunpack.c.h.b16 %v595
    %v2062 = vunpack.c.l.b16 %v596
    %v2063 = vunpack.c.h.b16 %v596
    %v2064 = vunpack.c.l.b16 %v597
    %v2065 = vunpack.c.h.b16 %v597
    %v2066 = vunpack.c.l.b16 %v598
    %v2067 = vunpack.c.h.b16 %v598
    %v2068 = vunpack.c.l.b16 %v599
    %v2069 = vunpack.c.h.b16 %v599
    %v2070 = vunpack.c.l.b16 %v600
    %v2071 = vunpack.c.h.b16 %v600
    %v2072 = vunpack.c.l.b16 %v601
    %v2073 = vunpack.c.h.b16 %v601
    %v2074 = vunpack.c.l.b16 %v602
    %v2075 = vunpack.c.h.b16 %v602
    %v2076 = vunpack.c.l.b16 %v603
    %v2077 = vunpack.c.h.b16 %v603
    %v2078 = vunpack.c.l.b16 %v604
    %v2079 = vunpack.c.h.b16 %v604
    %v2080 = vunpack.c.l.b16 %v605
    %v2081 = vunpack.c.h.b16 %v605
    %v2082 = vunpack.c.l.b16 %v606
    %v2083 = vunpack.c.h.b16 %v606
    %v2084 = vunpack.c.l.b16 %v607
    %v2085 = vunpack.c.h.b16 %v607
    %v2086 = vunpack.c.l.b16 %v608
    %v2087 = vunpack.c.h.b16 %v608
    %v2088 = vunpack.c.l.b16 %v609
    %v2089 = vunpack.c.h.b16 %v609
    %v2090 = vunpack.c.l.b16 %v610
    %v2091 = vunpack.c.h.b16 %v610
    %v2092 = vunpack.c.l.b16 %v611
    %v2093 = vunpack.c.h.b16 %v611
    %v2094 = vunpack.c.l.b16 %v612
    %v2095 = vunpack.c.h.b16 %v612
    %v2096 = vunpack.c.l.b16 %v613
    %v2097 = vunpack.c.h.b16 %v613
    %v2098 = vunpack.c.l.b16 %v614
    %v2099 = vunpack.c.h.b16 %v614
    %v2100 = vunpack.c.l.b16 %v615
    %v2101 = vunpack.c.h.b16 %v615
    %v2102 = vunpack.c.l.b16 %v616
    %v2103 = vunpack.c.h.b16 %v616
    %v2104 = vunpack.c.l.b16 %v617
    %v2105 = vunpack.c.h.b16 %v617
    %v2106 = vunpack.c.l.b16 %v618
    %v2107 = vunpack.c.h.b16 %v618
    %v2108 = vunpack.c.l.b16 %v619
    %v2109 = vunpack.c.h.b16 %v619
    %v2110 = vunpack.c.l.b16 %v620
    %v2111 = vunpack.c.h.b16 %v620
    %v2112 = vunpack.c.l.b16 %v621
    %v2113 = vunpack.c.h.b16 %v621
    %v2114 = vunpack.c.l.b16 %v622
    %v2115 = vunpack.c.h.b16 %v622
    %v2116 = vunpack.c.l.b16 %v623
    %v2117 = vunpack.c.h.b16 %v623
    %v2118 = vunpack.c.l.b16 %v624
    %v2119 = vunpack.c.h.b16 %v624
    %v2120 = vunpack.c.l.b16 %v625
    %v2121 = vunpack.c.h.b16 %v625
    %v2122 = vunpack.c.l.b16 %v626
    %v2123 = vunpack.c.h.b16 %v626
    %v2124 = vunpack.c.l.b16 %v627
    %v2125 = vunpack.c.h.b16 %v627
    %v2126 = vunpack.c.l.b16 %v628
    %v2127 = vunpack.c.h.b16 %v628
    %v2128 = vunpack.c.l.b16 %v629
    %v2129 = vunpack.c.h.b16 %v629
    %v2130 = vunpack.c.l.b16 %v630
    %v2131 = vunpack.c.h.b16 %v630
    %v2132 = vunpack.c.l.b16 %v631
    %v2133 = vunpack.c.h.b16 %v631
    %v2134 = vunpack.c.l.b16 %v632
    %v2135 = vunpack.c.h.b16 %v632
    %v2136 = vunpack.c.l.b16 %v633
    %v2137 = vunpack.c.h.b16 %v633
    %v2138 = vunpack.c.l.b16 %v634
    %v2139 = vunpack.c.h.b16 %v634
    %v2140 = vunpack.c.l.b16 %v635
    %v2141 = vunpack.c.h.b16 %v635
    %v2142 = vunpack.c.l.b16 %v636
    %v2143 = vunpack.c.h.b16 %v636
    %v2144 = vunpack.c.l.b16 %v637
    %v2145 = vunpack.c.h.b16 %v637
    %v2146 = vunpack.c.l.b16 %v638
    %v2147 = vunpack.c.h.b16 %v638
    %v2148 = vunpack.c.l.b16 %v639
    %v2149 = vunpack.c.h.b16 %v639
    %v2150 = vunpack.c.l.b16 %v640
    %v2151 = vunpack.c.h.b16 %v640
    %v2152 = vunpack.c.l.b16 %v641
    %v2153 = vunpack.c.h.b16 %v641
    %v2154 = vunpack.c.l.b16 %v642
    %v2155 = vunpack.c.h.b16 %v642
    %v2156 = vunpack.c.l.b16 %v643
    %v2157 = vunpack.c.h.b16 %v643
    %v2158 = vunpack.c.l.b16 %v644
    %v2159 = vunpack.c.h.b16 %v644
    %v2160 = vunpack.c.l.b16 %v645
    %v2161 = vunpack.c.h.b16 %v645
    %v2162 = vunpack.c.l.b16 %v646
    %v2163 = vunpack.c.h.b16 %v646
    %v2164 = vunpack.c.l.b16 %v647
    %v2165 = vunpack.c.h.b16 %v647
    %v2166 = vunpack.c.l.b16 %v648
    %v2167 = vunpack.c.h.b16 %v648
    %v2168 = vunpack.c.l.b16 %v649
    %v2169 = vunpack.c.h.b16 %v649
    %v2170 = vunpack.c.l.b16 %v650
    %v2171 = vunpack.c.h.b16 %v650
    %v2172 = vunpack.c.l.b16 %v651
    %v2173 = vunpack.c.h.b16 %v651
    %v2174 = vunpack.c.l.b16 %v652
    %v2175 = vunpack.c.h.b16 %v652
    %v2176 = vunpack.c.l.b16 %v653
    %v2177 = vunpack.c.h.b16 %v653
    %v2178 = vunpack.c.l.b16 %v654
    %v2179 = vunpack.c.h.b16 %v654
    %v2180 = vunpack.c.l.b16 %v655
    %v2181 = vunpack.c.h.b16 %v655
    %v2182 = vunpack.c.l.b16 %v656
    %v2183 = vunpack.c.h.b16 %v656
    %v2184 = vunpack.c.l.b16 %v657
    %v2185 = vunpack.c.h.b16 %v657
    %v2186 = vunpack.c.l.b16 %v658
    %v2187 = vunpack.c.h.b16 %v658
    %v2188 = vunpack.c.l.b16 %v659
    %v2189 = vunpack.c.h.b16 %v659
    %v2190 = vunpack.c.l.b16 %v660
    %v2191 = vunpack.c.h.b16 %v660
    %v2192 = vunpack.c.l.b16 %v661
    %v2193 = vunpack.c.h.b16 %v661
    %v2194 = vunpack.c.l.b16 %v662
    %v2195 = vunpack.c.h.b16 %v662
    %v2196 = vunpack.c.l.b16 %v663
    %v2197 = vunpack.c.h.b16 %v663
    %v2198 = vunpack.c.l.b16 %v664
    %v2199 = vunpack.c.h.b16 %v664
    %v2200 = vunpack.c.l.b16 %v665
    %v2201 = vunpack.c.h.b16 %v665
    %v2202 = vunpack.c.l.b16 %v666
    %v2203 = vunpack.c.h.b16 %v666
    %v2204 = vunpack.c.l.b16 %v667
    %v2205 = vunpack.c.h.b16 %v667
    %v2206 = vunpack.c.l.b16 %v668
    %v2207 = vunpack.c.h.b16 %v668
    %v2208 = vunpack.c.l.b16 %v669
    %v2209 = vunpack.c.h.b16 %v669
    %v2210 = vunpack.c.l.b16 %v670
    %v2211 = vunpack.c.h.b16 %v670
    %v2212 = vunpack.c.l.b16 %v671
    %v2213 = vunpack.c.h.b16 %v671
    %v2214 = vunpack.c.l.b16 %v672
    %v2215 = vunpack.c.h.b16 %v672
    %v2216 = vunpack.c.l.b16 %v673
    %v2217 = vunpack.c.h.b16 %v673
    %v2218 = vunpack.c.l.b16 %v674
    %v2219 = vunpack.c.h.b16 %v674
    %v2220 = vunpack.c.l.b16 %v675
    %v2221 = vunpack.c.h.b16 %v675
    %v2222 = vpack.c.b16 %v1202, %v1198
    %v2223 = vpack.c.b16 %v1203, %v1199
    %v2224 = vpack.c.b16 %v1204, %v1200
    %v2225 = vpack.c.b16 %v1205, %v1201
    %v2226 = vpack.c.b16 %v1210, %v1206
    %v2227 = vpack.c.b16 %v1211, %v1207
    %v2228 = vpack.c.b16 %v1212, %v1208
    %v2229 = vpack.c.b16 %v1213, %v1209
    %v2230 = vpack.c.b16 %v1218, %v1214
    %v2231 = vpack.c.b16 %v1219, %v1215
    %v2232 = vpack.c.b16 %v1220, %v1216
    %v2233 = vpack.c.b16 %v1221, %v1217
    %v2234 = vpack.c.b16 %v1226, %v1222
    %v2235 = vpack.c.b16 %v1227, %v1223
    %v2236 = vpack.c.b16 %v1228, %v1224
    %v2237 = vpack.c.b16 %v1229, %v1225
    %v2238 = vpack.c.b16 %v1234, %v1230
    %v2239 = vpack.c.b16 %v1235, %v1231
    %v2240 = vpack.c.b16 %v1236, %v1232
    %v2241 = vpack.c.b16 %v1237, %v1233
    %v2242 = vpack.c.b16 %v1242, %v1238
    %v2243 = vpack.c.b16 %v1243, %v1239
    %v2244 = vpack.c.b16 %v1244, %v1240
    %v2245 = vpack.c.b16 %v1245, %v1241
    %v2246 = vpack.c.b16 %v1250, %v1246
    %v2247 = vpack.c.b16 %v1251, %v1247
    %v2248 = vpack.c.b16 %v1252, %v1248
    %v2249 = vpack.c.b16 %v1253, %v1249
    %v2250 = vpack.c.b16 %v1258, %v1254
    %v2251 = vpack.c.b16 %v1259, %v1255
    %v2252 = vpack.c.b16 %v1260, %v1256
    %v2253 = vpack.c.b16 %v1261, %v1257
    %v2254 = vpack.c.b16 %v1266, %v1262
    %v2255 = vpack.c.b16 %v1267, %v1263
    %v2256 = vpack.c.b16 %v1268, %v1264
    %v2257 = vpack.c.b16 %v1269, %v1265
    %v2258 = vpack.c.b16 %v1274, %v1270
    %v2259 = vpack.c.b16 %v1275, %v1271
    %v2260 = vpack.c.b16 %v1276, %v1272
    %v2261 = vpack.c.b16 %v1277, %v1273
    %v2262 = vpack.c.b16 %v1282, %v1278
    %v2263 = vpack.c.b16 %v1283, %v1279
    %v2264 = vpack.c.b16 %v1284, %v1280
    %v2265 = vpack.c.b16 %v1285, %v1281
    %v2266 = vpack.c.b16 %v1290, %v1286
    %v2267 = vpack.c.b16 %v1291, %v1287
    %v2268 = vpack.c.b16 %v1292, %v1288
    %v2269 = vpack.c.b16 %v1293, %v1289
    %v2270 = vpack.c.b16 %v1298, %v1294
    %v2271 = vpack.c.b16 %v1299, %v1295
    %v2272 = vpack.c.b16 %v1300, %v1296
    %v2273 = vpack.c.b16 %v1301, %v1297
    %v2274 = vpack.c.b16 %v1306, %v1302
    %v2275 = vpack.c.b16 %v1307, %v1303
    %v2276 = vpack.c.b16 %v1308, %v1304
    %v2277 = vpack.c.b16 %v1309, %v1305
    %v2278 = vpack.c.b16 %v1314, %v1310
    %v2279 = vpack.c.b16 %v1315, %v1311
    %v2280 = vpack.c.b16 %v1316, %v1312
    %v2281 = vpack.c.b16 %v1317, %v1313
    %v2282 = vpack.c.b16 %v1322, %v1318
    %v2283 = vpack.c.b16 %v1323, %v1319
    %v2284 = vpack.c.b16 %v1324, %v1320
    %v2285 = vpack.c.b16 %v1325, %v1321
    %v2286 = vpack.c.b16 %v1330, %v1326
    %v2287 = vpack.c.b16 %v1331, %v1327
    %v2288 = vpack.c.b16 %v1332, %v1328
    %v2289 = vpack.c.b16 %v1333, %v1329
    %v2290 = vpack.c.b16 %v1338, %v1334
    %v2291 = vpack.c.b16 %v1339, %v1335
    %v2292 = vpack.c.b16 %v1340, %v1336
    %v2293 = vpack.c.b16 %v1341, %v1337
    %v2294 = vpack.c.b16 %v1346, %v1342
    %v2295 = vpack.c.b16 %v1347, %v1343
    %v2296 = vpack.c.b16 %v1348, %v1344
    %v2297 = vpack.c.b16 %v1349, %v1345
    %v2298 = vpack.c.b16 %v1354, %v1350
    %v2299 = vpack.c.b16 %v1355, %v1351
    %v2300 = vpack.c.b16 %v1356, %v1352
    %v2301 = vpack.c.b16 %v1357, %v1353
    %v2302 = vpack.c.b16 %v1362, %v1358
    %v2303 = vpack.c.b16 %v1363, %v1359
    %v2304 = vpack.c.b16 %v1364, %v1360
    %v2305 = vpack.c.b16 %v1365, %v1361
    %v2306 = vpack.c.b16 %v1370, %v1366
    %v2307 = vpack.c.b16 %v1371, %v1367
    %v2308 = vpack.c.b16 %v1372, %v1368
    %v2309 = vpack.c.b16 %v1373, %v1369
    %v2310 = vpack.c.b16 %v1378, %v1374
    %v2311 = vpack.c.b16 %v1379, %v1375
    %v2312 = vpack.c.b16 %v1380, %v1376
    %v2313 = vpack.c.b16 %v1381, %v1377
    %v2314 = vpack.c.b16 %v1386, %v1382
    %v2315 = vpack.c.b16 %v1387, %v1383
    %v2316 = vpack.c.b16 %v1388, %v1384
    %v2317 = vpack.c.b16 %v1389, %v1385
    %v2318 = vpack.c.b16 %v1394, %v1390
    %v2319 = vpack.c.b16 %v1395, %v1391
    %v2320 = vpack.c.b16 %v1396, %v1392
    %v2321 = vpack.c.b16 %v1397, %v1393
    %v2322 = vpack.c.b16 %v1402, %v1398
    %v2323 = vpack.c.b16 %v1403, %v1399
    %v2324 = vpack.c.b16 %v1404, %v1400
    %v2325 = vpack.c.b16 %v1405, %v1401
    %v2326 = vpack.c.b16 %v1410, %v1406
    %v2327 = vpack.c.b16 %v1411, %v1407
    %v2328 = vpack.c.b16 %v1412, %v1408
    %v2329 = vpack.c.b16 %v1413, %v1409
    %v2330 = vpack.c.b16 %v1418, %v1414
    %v2331 = vpack.c.b16 %v1419, %v1415
    %v2332 = vpack.c.b16 %v1420, %v1416
    %v2333 = vpack.c.b16 %v1421, %v1417
    %v2334 = vpack.c.b16 %v1426, %v1422
    %v2335 = vpack.c.b16 %v1427, %v1423
    %v2336 = vpack.c.b16 %v1428, %v1424
    %v2337 = vpack.c.b16 %v1429, %v1425
    %v2338 = vpack.c.b16 %v1434, %v1430
    %v2339 = vpack.c.b16 %v1435, %v1431
    %v2340 = vpack.c.b16 %v1436, %v1432
    %v2341 = vpack.c.b16 %v1437, %v1433
    %v2342 = vpack.c.b16 %v1442, %v1438
    %v2343 = vpack.c.b16 %v1443, %v1439
    %v2344 = vpack.c.b16 %v1444, %v1440
    %v2345 = vpack.c.b16 %v1445, %v1441
    %v2346 = vpack.c.b16 %v1450, %v1446
    %v2347 = vpack.c.b16 %v1451, %v1447
    %v2348 = vpack.c.b16 %v1452, %v1448
    %v2349 = vpack.c.b16 %v1453, %v1449
    %v2350 = vpack.c.b16 %v1458, %v1454
    %v2351 = vpack.c.b16 %v1459, %v1455
    %v2352 = vpack.c.b16 %v1460, %v1456
    %v2353 = vpack.c.b16 %v1461, %v1457
    %v2354 = vpack.c.b16 %v1466, %v1462
    %v2355 = vpack.c.b16 %v1467, %v1463
    %v2356 = vpack.c.b16 %v1468, %v1464
    %v2357 = vpack.c.b16 %v1469, %v1465
    %v2358 = vpack.c.b16 %v1474, %v1470
    %v2359 = vpack.c.b16 %v1475, %v1471
    %v2360 = vpack.c.b16 %v1476, %v1472
    %v2361 = vpack.c.b16 %v1477, %v1473
    %v2362 = vpack.c.b16 %v1482, %v1478
    %v2363 = vpack.c.b16 %v1483, %v1479
    %v2364 = vpack.c.b16 %v1484, %v1480
    %v2365 = vpack.c.b16 %v1485, %v1481
    %v2366 = vpack.c.b16 %v1490, %v1486
    %v2367 = vpack.c.b16 %v1491, %v1487
    %v2368 = vpack.c.b16 %v1492, %v1488
    %v2369 = vpack.c.b16 %v1493, %v1489
    %v2370 = vpack.c.b16 %v1498, %v1494
    %v2371 = vpack.c.b16 %v1499, %v1495
    %v2372 = vpack.c.b16 %v1500, %v1496
    %v2373 = vpack.c.b16 %v1501, %v1497
    %v2374 = vpack.c.b16 %v1506, %v1502
    %v2375 = vpack.c.b16 %v1507, %v1503
    %v2376 = vpack.c.b16 %v1508, %v1504
    %v2377 = vpack.c.b16 %v1509, %v1505
    %v2378 = vpack.c.b16 %v1514, %v1510
    %v2379 = vpack.c.b16 %v1515, %v1511
    %v2380 = vpack.c.b16 %v1516, %v1512
    %v2381 = vpack.c.b16 %v1517, %v1513
    %v2382 = vpack.c.b16 %v1522, %v1518
    %v2383 = vpack.c.b16 %v1523, %v1519
    %v2384 = vpack.c.b16 %v1524, %v1520
    %v2385 = vpack.c.b16 %v1525, %v1521
    %v2386 = vpack.c.b16 %v1530, %v1526
    %v2387 = vpack.c.b16 %v1531, %v1527
    %v2388 = vpack.c.b16 %v1532, %v1528
    %v2389 = vpack.c.b16 %v1533, %v1529
    %v2390 = vpack.c.b16 %v1538, %v1534
    %v2391 = vpack.c.b16 %v1539, %v1535
    %v2392 = vpack.c.b16 %v1540, %v1536
    %v2393 = vpack.c.b16 %v1541, %v1537
    %v2394 = vpack.c.b16 %v1546, %v1542
    %v2395 = vpack.c.b16 %v1547, %v1543
    %v2396 = vpack.c.b16 %v1548, %v1544
    %v2397 = vpack.c.b16 %v1549, %v1545
    %v2398 = vpack.c.b16 %v1554, %v1550
    %v2399 = vpack.c.b16 %v1555, %v1551
    %v2400 = vpack.c.b16 %v1556, %v1552
    %v2401 = vpack.c.b16 %v1557, %v1553
    %v2402 = vpack.c.b16 %v1562, %v1558
    %v2403 = vpack.c.b16 %v1563, %v1559
    %v2404 = vpack.c.b16 %v1564, %v1560
    %v2405 = vpack.c.b16 %v1565, %v1561
    %v2406 = vpack.c.b16 %v1570, %v1566
    %v2407 = vpack.c.b16 %v1571, %v1567
    %v2408 = vpack.c.b16 %v1572, %v1568
    %v2409 = vpack.c.b16 %v1573, %v1569
    %v2410 = vpack.c.b16 %v1578, %v1574
    %v2411 = vpack.c.b16 %v1579, %v1575
    %v2412 = vpack.c.b16 %v1580, %v1576
    %v2413 = vpack.c.b16 %v1581, %v1577
    %v2414 = vpack.c.b16 %v1586, %v1582
    %v2415 = vpack.c.b16 %v1587, %v1583
    %v2416 = vpack.c.b16 %v1588, %v1584
    %v2417 = vpack.c.b16 %v1589, %v1585
    %v2418 = vpack.c.b16 %v1594, %v1590
    %v2419 = vpack.c.b16 %v1595, %v1591
    %v2420 = vpack.c.b16 %v1596, %v1592
    %v2421 = vpack.c.b16 %v1597, %v1593
    %v2422 = vpack.c.b16 %v1602, %v1598
    %v2423 = vpack.c.b16 %v1603, %v1599
    %v2424 = vpack.c.b16 %v1604, %v1600
    %v2425 = vpack.c.b16 %v1605, %v1601
    %v2426 = vpack.c.b16 %v1610, %v1606
    %v2427 = vpack.c.b16 %v1611, %v1607
    %v2428 = vpack.c.b16 %v1612, %v1608
    %v2429 = vpack.c.b16 %v1613, %v1609
    %v2430 = vpack.c.b16 %v1618, %v1614
    %v2431 = vpack.c.b16 %v1619, %v1615
    %v2432 = vpack.c.b16 %v1620, %v1616
    %v2433 = vpack.c.b16 %v1621, %v1617
    %v2434 = vpack.c.b16 %v1626, %v1622
    %v2435 = vpack.c.b16 %v1627, %v1623
    %v2436 = vpack.c.b16 %v1628, %v1624
    %v2437 = vpack.c.b16 %v1629, %v1625
    %v2438 = vpack.c.b16 %v1634, %v1630
    %v2439 = vpack.c.b16 %v1635, %v1631
    %v2440 = vpack.c.b16 %v1636, %v1632
    %v2441 = vpack.c.b16 %v1637, %v1633
    %v2442 = vpack.c.b16 %v1642, %v1638
    %v2443 = vpack.c.b16 %v1643, %v1639
    %v2444 = vpack.c.b16 %v1644, %v1640
    %v2445 = vpack.c.b16 %v1645, %v1641
    %v2446 = vpack.c.b16 %v1650, %v1646
    %v2447 = vpack.c.b16 %v1651, %v1647
    %v2448 = vpack.c.b16 %v1652, %v1648
    %v2449 = vpack.c.b16 %v1653, %v1649
    %v2450 = vpack.c.b16 %v1658, %v1654
    %v2451 = vpack.c.b16 %v1659, %v1655
    %v2452 = vpack.c.b16 %v1660, %v1656
    %v2453 = vpack.c.b16 %v1661, %v1657
    %v2454 = vpack.c.b16 %v1666, %v1662
    %v2455 = vpack.c.b16 %v1667, %v1663
    %v2456 = vpack.c.b16 %v1668, %v1664
    %v2457 = vpack.c.b16 %v1669, %v1665
    %v2458 = vpack.c.b16 %v1674, %v1670
    %v2459 = vpack.c.b16 %v1675, %v1671
    %v2460 = vpack.c.b16 %v1676, %v1672
    %v2461 = vpack.c.b16 %v1677, %v1673
    %v2462 = vpack.c.b16 %v1682, %v1678
    %v2463 = vpack.c.b16 %v1683, %v1679
    %v2464 = vpack.c.b16 %v1684, %v1680
    %v2465 = vpack.c.b16 %v1685, %v1681
    %v2466 = vpack.c.b16 %v1690, %v1686
    %v2467 = vpack.c.b16 %v1691, %v1687
    %v2468 = vpack.c.b16 %v1692, %v1688
    %v2469 = vpack.c.b16 %v1693, %v1689
    %v2470 = vpack.c.b16 %v1698, %v1694
    %v2471 = vpack.c.b16 %v1699, %v1695
    %v2472 = vpack.c.b16 %v1700, %v1696
    %v2473 = vpack.c.b16 %v1701, %v1697
    %v2474 = vpack.c.b16 %v1706, %v1702
    %v2475 = vpack.c.b16 %v1707, %v1703
    %v2476 = vpack.c.b16 %v1708, %v1704
    %v2477 = vpack.c.b16 %v1709, %v1705
    %v2478 = vpack.c.b16 %v1714, %v1710
    %v2479 = vpack.c.b16 %v1715, %v1711
    %v2480 = vpack.c.b16 %v1716, %v1712
    %v2481 = vpack.c.b16 %v1717, %v1713
    %v2482 = vpack.c.b16 %v1722, %v1718
    %v2483 = vpack.c.b16 %v1723, %v1719
    %v2484 = vpack.c.b16 %v1724, %v1720
    %v2485 = vpack.c.b16 %v1725, %v1721
    %v2486 = vpack.c.b16 %v1730, %v1726
    %v2487 = vpack.c.b16 %v1731, %v1727
    %v2488 = vpack.c.b16 %v1732, %v1728
    %v2489 = vpack.c.b16 %v1733, %v1729
    %v2490 = vpack.c.b16 %v1738, %v1734
    %v2491 = vpack.c.b16 %v1739, %v1735
    %v2492 = vpack.c.b16 %v1740, %v1736
    %v2493 = vpack.c.b16 %v1741, %v1737
    %v2494 = vpack.c.b16 %v1746, %v1742
    %v2495 = vpack.c.b16 %v1747, %v1743
    %v2496 = vpack.c.b16 %v1748, %v1744
    %v2497 = vpack.c.b16 %v1749, %v1745
    %v2498 = vpack.c.b16 %v1754, %v1750
    %v2499 = vpack.c.b16 %v1755, %v1751
    %v2500 = vpack.c.b16 %v1756, %v1752
    %v2501 = vpack.c.b16 %v1757, %v1753
    %v2502 = vpack.c.b16 %v1762, %v1758
    %v2503 = vpack.c.b16 %v1763, %v1759
    %v2504 = vpack.c.b16 %v1764, %v1760
    %v2505 = vpack.c.b16 %v1765, %v1761
    %v2506 = vpack.c.b16 %v1770, %v1766
    %v2507 = vpack.c.b16 %v1771, %v1767
    %v2508 = vpack.c.b16 %v1772, %v1768
    %v2509 = vpack.c.b16 %v1773, %v1769
    %v2510 = vpack.c.b16 %v1778, %v1774
    %v2511 = vpack.c.b16 %v1779, %v1775
    %v2512 = vpack.c.b16 %v1780, %v1776
    %v2513 = vpack.c.b16 %v1781, %v1777
    %v2514 = vpack.c.b16 %v1786, %v1782
    %v2515 = vpack.c.b16 %v1787, %v1783
    %v2516 = vpack.c.b16 %v1788, %v1784
    %v2517 = vpack.c.b16 %v1789, %v1785
    %v2518 = vpack.c.b16 %v1794, %v1790
    %v2519 = vpack.c.b16 %v1795, %v1791
    %v2520 = vpack.c.b16 %v1796, %v1792
    %v2521 = vpack.c.b16 %v1797, %v1793
    %v2522 = vpack.c.b16 %v1802, %v1798
    %v2523 = vpack.c.b16 %v1803, %v1799
    %v2524 = vpack.c.b16 %v1804, %v1800
    %v2525 = vpack.c.b16 %v1805, %v1801
    %v2526 = vpack.c.b16 %v1810, %v1806
    %v2527 = vpack.c.b16 %v1811, %v1807
    %v2528 = vpack.c.b16 %v1812, %v1808
    %v2529 = vpack.c.b16 %v1813, %v1809
    %v2530 = vpack.c.b16 %v1818, %v1814
    %v2531 = vpack.c.b16 %v1819, %v1815
    %v2532 = vpack.c.b16 %v1820, %v1816
    %v2533 = vpack.c.b16 %v1821, %v1817
    %v2534 = vpack.c.b16 %v1826, %v1822
    %v2535 = vpack.c.b16 %v1827, %v1823
    %v2536 = vpack.c.b16 %v1828, %v1824
    %v2537 = vpack.c.b16 %v1829, %v1825
    %v2538 = vpack.c.b16 %v1834, %v1830
    %v2539 = vpack.c.b16 %v1835, %v1831
    %v2540 = vpack.c.b16 %v1836, %v1832
    %v2541 = vpack.c.b16 %v1837, %v1833
    %v2542 = vpack.c.b16 %v1842, %v1838
    %v2543 = vpack.c.b16 %v1843, %v1839
    %v2544 = vpack.c.b16 %v1844, %v1840
    %v2545 = vpack.c.b16 %v1845, %v1841
    %v2546 = vpack.c.b16 %v1850, %v1846
    %v2547 = vpack.c.b16 %v1851, %v1847
    %v2548 = vpack.c.b16 %v1852, %v1848
    %v2549 = vpack.c.b16 %v1853, %v1849
    %v2550 = vpack.c.b16 %v1858, %v1854
    %v2551 = vpack.c.b16 %v1859, %v1855
    %v2552 = vpack.c.b16 %v1860, %v1856
    %v2553 = vpack.c.b16 %v1861, %v1857
    %v2554 = vpack.c.b16 %v1866, %v1862
    %v2555 = vpack.c.b16 %v1867, %v1863
    %v2556 = vpack.c.b16 %v1868, %v1864
    %v2557 = vpack.c.b16 %v1869, %v1865
    %v2558 = vpack.c.b16 %v1874, %v1870
    %v2559 = vpack.c.b16 %v1875, %v1871
    %v2560 = vpack.c.b16 %v1876, %v1872
    %v2561 = vpack.c.b16 %v1877, %v1873
    %v2562 = vpack.c.b16 %v1882, %v1878
    %v2563 = vpack.c.b16 %v1883, %v1879
    %v2564 = vpack.c.b16 %v1884, %v1880
    %v2565 = vpack.c.b16 %v1885, %v1881
    %v2566 = vpack.c.b16 %v1890, %v1886
    %v2567 = vpack.c.b16 %v1891, %v1887
    %v2568 = vpack.c.b16 %v1892, %v1888
    %v2569 = vpack.c.b16 %v1893, %v1889
    %v2570 = vpack.c.b16 %v1898, %v1894
    %v2571 = vpack.c.b16 %v1899, %v1895
    %v2572 = vpack.c.b16 %v1900, %v1896
    %v2573 = vpack.c.b16 %v1901, %v1897
    %v2574 = vpack.c.b16 %v1906, %v1902
    %v2575 = vpack.c.b16 %v1907, %v1903
    %v2576 = vpack.c.b16 %v1908, %v1904
    %v2577 = vpack.c.b16 %v1909, %v1905
    %v2578 = vpack.c.b16 %v1914, %v1910
    %v2579 = vpack.c.b16 %v1915, %v1911
    %v2580 = vpack.c.b16 %v1916, %v1912
    %v2581 = vpack.c.b16 %v1917, %v1913
    %v2582 = vpack.c.b16 %v1922, %v1918
    %v2583 = vpack.c.b16 %v1923, %v1919
    %v2584 = vpack.c.b16 %v1924, %v1920
    %v2585 = vpack.c.b16 %v1925, %v1921
    %v2586 = vpack.c.b16 %v1930, %v1926
    %v2587 = vpack.c.b16 %v1931, %v1927
    %v2588 = vpack.c.b16 %v1932, %v1928
    %v2589 = vpack.c.b16 %v1933, %v1929
    %v2590 = vpack.c.b16 %v1938, %v1934
    %v2591 = vpack.c.b16 %v1939, %v1935
    %v2592 = vpack.c.b16 %v1940, %v1936
    %v2593 = vpack.c.b16 %v1941, %v1937
    %v2594 = vpack.c.b16 %v1946, %v1942
    %v2595 = vpack.c.b16 %v1947, %v1943
    %v2596 = vpack.c.b16 %v1948, %v1944
    %v2597 = vpack.c.b16 %v1949, %v1945
    %v2598 = vpack.c.b16 %v1954, %v1950
    %v2599 = vpack.c.b16 %v1955, %v1951
    %v2600 = vpack.c.b16 %v1956, %v1952
    %v2601 = vpack.c.b16 %v1957, %v1953
    %v2602 = vpack.c.b16 %v1962, %v1958
    %v2603 = vpack.c.b16 %v1963, %v1959
    %v2604 = vpack.c.b16 %v1964, %v1960
    %v2605 = vpack.c.b16 %v1965, %v1961
    %v2606 = vpack.c.b16 %v1970, %v1966
    %v2607 = vpack.c.b16 %v1971, %v1967
    %v2608 = vpack.c.b16 %v1972, %v1968
    %v2609 = vpack.c.b16 %v1973, %v1969
    %v2610 = vpack.c.b16 %v1978, %v1974
    %v2611 = vpack.c.b16 %v1979, %v1975
    %v2612 = vpack.c.b16 %v1980, %v1976
    %v2613 = vpack.c.b16 %v1981, %v1977
    %v2614 = vpack.c.b16 %v1986, %v1982
    %v2615 = vpack.c.b16 %v1987, %v1983
    %v2616 = vpack.c.b16 %v1988, %v1984
    %v2617 = vpack.c.b16 %v1989, %v1985
    %v2618 = vpack.c.b16 %v1994, %v1990
    %v2619 = vpack.c.b16 %v1995, %v1991
    %v2620 = vpack.c.b16 %v1996, %v1992
    %v2621 = vpack.c.b16 %v1997, %v1993
    %v2622 = vpack.c.b16 %v2002, %v1998
    %v2623 = vpack.c.b16 %v2003, %v1999
    %v2624 = vpack.c.b16 %v2004, %v2000
    %v2625 = vpack.c.b16 %v2005, %v2001
    %v2626 = vpack.c.b16 %v2010, %v2006
    %v2627 = vpack.c.b16 %v2011, %v2007
    %v2628 = vpack.c.b16 %v2012, %v2008
    %v2629 = vpack.c.b16 %v2013, %v2009
    %v2630 = vpack.c.b16 %v2018, %v2014
    %v2631 = vpack.c.b16 %v2019, %v2015
    %v2632 = vpack.c.b16 %v2020, %v2016
    %v2633 = vpack.c.b16 %v2021, %v2017
    %v2634 = vpack.c.b16 %v2026, %v2022
    %v2635 = vpack.c.b16 %v2027, %v2023
    %v2636 = vpack.c.b16 %v2028, %v2024
    %v2637 = vpack.c.b16 %v2029, %v2025
    %v2638 = vpack.c.b16 %v2034, %v2030
    %v2639 = vpack.c.b16 %v2035, %v2031
    %v2640 = vpack.c.b16 %v2036, %v2032
    %v2641 = vpack.c.b16 %v2037, %v2033
    %v2642 = vpack.c.b16 %v2042, %v2038
    %v2643 = vpack.c.b16 %v2043, %v2039
    %v2644 = vpack.c.b16 %v2044, %v2040
    %v2645 = vpack.c.b16 %v2045, %v2041
    %v2646 = vpack.c.b16 %v2050, %v2046
    %v2647 = vpack.c.b16 %v2051, %v2047
    %v2648 = vpack.c.b16 %v2052, %v2048
    %v2649 = vpack.c.b16 %v2053, %v2049
    %v2650 = vpack.c.b16 %v2058, %v2054
    %v2651 = vpack.c.b16 %v2059, %v2055
    %v2652 = vpack.c.b16 %v2060, %v2056
    %v2653 = vpack.c.b16 %v2061, %v2057
    %v2654 = vpack.c.b16 %v2066, %v2062
    %v2655 = vpack.c.b16 %v2067, %v2063
    %v2656 = vpack.c.b16 %v2068, %v2064
    %v2657 = vpack.c.b16 %v2069, %v2065
    %v2658 = vpack.c.b16 %v2074, %v2070
    %v2659 = vpack.c.b16 %v2075, %v2071
    %v2660 = vpack.c.b16 %v2076, %v2072
    %v2661 = vpack.c.b16 %v2077, %v2073
    %v2662 = vpack.c.b16 %v2082, %v2078
    %v2663 = vpack.c.b16 %v2083, %v2079
    %v2664 = vpack.c.b16 %v2084, %v2080
    %v2665 = vpack.c.b16 %v2085, %v2081
    %v2666 = vpack.c.b16 %v2090, %v2086
    %v2667 = vpack.c.b16 %v2091, %v2087
    %v2668 = vpack.c.b16 %v2092, %v2088
    %v2669 = vpack.c.b16 %v2093, %v2089
    %v2670 = vpack.c.b16 %v2098, %v2094
    %v2671 = vpack.c.b16 %v2099, %v2095
    %v2672 = vpack.c.b16 %v2100, %v2096
    %v2673 = vpack.c.b16 %v2101, %v2097
    %v2674 = vpack.c.b16 %v2106, %v2102
    %v2675 = vpack.c.b16 %v2107, %v2103
    %v2676 = vpack.c.b16 %v2108, %v2104
    %v2677 = vpack.c.b16 %v2109, %v2105
    %v2678 = vpack.c.b16 %v2114, %v2110
    %v2679 = vpack.c.b16 %v2115, %v2111
    %v2680 = vpack.c.b16 %v2116, %v2112
    %v2681 = vpack.c.b16 %v2117, %v2113
    %v2682 = vpack.c.b16 %v2122, %v2118
    %v2683 = vpack.c.b16 %v2123, %v2119
    %v2684 = vpack.c.b16 %v2124, %v2120
    %v2685 = vpack.c.b16 %v2125, %v2121
    %v2686 = vpack.c.b16 %v2130, %v2126
    %v2687 = vpack.c.b16 %v2131, %v2127
    %v2688 = vpack.c.b16 %v2132, %v2128
    %v2689 = vpack.c.b16 %v2133, %v2129
    %v2690 = vpack.c.b16 %v2138, %v2134
    %v2691 = vpack.c.b16 %v2139, %v2135
    %v2692 = vpack.c.b16 %v2140, %v2136
    %v2693 = vpack.c.b16 %v2141, %v2137
    %v2694 = vpack.c.b16 %v2146, %v2142
    %v2695 = vpack.c.b16 %v2147, %v2143
    %v2696 = vpack.c.b16 %v2148, %v2144
    %v2697 = vpack.c.b16 %v2149, %v2145
    %v2698 = vpack.c.b16 %v2154, %v2150
    %v2699 = vpack.c.b16 %v2155, %v2151
    %v2700 = vpack.c.b16 %v2156, %v2152
    %v2701 = vpack.c.b16 %v2157, %v2153
    %v2702 = vpack.c.b16 %v2162, %v2158
    %v2703 = vpack.c.b16 %v2163, %v2159
    %v2704 = vpack.c.b16 %v2164, %v2160
    %v2705 = vpack.c.b16 %v2165, %v2161
    %v2706 = vpack.c.b16 %v2170, %v2166
    %v2707 = vpack.c.b16 %v2171, %v2167
    %v2708 = vpack.c.b16 %v2172, %v2168
    %v2709 = vpack.c.b16 %v2173, %v2169
    %v2710 = vpack.c.b16 %v2178, %v2174
    %v2711 = vpack.c.b16 %v2179, %v2175
    %v2712 = vpack.c.b16 %v2180, %v2176
    %v2713 = vpack.c.b16 %v2181, %v2177
    %v2714 = vpack.c.b16 %v2186, %v2182
    %v2715 = vpack.c.b16 %v2187, %v2183
    %v2716 = vpack.c.b16 %v2188, %v2184
    %v2717 = vpack.c.b16 %v2189, %v2185
    %v2718 = vpack.c.b16 %v2194, %v2190
    %v2719 = vpack.c.b16 %v2195, %v2191
    %v2720 = vpack.c.b16 %v2196, %v2192
    %v2721 = vpack.c.b16 %v2197, %v2193
    %v2722 = vpack.c.b16 %v2202, %v2198
    %v2723 = vpack.c.b16 %v2203, %v2199
    %v2724 = vpack.c.b16 %v2204, %v2200
    %v2725 = vpack.c.b16 %v2205, %v2201
    %v2726 = vpack.c.b16 %v2210, %v2206
    %v2727 = vpack.c.b16 %v2211, %v2207
    %v2728 = vpack.c.b16 %v2212, %v2208
    %v2729 = vpack.c.b16 %v2213, %v2209
    %v2730 = vpack.c.b16 %v2218, %v2214
    %v2731 = vpack.c.b16 %v2219, %v2215
    %v2732 = vpack.c.b16 %v2220, %v2216
    %v2733 = vpack.c.b16 %v2221, %v2217
    %3246 = vmatpush.bf16.msra.mxu0 %v2250
    %3247 = vmatpush.bf16.msra.mxu0 %v2246
    %3248 = vmatpush.bf16.msra.mxu0 %v2242
    %3249 = vmatpush.bf16.msra.mxu0 %v2238
    %3250 = vmatpush.bf16.msra.mxu0 %v2234
    %3251 = vmatpush.bf16.msra.mxu0 %v2230
    %3252 = vmatpush.bf16.msra.mxu0 %v2226
    %3253 = vmatpush.bf16.msra.mxu0 %v2222
    %3254 = vmatmul.bf16.gmra.mxu0 %v148
    %v3255 = vpop.f32.mrf.mxu0
    %v3256 = vadd.f32 %v678, %v3255
    %v3257 = vpop.f32.mrf.mxu0
    %3258 = vdwg.mxu0
    %3259 = vmatpush.bf16.msra.mxu0 %v2282
    %3260 = vmatpush.bf16.msra.mxu0 %v2278
    %3261 = vmatpush.bf16.msra.mxu0 %v2274
    %3262 = vmatpush.bf16.msra.mxu0 %v2270
    %3263 = vmatpush.bf16.msra.mxu0 %v2266
    %3264 = vmatpush.bf16.msra.mxu0 %v2262
    %3265 = vmatpush.bf16.msra.mxu0 %v2258
    %3266 = vmatpush.bf16.msra.mxu0 %v2254
    %3267 = vmatmul.bf16.gmra.mxu0 %v149
    %v3268 = vpop.f32.mrf.mxu0
    %v3269 = vadd.f32 %v3256, %v3268
    %v3270 = vpop.f32.mrf.mxu0
    %3271 = vdwg.mxu0
    %3272 = vmatpush.bf16.msra.mxu0 %v2314
    %3273 = vmatpush.bf16.msra.mxu0 %v2310
    %3274 = vmatpush.bf16.msra.mxu0 %v2306
    %3275 = vmatpush.bf16.msra.mxu0 %v2302
    %3276 = vmatpush.bf16.msra.mxu0 %v2298
    %3277 = vmatpush.bf16.msra.mxu0 %v2294
    %3278 = vmatpush.bf16.msra.mxu0 %v2290
    %3279 = vmatpush.bf16.msra.mxu0 %v2286
    %3280 = vmatmul.bf16.gmra.mxu0 %v150
    %v3281 = vpop.f32.mrf.mxu0
    %v3282 = vadd.f32 %v3269, %v3281
    %v3283 = vpop.f32.mrf.mxu0
    %3284 = vdwg.mxu0
    %3285 = vmatpush.bf16.msra.mxu0 %v2346
    %3286 = vmatpush.bf16.msra.mxu0 %v2342
    %3287 = vmatpush.bf16.msra.mxu0 %v2338
    %3288 = vmatpush.bf16.msra.mxu0 %v2334
    %3289 = vmatpush.bf16.msra.mxu0 %v2330
    %3290 = vmatpush.bf16.msra.mxu0 %v2326
    %3291 = vmatpush.bf16.msra.mxu0 %v2322
    %3292 = vmatpush.bf16.msra.mxu0 %v2318
    %3293 = vmatmul.bf16.gmra.mxu0 %v151
    %v3294 = vpop.f32.mrf.mxu0
    %v3295 = vadd.f32 %v3282, %v3294
    %v3296 = vpop.f32.mrf.mxu0
    %3297 = vdwg.mxu0
    %3298 = vmatpush.bf16.msra.mxu0 %v2378
    %3299 = vmatpush.bf16.msra.mxu0 %v2374
    %3300 = vmatpush.bf16.msra.mxu0 %v2370
    %3301 = vmatpush.bf16.msra.mxu0 %v2366
    %3302 = vmatpush.bf16.msra.mxu0 %v2362
    %3303 = vmatpush.bf16.msra.mxu0 %v2358
    %3304 = vmatpush.bf16.msra.mxu0 %v2354
    %3305 = vmatpush.bf16.msra.mxu0 %v2350
    %3306 = vmatmul.bf16.gmra.mxu0 %v152
    %v3307 = vpop.f32.mrf.mxu0
    %v3308 = vadd.f32 %v3295, %v3307
    %v3309 = vpop.f32.mrf.mxu0
    %3310 = vdwg.mxu0
    %3311 = vmatpush.bf16.msra.mxu0 %v2410
    %3312 = vmatpush.bf16.msra.mxu0 %v2406
    %3313 = vmatpush.bf16.msra.mxu0 %v2402
    %3314 = vmatpush.bf16.msra.mxu0 %v2398
    %3315 = vmatpush.bf16.msra.mxu0 %v2394
    %3316 = vmatpush.bf16.msra.mxu0 %v2390
    %3317 = vmatpush.bf16.msra.mxu0 %v2386
    %3318 = vmatpush.bf16.msra.mxu0 %v2382
    %3319 = vmatmul.bf16.gmra.mxu0 %v153
    %v3320 = vpop.f32.mrf.mxu0
    %v3321 = vadd.f32 %v3308, %v3320
    %v3322 = vpop.f32.mrf.mxu0
    %3323 = vdwg.mxu0
    %3324 = vmatpush.bf16.msra.mxu0 %v2442
    %3325 = vmatpush.bf16.msra.mxu0 %v2438
    %3326 = vmatpush.bf16.msra.mxu0 %v2434
    %3327 = vmatpush.bf16.msra.mxu0 %v2430
    %3328 = vmatpush.bf16.msra.mxu0 %v2426
    %3329 = vmatpush.bf16.msra.mxu0 %v2422
    %3330 = vmatpush.bf16.msra.mxu0 %v2418
    %3331 = vmatpush.bf16.msra.mxu0 %v2414
    %3332 = vmatmul.bf16.gmra.mxu0 %v154
    %v3333 = vpop.f32.mrf.mxu0
    %v3334 = vadd.f32 %v3321, %v3333
    %v3335 = vpop.f32.mrf.mxu0
    %3336 = vdwg.mxu0
    %3337 = vmatpush.bf16.msra.mxu0 %v2474
    %3338 = vmatpush.bf16.msra.mxu0 %v2470
    %3339 = vmatpush.bf16.msra.mxu0 %v2466
    %3340 = vmatpush.bf16.msra.mxu0 %v2462
    %3341 = vmatpush.bf16.msra.mxu0 %v2458
    %3342 = vmatpush.bf16.msra.mxu0 %v2454
    %3343 = vmatpush.bf16.msra.mxu0 %v2450
    %3344 = vmatpush.bf16.msra.mxu0 %v2446
    %3345 = vmatmul.bf16.gmra.mxu0 %v155
    %v3346 = vpop.f32.mrf.mxu0
    %v3347 = vadd.f32 %v3334, %v3346
    %v3348 = vpop.f32.mrf.mxu0
    %3349 = vdwg.mxu0
    %3350 = vmatpush.bf16.msra.mxu0 %v2506
    %3351 = vmatpush.bf16.msra.mxu0 %v2502
    %3352 = vmatpush.bf16.msra.mxu0 %v2498
    %3353 = vmatpush.bf16.msra.mxu0 %v2494
    %3354 = vmatpush.bf16.msra.mxu0 %v2490
    %3355 = vmatpush.bf16.msra.mxu0 %v2486
    %3356 = vmatpush.bf16.msra.mxu0 %v2482
    %3357 = vmatpush.bf16.msra.mxu0 %v2478
    %3358 = vmatmul.bf16.gmra.mxu0 %v156
    %v3359 = vpop.f32.mrf.mxu0
    %v3360 = vadd.f32 %v3347, %v3359
    %v3361 = vpop.f32.mrf.mxu0
    %3362 = vdwg.mxu0
    %3363 = vmatpush.bf16.msra.mxu0 %v2538
    %3364 = vmatpush.bf16.msra.mxu0 %v2534
    %3365 = vmatpush.bf16.msra.mxu0 %v2530
    %3366 = vmatpush.bf16.msra.mxu0 %v2526
    %3367 = vmatpush.bf16.msra.mxu0 %v2522
    %3368 = vmatpush.bf16.msra.mxu0 %v2518
    %3369 = vmatpush.bf16.msra.mxu0 %v2514
    %3370 = vmatpush.bf16.msra.mxu0 %v2510
    %3371 = vmatmul.bf16.gmra.mxu0 %v157
    %v3372 = vpop.f32.mrf.mxu0
    %v3373 = vadd.f32 %v3360, %v3372
    %v3374 = vpop.f32.mrf.mxu0
    %3375 = vdwg.mxu0
    %3376 = vmatpush.bf16.msra.mxu0 %v2570
    %3377 = vmatpush.bf16.msra.mxu0 %v2566
    %3378 = vmatpush.bf16.msra.mxu0 %v2562
    %3379 = vmatpush.bf16.msra.mxu0 %v2558
    %3380 = vmatpush.bf16.msra.mxu0 %v2554
    %3381 = vmatpush.bf16.msra.mxu0 %v2550
    %3382 = vmatpush.bf16.msra.mxu0 %v2546
    %3383 = vmatpush.bf16.msra.mxu0 %v2542
    %3384 = vmatmul.bf16.gmra.mxu0 %v158
    %v3385 = vpop.f32.mrf.mxu0
    %v3386 = vadd.f32 %v3373, %v3385
    %v3387 = vpop.f32.mrf.mxu0
    %3388 = vdwg.mxu0
    %3389 = vmatpush.bf16.msra.mxu0 %v2602
    %3390 = vmatpush.bf16.msra.mxu0 %v2598
    %3391 = vmatpush.bf16.msra.mxu0 %v2594
    %3392 = vmatpush.bf16.msra.mxu0 %v2590
    %3393 = vmatpush.bf16.msra.mxu0 %v2586
    %3394 = vmatpush.bf16.msra.mxu0 %v2582
    %3395 = vmatpush.bf16.msra.mxu0 %v2578
    %3396 = vmatpush.bf16.msra.mxu0 %v2574
    %3397 = vmatmul.bf16.gmra.mxu0 %v159
    %v3398 = vpop.f32.mrf.mxu0
    %v3399 = vadd.f32 %v3386, %v3398
    %v3400 = vpop.f32.mrf.mxu0
    %3401 = vdwg.mxu0
    %3402 = vmatpush.bf16.msra.mxu0 %v2634
    %3403 = vmatpush.bf16.msra.mxu0 %v2630
    %3404 = vmatpush.bf16.msra.mxu0 %v2626
    %3405 = vmatpush.bf16.msra.mxu0 %v2622
    %3406 = vmatpush.bf16.msra.mxu0 %v2618
    %3407 = vmatpush.bf16.msra.mxu0 %v2614
    %3408 = vmatpush.bf16.msra.mxu0 %v2610
    %3409 = vmatpush.bf16.msra.mxu0 %v2606
    %3410 = vmatmul.bf16.gmra.mxu0 %v160
    %v3411 = vpop.f32.mrf.mxu0
    %v3412 = vadd.f32 %v3399, %v3411
    %v3413 = vpop.f32.mrf.mxu0
    %3414 = vdwg.mxu0
    %3415 = vmatpush.bf16.msra.mxu0 %v2666
    %3416 = vmatpush.bf16.msra.mxu0 %v2662
    %3417 = vmatpush.bf16.msra.mxu0 %v2658
    %3418 = vmatpush.bf16.msra.mxu0 %v2654
    %3419 = vmatpush.bf16.msra.mxu0 %v2650
    %3420 = vmatpush.bf16.msra.mxu0 %v2646
    %3421 = vmatpush.bf16.msra.mxu0 %v2642
    %3422 = vmatpush.bf16.msra.mxu0 %v2638
    %3423 = vmatmul.bf16.gmra.mxu0 %v161
    %v3424 = vpop.f32.mrf.mxu0
    %v3425 = vadd.f32 %v3412, %v3424
    %v3426 = vpop.f32.mrf.mxu0
    %3427 = vdwg.mxu0
    %3428 = vmatpush.bf16.msra.mxu0 %v2698
    %3429 = vmatpush.bf16.msra.mxu0 %v2694
    %3430 = vmatpush.bf16.msra.mxu0 %v2690
    %3431 = vmatpush.bf16.msra.mxu0 %v2686
    %3432 = vmatpush.bf16.msra.mxu0 %v2682
    %3433 = vmatpush.bf16.msra.mxu0 %v2678
    %3434 = vmatpush.bf16.msra.mxu0 %v2674
    %3435 = vmatpush.bf16.msra.mxu0 %v2670
    %3436 = vmatmul.bf16.gmra.mxu0 %v162
    %v3437 = vpop.f32.mrf.mxu0
    %v3438 = vadd.f32 %v3425, %v3437
    %v3439 = vpop.f32.mrf.mxu0
    %3440 = vdwg.mxu0
    %3441 = vmatpush.bf16.msra.mxu0 %v2730
    %3442 = vmatpush.bf16.msra.mxu0 %v2726
    %3443 = vmatpush.bf16.msra.mxu0 %v2722
    %3444 = vmatpush.bf16.msra.mxu0 %v2718
    %3445 = vmatpush.bf16.msra.mxu0 %v2714
    %3446 = vmatpush.bf16.msra.mxu0 %v2710
    %3447 = vmatpush.bf16.msra.mxu0 %v2706
    %3448 = vmatpush.bf16.msra.mxu0 %v2702
    %3449 = vmatmul.bf16.gmra.mxu0 %v163
    %v3450 = vpop.f32.mrf.mxu0
    %v3451 = vadd.f32 %v3438, %v3450
    %v3452 = vpop.f32.mrf.mxu0
    %3453 = vdwg.mxu0
    %3454 = vmatpush.bf16.msra.mxu0 %v2251
    %3455 = vmatpush.bf16.msra.mxu0 %v2247
    %3456 = vmatpush.bf16.msra.mxu0 %v2243
    %3457 = vmatpush.bf16.msra.mxu0 %v2239
    %3458 = vmatpush.bf16.msra.mxu0 %v2235
    %3459 = vmatpush.bf16.msra.mxu0 %v2231
    %3460 = vmatpush.bf16.msra.mxu0 %v2227
    %3461 = vmatpush.bf16.msra.mxu0 %v2223
    %3462 = vmatmul.bf16.gmra.mxu0 %v148
    %v3463 = vpop.f32.mrf.mxu0
    %v3464 = vadd.f32 %v679, %v3463
    %v3465 = vpop.f32.mrf.mxu0
    %3466 = vdwg.mxu0
    %3467 = vmatpush.bf16.msra.mxu0 %v2283
    %3468 = vmatpush.bf16.msra.mxu0 %v2279
    %3469 = vmatpush.bf16.msra.mxu0 %v2275
    %3470 = vmatpush.bf16.msra.mxu0 %v2271
    %3471 = vmatpush.bf16.msra.mxu0 %v2267
    %3472 = vmatpush.bf16.msra.mxu0 %v2263
    %3473 = vmatpush.bf16.msra.mxu0 %v2259
    %3474 = vmatpush.bf16.msra.mxu0 %v2255
    %3475 = vmatmul.bf16.gmra.mxu0 %v149
    %v3476 = vpop.f32.mrf.mxu0
    %v3477 = vadd.f32 %v3464, %v3476
    %v3478 = vpop.f32.mrf.mxu0
    %3479 = vdwg.mxu0
    %3480 = vmatpush.bf16.msra.mxu0 %v2315
    %3481 = vmatpush.bf16.msra.mxu0 %v2311
    %3482 = vmatpush.bf16.msra.mxu0 %v2307
    %3483 = vmatpush.bf16.msra.mxu0 %v2303
    %3484 = vmatpush.bf16.msra.mxu0 %v2299
    %3485 = vmatpush.bf16.msra.mxu0 %v2295
    %3486 = vmatpush.bf16.msra.mxu0 %v2291
    %3487 = vmatpush.bf16.msra.mxu0 %v2287
    %3488 = vmatmul.bf16.gmra.mxu0 %v150
    %v3489 = vpop.f32.mrf.mxu0
    %v3490 = vadd.f32 %v3477, %v3489
    %v3491 = vpop.f32.mrf.mxu0
    %3492 = vdwg.mxu0
    %3493 = vmatpush.bf16.msra.mxu0 %v2347
    %3494 = vmatpush.bf16.msra.mxu0 %v2343
    %3495 = vmatpush.bf16.msra.mxu0 %v2339
    %3496 = vmatpush.bf16.msra.mxu0 %v2335
    %3497 = vmatpush.bf16.msra.mxu0 %v2331
    %3498 = vmatpush.bf16.msra.mxu0 %v2327
    %3499 = vmatpush.bf16.msra.mxu0 %v2323
    %3500 = vmatpush.bf16.msra.mxu0 %v2319
    %3501 = vmatmul.bf16.gmra.mxu0 %v151
    %v3502 = vpop.f32.mrf.mxu0
    %v3503 = vadd.f32 %v3490, %v3502
    %v3504 = vpop.f32.mrf.mxu0
    %3505 = vdwg.mxu0
    %3506 = vmatpush.bf16.msra.mxu0 %v2379
    %3507 = vmatpush.bf16.msra.mxu0 %v2375
    %3508 = vmatpush.bf16.msra.mxu0 %v2371
    %3509 = vmatpush.bf16.msra.mxu0 %v2367
    %3510 = vmatpush.bf16.msra.mxu0 %v2363
    %3511 = vmatpush.bf16.msra.mxu0 %v2359
    %3512 = vmatpush.bf16.msra.mxu0 %v2355
    %3513 = vmatpush.bf16.msra.mxu0 %v2351
    %3514 = vmatmul.bf16.gmra.mxu0 %v152
    %v3515 = vpop.f32.mrf.mxu0
    %v3516 = vadd.f32 %v3503, %v3515
    %v3517 = vpop.f32.mrf.mxu0
    %3518 = vdwg.mxu0
    %3519 = vmatpush.bf16.msra.mxu0 %v2411
    %3520 = vmatpush.bf16.msra.mxu0 %v2407
    %3521 = vmatpush.bf16.msra.mxu0 %v2403
    %3522 = vmatpush.bf16.msra.mxu0 %v2399
    %3523 = vmatpush.bf16.msra.mxu0 %v2395
    %3524 = vmatpush.bf16.msra.mxu0 %v2391
    %3525 = vmatpush.bf16.msra.mxu0 %v2387
    %3526 = vmatpush.bf16.msra.mxu0 %v2383
    %3527 = vmatmul.bf16.gmra.mxu0 %v153
    %v3528 = vpop.f32.mrf.mxu0
    %v3529 = vadd.f32 %v3516, %v3528
    %v3530 = vpop.f32.mrf.mxu0
    %3531 = vdwg.mxu0
    %3532 = vmatpush.bf16.msra.mxu0 %v2443
    %3533 = vmatpush.bf16.msra.mxu0 %v2439
    %3534 = vmatpush.bf16.msra.mxu0 %v2435
    %3535 = vmatpush.bf16.msra.mxu0 %v2431
    %3536 = vmatpush.bf16.msra.mxu0 %v2427
    %3537 = vmatpush.bf16.msra.mxu0 %v2423
    %3538 = vmatpush.bf16.msra.mxu0 %v2419
    %3539 = vmatpush.bf16.msra.mxu0 %v2415
    %3540 = vmatmul.bf16.gmra.mxu0 %v154
    %v3541 = vpop.f32.mrf.mxu0
    %v3542 = vadd.f32 %v3529, %v3541
    %v3543 = vpop.f32.mrf.mxu0
    %3544 = vdwg.mxu0
    %3545 = vmatpush.bf16.msra.mxu0 %v2475
    %3546 = vmatpush.bf16.msra.mxu0 %v2471
    %3547 = vmatpush.bf16.msra.mxu0 %v2467
    %3548 = vmatpush.bf16.msra.mxu0 %v2463
    %3549 = vmatpush.bf16.msra.mxu0 %v2459
    %3550 = vmatpush.bf16.msra.mxu0 %v2455
    %3551 = vmatpush.bf16.msra.mxu0 %v2451
    %3552 = vmatpush.bf16.msra.mxu0 %v2447
    %3553 = vmatmul.bf16.gmra.mxu0 %v155
    %v3554 = vpop.f32.mrf.mxu0
    %v3555 = vadd.f32 %v3542, %v3554
    %v3556 = vpop.f32.mrf.mxu0
    %3557 = vdwg.mxu0
    %3558 = vmatpush.bf16.msra.mxu0 %v2507
    %3559 = vmatpush.bf16.msra.mxu0 %v2503
    %3560 = vmatpush.bf16.msra.mxu0 %v2499
    %3561 = vmatpush.bf16.msra.mxu0 %v2495
    %3562 = vmatpush.bf16.msra.mxu0 %v2491
    %3563 = vmatpush.bf16.msra.mxu0 %v2487
    %3564 = vmatpush.bf16.msra.mxu0 %v2483
    %3565 = vmatpush.bf16.msra.mxu0 %v2479
    %3566 = vmatmul.bf16.gmra.mxu0 %v156
    %v3567 = vpop.f32.mrf.mxu0
    %v3568 = vadd.f32 %v3555, %v3567
    %v3569 = vpop.f32.mrf.mxu0
    %3570 = vdwg.mxu0
    %3571 = vmatpush.bf16.msra.mxu0 %v2539
    %3572 = vmatpush.bf16.msra.mxu0 %v2535
    %3573 = vmatpush.bf16.msra.mxu0 %v2531
    %3574 = vmatpush.bf16.msra.mxu0 %v2527
    %3575 = vmatpush.bf16.msra.mxu0 %v2523
    %3576 = vmatpush.bf16.msra.mxu0 %v2519
    %3577 = vmatpush.bf16.msra.mxu0 %v2515
    %3578 = vmatpush.bf16.msra.mxu0 %v2511
    %3579 = vmatmul.bf16.gmra.mxu0 %v157
    %v3580 = vpop.f32.mrf.mxu0
    %v3581 = vadd.f32 %v3568, %v3580
    %v3582 = vpop.f32.mrf.mxu0
    %3583 = vdwg.mxu0
    %3584 = vmatpush.bf16.msra.mxu0 %v2571
    %3585 = vmatpush.bf16.msra.mxu0 %v2567
    %3586 = vmatpush.bf16.msra.mxu0 %v2563
    %3587 = vmatpush.bf16.msra.mxu0 %v2559
    %3588 = vmatpush.bf16.msra.mxu0 %v2555
    %3589 = vmatpush.bf16.msra.mxu0 %v2551
    %3590 = vmatpush.bf16.msra.mxu0 %v2547
    %3591 = vmatpush.bf16.msra.mxu0 %v2543
    %3592 = vmatmul.bf16.gmra.mxu0 %v158
    %v3593 = vpop.f32.mrf.mxu0
    %v3594 = vadd.f32 %v3581, %v3593
    %v3595 = vpop.f32.mrf.mxu0
    %3596 = vdwg.mxu0
    %3597 = vmatpush.bf16.msra.mxu0 %v2603
    %3598 = vmatpush.bf16.msra.mxu0 %v2599
    %3599 = vmatpush.bf16.msra.mxu0 %v2595
    %3600 = vmatpush.bf16.msra.mxu0 %v2591
    %3601 = vmatpush.bf16.msra.mxu0 %v2587
    %3602 = vmatpush.bf16.msra.mxu0 %v2583
    %3603 = vmatpush.bf16.msra.mxu0 %v2579
    %3604 = vmatpush.bf16.msra.mxu0 %v2575
    %3605 = vmatmul.bf16.gmra.mxu0 %v159
    %v3606 = vpop.f32.mrf.mxu0
    %v3607 = vadd.f32 %v3594, %v3606
    %v3608 = vpop.f32.mrf.mxu0
    %3609 = vdwg.mxu0
    %3610 = vmatpush.bf16.msra.mxu0 %v2635
    %3611 = vmatpush.bf16.msra.mxu0 %v2631
    %3612 = vmatpush.bf16.msra.mxu0 %v2627
    %3613 = vmatpush.bf16.msra.mxu0 %v2623
    %3614 = vmatpush.bf16.msra.mxu0 %v2619
    %3615 = vmatpush.bf16.msra.mxu0 %v2615
    %3616 = vmatpush.bf16.msra.mxu0 %v2611
    %3617 = vmatpush.bf16.msra.mxu0 %v2607
    %3618 = vmatmul.bf16.gmra.mxu0 %v160
    %v3619 = vpop.f32.mrf.mxu0
    %v3620 = vadd.f32 %v3607, %v3619
    %v3621 = vpop.f32.mrf.mxu0
    %3622 = vdwg.mxu0
    %3623 = vmatpush.bf16.msra.mxu0 %v2667
    %3624 = vmatpush.bf16.msra.mxu0 %v2663
    %3625 = vmatpush.bf16.msra.mxu0 %v2659
    %3626 = vmatpush.bf16.msra.mxu0 %v2655
    %3627 = vmatpush.bf16.msra.mxu0 %v2651
    %3628 = vmatpush.bf16.msra.mxu0 %v2647
    %3629 = vmatpush.bf16.msra.mxu0 %v2643
    %3630 = vmatpush.bf16.msra.mxu0 %v2639
    %3631 = vmatmul.bf16.gmra.mxu0 %v161
    %v3632 = vpop.f32.mrf.mxu0
    %v3633 = vadd.f32 %v3620, %v3632
    %v3634 = vpop.f32.mrf.mxu0
    %3635 = vdwg.mxu0
    %3636 = vmatpush.bf16.msra.mxu0 %v2699
    %3637 = vmatpush.bf16.msra.mxu0 %v2695
    %3638 = vmatpush.bf16.msra.mxu0 %v2691
    %3639 = vmatpush.bf16.msra.mxu0 %v2687
    %3640 = vmatpush.bf16.msra.mxu0 %v2683
    %3641 = vmatpush.bf16.msra.mxu0 %v2679
    %3642 = vmatpush.bf16.msra.mxu0 %v2675
    %3643 = vmatpush.bf16.msra.mxu0 %v2671
    %3644 = vmatmul.bf16.gmra.mxu0 %v162
    %v3645 = vpop.f32.mrf.mxu0
    %v3646 = vadd.f32 %v3633, %v3645
    %v3647 = vpop.f32.mrf.mxu0
    %3648 = vdwg.mxu0
    %3649 = vmatpush.bf16.msra.mxu0 %v2731
    %3650 = vmatpush.bf16.msra.mxu0 %v2727
    %3651 = vmatpush.bf16.msra.mxu0 %v2723
    %3652 = vmatpush.bf16.msra.mxu0 %v2719
    %3653 = vmatpush.bf16.msra.mxu0 %v2715
    %3654 = vmatpush.bf16.msra.mxu0 %v2711
    %3655 = vmatpush.bf16.msra.mxu0 %v2707
    %3656 = vmatpush.bf16.msra.mxu0 %v2703
    %3657 = vmatmul.bf16.gmra.mxu0 %v163
    %v3658 = vpop.f32.mrf.mxu0
    %v3659 = vadd.f32 %v3646, %v3658
    %v3660 = vpop.f32.mrf.mxu0
    %3661 = vdwg.mxu0
    %3662 = vmatpush.bf16.msra.mxu0 %v2252
    %3663 = vmatpush.bf16.msra.mxu0 %v2248
    %3664 = vmatpush.bf16.msra.mxu0 %v2244
    %3665 = vmatpush.bf16.msra.mxu0 %v2240
    %3666 = vmatpush.bf16.msra.mxu0 %v2236
    %3667 = vmatpush.bf16.msra.mxu0 %v2232
    %3668 = vmatpush.bf16.msra.mxu0 %v2228
    %3669 = vmatpush.bf16.msra.mxu0 %v2224
    %3670 = vmatmul.bf16.gmra.mxu0 %v148
    %v3671 = vpop.f32.mrf.mxu0
    %v3672 = vadd.f32 %v680, %v3671
    %v3673 = vpop.f32.mrf.mxu0
    %3674 = vdwg.mxu0
    %3675 = vmatpush.bf16.msra.mxu0 %v2284
    %3676 = vmatpush.bf16.msra.mxu0 %v2280
    %3677 = vmatpush.bf16.msra.mxu0 %v2276
    %3678 = vmatpush.bf16.msra.mxu0 %v2272
    %3679 = vmatpush.bf16.msra.mxu0 %v2268
    %3680 = vmatpush.bf16.msra.mxu0 %v2264
    %3681 = vmatpush.bf16.msra.mxu0 %v2260
    %3682 = vmatpush.bf16.msra.mxu0 %v2256
    %3683 = vmatmul.bf16.gmra.mxu0 %v149
    %v3684 = vpop.f32.mrf.mxu0
    %v3685 = vadd.f32 %v3672, %v3684
    %v3686 = vpop.f32.mrf.mxu0
    %3687 = vdwg.mxu0
    %3688 = vmatpush.bf16.msra.mxu0 %v2316
    %3689 = vmatpush.bf16.msra.mxu0 %v2312
    %3690 = vmatpush.bf16.msra.mxu0 %v2308
    %3691 = vmatpush.bf16.msra.mxu0 %v2304
    %3692 = vmatpush.bf16.msra.mxu0 %v2300
    %3693 = vmatpush.bf16.msra.mxu0 %v2296
    %3694 = vmatpush.bf16.msra.mxu0 %v2292
    %3695 = vmatpush.bf16.msra.mxu0 %v2288
    %3696 = vmatmul.bf16.gmra.mxu0 %v150
    %v3697 = vpop.f32.mrf.mxu0
    %v3698 = vadd.f32 %v3685, %v3697
    %v3699 = vpop.f32.mrf.mxu0
    %3700 = vdwg.mxu0
    %3701 = vmatpush.bf16.msra.mxu0 %v2348
    %3702 = vmatpush.bf16.msra.mxu0 %v2344
    %3703 = vmatpush.bf16.msra.mxu0 %v2340
    %3704 = vmatpush.bf16.msra.mxu0 %v2336
    %3705 = vmatpush.bf16.msra.mxu0 %v2332
    %3706 = vmatpush.bf16.msra.mxu0 %v2328
    %3707 = vmatpush.bf16.msra.mxu0 %v2324
    %3708 = vmatpush.bf16.msra.mxu0 %v2320
    %3709 = vmatmul.bf16.gmra.mxu0 %v151
    %v3710 = vpop.f32.mrf.mxu0
    %v3711 = vadd.f32 %v3698, %v3710
    %v3712 = vpop.f32.mrf.mxu0
    %3713 = vdwg.mxu0
    %3714 = vmatpush.bf16.msra.mxu0 %v2380
    %3715 = vmatpush.bf16.msra.mxu0 %v2376
    %3716 = vmatpush.bf16.msra.mxu0 %v2372
    %3717 = vmatpush.bf16.msra.mxu0 %v2368
    %3718 = vmatpush.bf16.msra.mxu0 %v2364
    %3719 = vmatpush.bf16.msra.mxu0 %v2360
    %3720 = vmatpush.bf16.msra.mxu0 %v2356
    %3721 = vmatpush.bf16.msra.mxu0 %v2352
    %3722 = vmatmul.bf16.gmra.mxu0 %v152
    %v3723 = vpop.f32.mrf.mxu0
    %v3724 = vadd.f32 %v3711, %v3723
    %v3725 = vpop.f32.mrf.mxu0
    %3726 = vdwg.mxu0
    %3727 = vmatpush.bf16.msra.mxu0 %v2412
    %3728 = vmatpush.bf16.msra.mxu0 %v2408
    %3729 = vmatpush.bf16.msra.mxu0 %v2404
    %3730 = vmatpush.bf16.msra.mxu0 %v2400
    %3731 = vmatpush.bf16.msra.mxu0 %v2396
    %3732 = vmatpush.bf16.msra.mxu0 %v2392
    %3733 = vmatpush.bf16.msra.mxu0 %v2388
    %3734 = vmatpush.bf16.msra.mxu0 %v2384
    %3735 = vmatmul.bf16.gmra.mxu0 %v153
    %v3736 = vpop.f32.mrf.mxu0
    %v3737 = vadd.f32 %v3724, %v3736
    %v3738 = vpop.f32.mrf.mxu0
    %3739 = vdwg.mxu0
    %3740 = vmatpush.bf16.msra.mxu0 %v2444
    %3741 = vmatpush.bf16.msra.mxu0 %v2440
    %3742 = vmatpush.bf16.msra.mxu0 %v2436
    %3743 = vmatpush.bf16.msra.mxu0 %v2432
    %3744 = vmatpush.bf16.msra.mxu0 %v2428
    %3745 = vmatpush.bf16.msra.mxu0 %v2424
    %3746 = vmatpush.bf16.msra.mxu0 %v2420
    %3747 = vmatpush.bf16.msra.mxu0 %v2416
    %3748 = vmatmul.bf16.gmra.mxu0 %v154
    %v3749 = vpop.f32.mrf.mxu0
    %v3750 = vadd.f32 %v3737, %v3749
    %v3751 = vpop.f32.mrf.mxu0
    %3752 = vdwg.mxu0
    %3753 = vmatpush.bf16.msra.mxu0 %v2476
    %3754 = vmatpush.bf16.msra.mxu0 %v2472
    %3755 = vmatpush.bf16.msra.mxu0 %v2468
    %3756 = vmatpush.bf16.msra.mxu0 %v2464
    %3757 = vmatpush.bf16.msra.mxu0 %v2460
    %3758 = vmatpush.bf16.msra.mxu0 %v2456
    %3759 = vmatpush.bf16.msra.mxu0 %v2452
    %3760 = vmatpush.bf16.msra.mxu0 %v2448
    %3761 = vmatmul.bf16.gmra.mxu0 %v155
    %v3762 = vpop.f32.mrf.mxu0
    %v3763 = vadd.f32 %v3750, %v3762
    %v3764 = vpop.f32.mrf.mxu0
    %3765 = vdwg.mxu0
    %3766 = vmatpush.bf16.msra.mxu0 %v2508
    %3767 = vmatpush.bf16.msra.mxu0 %v2504
    %3768 = vmatpush.bf16.msra.mxu0 %v2500
    %3769 = vmatpush.bf16.msra.mxu0 %v2496
    %3770 = vmatpush.bf16.msra.mxu0 %v2492
    %3771 = vmatpush.bf16.msra.mxu0 %v2488
    %3772 = vmatpush.bf16.msra.mxu0 %v2484
    %3773 = vmatpush.bf16.msra.mxu0 %v2480
    %3774 = vmatmul.bf16.gmra.mxu0 %v156
    %v3775 = vpop.f32.mrf.mxu0
    %v3776 = vadd.f32 %v3763, %v3775
    %v3777 = vpop.f32.mrf.mxu0
    %3778 = vdwg.mxu0
    %3779 = vmatpush.bf16.msra.mxu0 %v2540
    %3780 = vmatpush.bf16.msra.mxu0 %v2536
    %3781 = vmatpush.bf16.msra.mxu0 %v2532
    %3782 = vmatpush.bf16.msra.mxu0 %v2528
    %3783 = vmatpush.bf16.msra.mxu0 %v2524
    %3784 = vmatpush.bf16.msra.mxu0 %v2520
    %3785 = vmatpush.bf16.msra.mxu0 %v2516
    %3786 = vmatpush.bf16.msra.mxu0 %v2512
    %3787 = vmatmul.bf16.gmra.mxu0 %v157
    %v3788 = vpop.f32.mrf.mxu0
    %v3789 = vadd.f32 %v3776, %v3788
    %v3790 = vpop.f32.mrf.mxu0
    %3791 = vdwg.mxu0
    %3792 = vmatpush.bf16.msra.mxu0 %v2572
    %3793 = vmatpush.bf16.msra.mxu0 %v2568
    %3794 = vmatpush.bf16.msra.mxu0 %v2564
    %3795 = vmatpush.bf16.msra.mxu0 %v2560
    %3796 = vmatpush.bf16.msra.mxu0 %v2556
    %3797 = vmatpush.bf16.msra.mxu0 %v2552
    %3798 = vmatpush.bf16.msra.mxu0 %v2548
    %3799 = vmatpush.bf16.msra.mxu0 %v2544
    %3800 = vmatmul.bf16.gmra.mxu0 %v158
    %v3801 = vpop.f32.mrf.mxu0
    %v3802 = vadd.f32 %v3789, %v3801
    %v3803 = vpop.f32.mrf.mxu0
    %3804 = vdwg.mxu0
    %3805 = vmatpush.bf16.msra.mxu0 %v2604
    %3806 = vmatpush.bf16.msra.mxu0 %v2600
    %3807 = vmatpush.bf16.msra.mxu0 %v2596
    %3808 = vmatpush.bf16.msra.mxu0 %v2592
    %3809 = vmatpush.bf16.msra.mxu0 %v2588
    %3810 = vmatpush.bf16.msra.mxu0 %v2584
    %3811 = vmatpush.bf16.msra.mxu0 %v2580
    %3812 = vmatpush.bf16.msra.mxu0 %v2576
    %3813 = vmatmul.bf16.gmra.mxu0 %v159
    %v3814 = vpop.f32.mrf.mxu0
    %v3815 = vadd.f32 %v3802, %v3814
    %v3816 = vpop.f32.mrf.mxu0
    %3817 = vdwg.mxu0
    %3818 = vmatpush.bf16.msra.mxu0 %v2636
    %3819 = vmatpush.bf16.msra.mxu0 %v2632
    %3820 = vmatpush.bf16.msra.mxu0 %v2628
    %3821 = vmatpush.bf16.msra.mxu0 %v2624
    %3822 = vmatpush.bf16.msra.mxu0 %v2620
    %3823 = vmatpush.bf16.msra.mxu0 %v2616
    %3824 = vmatpush.bf16.msra.mxu0 %v2612
    %3825 = vmatpush.bf16.msra.mxu0 %v2608
    %3826 = vmatmul.bf16.gmra.mxu0 %v160
    %v3827 = vpop.f32.mrf.mxu0
    %v3828 = vadd.f32 %v3815, %v3827
    %v3829 = vpop.f32.mrf.mxu0
    %3830 = vdwg.mxu0
    %3831 = vmatpush.bf16.msra.mxu0 %v2668
    %3832 = vmatpush.bf16.msra.mxu0 %v2664
    %3833 = vmatpush.bf16.msra.mxu0 %v2660
    %3834 = vmatpush.bf16.msra.mxu0 %v2656
    %3835 = vmatpush.bf16.msra.mxu0 %v2652
    %3836 = vmatpush.bf16.msra.mxu0 %v2648
    %3837 = vmatpush.bf16.msra.mxu0 %v2644
    %3838 = vmatpush.bf16.msra.mxu0 %v2640
    %3839 = vmatmul.bf16.gmra.mxu0 %v161
    %v3840 = vpop.f32.mrf.mxu0
    %v3841 = vadd.f32 %v3828, %v3840
    %v3842 = vpop.f32.mrf.mxu0
    %3843 = vdwg.mxu0
    %3844 = vmatpush.bf16.msra.mxu0 %v2700
    %3845 = vmatpush.bf16.msra.mxu0 %v2696
    %3846 = vmatpush.bf16.msra.mxu0 %v2692
    %3847 = vmatpush.bf16.msra.mxu0 %v2688
    %3848 = vmatpush.bf16.msra.mxu0 %v2684
    %3849 = vmatpush.bf16.msra.mxu0 %v2680
    %3850 = vmatpush.bf16.msra.mxu0 %v2676
    %3851 = vmatpush.bf16.msra.mxu0 %v2672
    %3852 = vmatmul.bf16.gmra.mxu0 %v162
    %v3853 = vpop.f32.mrf.mxu0
    %v3854 = vadd.f32 %v3841, %v3853
    %v3855 = vpop.f32.mrf.mxu0
    %3856 = vdwg.mxu0
    %3857 = vmatpush.bf16.msra.mxu0 %v2732
    %3858 = vmatpush.bf16.msra.mxu0 %v2728
    %3859 = vmatpush.bf16.msra.mxu0 %v2724
    %3860 = vmatpush.bf16.msra.mxu0 %v2720
    %3861 = vmatpush.bf16.msra.mxu0 %v2716
    %3862 = vmatpush.bf16.msra.mxu0 %v2712
    %3863 = vmatpush.bf16.msra.mxu0 %v2708
    %3864 = vmatpush.bf16.msra.mxu0 %v2704
    %3865 = vmatmul.bf16.gmra.mxu0 %v163
    %v3866 = vpop.f32.mrf.mxu0
    %v3867 = vadd.f32 %v3854, %v3866
    %v3868 = vpop.f32.mrf.mxu0
    %3869 = vdwg.mxu0
    %3870 = vmatpush.bf16.msra.mxu0 %v2253
    %3871 = vmatpush.bf16.msra.mxu0 %v2249
    %3872 = vmatpush.bf16.msra.mxu0 %v2245
    %3873 = vmatpush.bf16.msra.mxu0 %v2241
    %3874 = vmatpush.bf16.msra.mxu0 %v2237
    %3875 = vmatpush.bf16.msra.mxu0 %v2233
    %3876 = vmatpush.bf16.msra.mxu0 %v2229
    %3877 = vmatpush.bf16.msra.mxu0 %v2225
    %3878 = vmatmul.bf16.gmra.mxu0 %v148
    %v3879 = vpop.f32.mrf.mxu0
    %v3880 = vadd.f32 %v681, %v3879
    %v3881 = vpop.f32.mrf.mxu0
    %3882 = vdwg.mxu0
    %3883 = vmatpush.bf16.msra.mxu0 %v2285
    %3884 = vmatpush.bf16.msra.mxu0 %v2281
    %3885 = vmatpush.bf16.msra.mxu0 %v2277
    %3886 = vmatpush.bf16.msra.mxu0 %v2273
    %3887 = vmatpush.bf16.msra.mxu0 %v2269
    %3888 = vmatpush.bf16.msra.mxu0 %v2265
    %3889 = vmatpush.bf16.msra.mxu0 %v2261
    %3890 = vmatpush.bf16.msra.mxu0 %v2257
    %3891 = vmatmul.bf16.gmra.mxu0 %v149
    %v3892 = vpop.f32.mrf.mxu0
    %v3893 = vadd.f32 %v3880, %v3892
    %v3894 = vpop.f32.mrf.mxu0
    %3895 = vdwg.mxu0
    %3896 = vmatpush.bf16.msra.mxu0 %v2317
    %3897 = vmatpush.bf16.msra.mxu0 %v2313
    %3898 = vmatpush.bf16.msra.mxu0 %v2309
    %3899 = vmatpush.bf16.msra.mxu0 %v2305
    %3900 = vmatpush.bf16.msra.mxu0 %v2301
    %3901 = vmatpush.bf16.msra.mxu0 %v2297
    %3902 = vmatpush.bf16.msra.mxu0 %v2293
    %3903 = vmatpush.bf16.msra.mxu0 %v2289
    %3904 = vmatmul.bf16.gmra.mxu0 %v150
    %v3905 = vpop.f32.mrf.mxu0
    %v3906 = vadd.f32 %v3893, %v3905
    %v3907 = vpop.f32.mrf.mxu0
    %3908 = vdwg.mxu0
    %3909 = vmatpush.bf16.msra.mxu0 %v2349
    %3910 = vmatpush.bf16.msra.mxu0 %v2345
    %3911 = vmatpush.bf16.msra.mxu0 %v2341
    %3912 = vmatpush.bf16.msra.mxu0 %v2337
    %3913 = vmatpush.bf16.msra.mxu0 %v2333
    %3914 = vmatpush.bf16.msra.mxu0 %v2329
    %3915 = vmatpush.bf16.msra.mxu0 %v2325
    %3916 = vmatpush.bf16.msra.mxu0 %v2321
    %3917 = vmatmul.bf16.gmra.mxu0 %v151
    %v3918 = vpop.f32.mrf.mxu0
    %v3919 = vadd.f32 %v3906, %v3918
    %v3920 = vpop.f32.mrf.mxu0
    %3921 = vdwg.mxu0
    %3922 = vmatpush.bf16.msra.mxu0 %v2381
    %3923 = vmatpush.bf16.msra.mxu0 %v2377
    %3924 = vmatpush.bf16.msra.mxu0 %v2373
    %3925 = vmatpush.bf16.msra.mxu0 %v2369
    %3926 = vmatpush.bf16.msra.mxu0 %v2365
    %3927 = vmatpush.bf16.msra.mxu0 %v2361
    %3928 = vmatpush.bf16.msra.mxu0 %v2357
    %3929 = vmatpush.bf16.msra.mxu0 %v2353
    %3930 = vmatmul.bf16.gmra.mxu0 %v152
    %v3931 = vpop.f32.mrf.mxu0
    %v3932 = vadd.f32 %v3919, %v3931
    %v3933 = vpop.f32.mrf.mxu0
    %3934 = vdwg.mxu0
    %3935 = vmatpush.bf16.msra.mxu0 %v2413
    %3936 = vmatpush.bf16.msra.mxu0 %v2409
    %3937 = vmatpush.bf16.msra.mxu0 %v2405
    %3938 = vmatpush.bf16.msra.mxu0 %v2401
    %3939 = vmatpush.bf16.msra.mxu0 %v2397
    %3940 = vmatpush.bf16.msra.mxu0 %v2393
    %3941 = vmatpush.bf16.msra.mxu0 %v2389
    %3942 = vmatpush.bf16.msra.mxu0 %v2385
    %3943 = vmatmul.bf16.gmra.mxu0 %v153
    %v3944 = vpop.f32.mrf.mxu0
    %v3945 = vadd.f32 %v3932, %v3944
    %v3946 = vpop.f32.mrf.mxu0
    %3947 = vdwg.mxu0
    %3948 = vmatpush.bf16.msra.mxu0 %v2445
    %3949 = vmatpush.bf16.msra.mxu0 %v2441
    %3950 = vmatpush.bf16.msra.mxu0 %v2437
    %3951 = vmatpush.bf16.msra.mxu0 %v2433
    %3952 = vmatpush.bf16.msra.mxu0 %v2429
    %3953 = vmatpush.bf16.msra.mxu0 %v2425
    %3954 = vmatpush.bf16.msra.mxu0 %v2421
    %3955 = vmatpush.bf16.msra.mxu0 %v2417
    %3956 = vmatmul.bf16.gmra.mxu0 %v154
    %v3957 = vpop.f32.mrf.mxu0
    %v3958 = vadd.f32 %v3945, %v3957
    %v3959 = vpop.f32.mrf.mxu0
    %3960 = vdwg.mxu0
    %3961 = vmatpush.bf16.msra.mxu0 %v2477
    %3962 = vmatpush.bf16.msra.mxu0 %v2473
    %3963 = vmatpush.bf16.msra.mxu0 %v2469
    %3964 = vmatpush.bf16.msra.mxu0 %v2465
    %3965 = vmatpush.bf16.msra.mxu0 %v2461
    %3966 = vmatpush.bf16.msra.mxu0 %v2457
    %3967 = vmatpush.bf16.msra.mxu0 %v2453
    %3968 = vmatpush.bf16.msra.mxu0 %v2449
    %3969 = vmatmul.bf16.gmra.mxu0 %v155
    %v3970 = vpop.f32.mrf.mxu0
    %v3971 = vadd.f32 %v3958, %v3970
    %v3972 = vpop.f32.mrf.mxu0
    %3973 = vdwg.mxu0
    %3974 = vmatpush.bf16.msra.mxu0 %v2509
    %3975 = vmatpush.bf16.msra.mxu0 %v2505
    %3976 = vmatpush.bf16.msra.mxu0 %v2501
    %3977 = vmatpush.bf16.msra.mxu0 %v2497
    %3978 = vmatpush.bf16.msra.mxu0 %v2493
    %3979 = vmatpush.bf16.msra.mxu0 %v2489
    %3980 = vmatpush.bf16.msra.mxu0 %v2485
    %3981 = vmatpush.bf16.msra.mxu0 %v2481
    %3982 = vmatmul.bf16.gmra.mxu0 %v156
    %v3983 = vpop.f32.mrf.mxu0
    %v3984 = vadd.f32 %v3971, %v3983
    %v3985 = vpop.f32.mrf.mxu0
    %3986 = vdwg.mxu0
    %3987 = vmatpush.bf16.msra.mxu0 %v2541
    %3988 = vmatpush.bf16.msra.mxu0 %v2537
    %3989 = vmatpush.bf16.msra.mxu0 %v2533
    %3990 = vmatpush.bf16.msra.mxu0 %v2529
    %3991 = vmatpush.bf16.msra.mxu0 %v2525
    %3992 = vmatpush.bf16.msra.mxu0 %v2521
    %3993 = vmatpush.bf16.msra.mxu0 %v2517
    %3994 = vmatpush.bf16.msra.mxu0 %v2513
    %3995 = vmatmul.bf16.gmra.mxu0 %v157
    %v3996 = vpop.f32.mrf.mxu0
    %v3997 = vadd.f32 %v3984, %v3996
    %v3998 = vpop.f32.mrf.mxu0
    %3999 = vdwg.mxu0
    %4000 = vmatpush.bf16.msra.mxu0 %v2573
    %4001 = vmatpush.bf16.msra.mxu0 %v2569
    %4002 = vmatpush.bf16.msra.mxu0 %v2565
    %4003 = vmatpush.bf16.msra.mxu0 %v2561
    %4004 = vmatpush.bf16.msra.mxu0 %v2557
    %4005 = vmatpush.bf16.msra.mxu0 %v2553
    %4006 = vmatpush.bf16.msra.mxu0 %v2549
    %4007 = vmatpush.bf16.msra.mxu0 %v2545
    %4008 = vmatmul.bf16.gmra.mxu0 %v158
    %v4009 = vpop.f32.mrf.mxu0
    %v4010 = vadd.f32 %v3997, %v4009
    %v4011 = vpop.f32.mrf.mxu0
    %4012 = vdwg.mxu0
    %4013 = vmatpush.bf16.msra.mxu0 %v2605
    %4014 = vmatpush.bf16.msra.mxu0 %v2601
    %4015 = vmatpush.bf16.msra.mxu0 %v2597
    %4016 = vmatpush.bf16.msra.mxu0 %v2593
    %4017 = vmatpush.bf16.msra.mxu0 %v2589
    %4018 = vmatpush.bf16.msra.mxu0 %v2585
    %4019 = vmatpush.bf16.msra.mxu0 %v2581
    %4020 = vmatpush.bf16.msra.mxu0 %v2577
    %4021 = vmatmul.bf16.gmra.mxu0 %v159
    %v4022 = vpop.f32.mrf.mxu0
    %v4023 = vadd.f32 %v4010, %v4022
    %v4024 = vpop.f32.mrf.mxu0
    %4025 = vdwg.mxu0
    %4026 = vmatpush.bf16.msra.mxu0 %v2637
    %4027 = vmatpush.bf16.msra.mxu0 %v2633
    %4028 = vmatpush.bf16.msra.mxu0 %v2629
    %4029 = vmatpush.bf16.msra.mxu0 %v2625
    %4030 = vmatpush.bf16.msra.mxu0 %v2621
    %4031 = vmatpush.bf16.msra.mxu0 %v2617
    %4032 = vmatpush.bf16.msra.mxu0 %v2613
    %4033 = vmatpush.bf16.msra.mxu0 %v2609
    %4034 = vmatmul.bf16.gmra.mxu0 %v160
    %v4035 = vpop.f32.mrf.mxu0
    %v4036 = vadd.f32 %v4023, %v4035
    %v4037 = vpop.f32.mrf.mxu0
    %4038 = vdwg.mxu0
    %4039 = vmatpush.bf16.msra.mxu0 %v2669
    %4040 = vmatpush.bf16.msra.mxu0 %v2665
    %4041 = vmatpush.bf16.msra.mxu0 %v2661
    %4042 = vmatpush.bf16.msra.mxu0 %v2657
    %4043 = vmatpush.bf16.msra.mxu0 %v2653
    %4044 = vmatpush.bf16.msra.mxu0 %v2649
    %4045 = vmatpush.bf16.msra.mxu0 %v2645
    %4046 = vmatpush.bf16.msra.mxu0 %v2641
    %4047 = vmatmul.bf16.gmra.mxu0 %v161
    %v4048 = vpop.f32.mrf.mxu0
    %v4049 = vadd.f32 %v4036, %v4048
    %v4050 = vpop.f32.mrf.mxu0
    %4051 = vdwg.mxu0
    %4052 = vmatpush.bf16.msra.mxu0 %v2701
    %4053 = vmatpush.bf16.msra.mxu0 %v2697
    %4054 = vmatpush.bf16.msra.mxu0 %v2693
    %4055 = vmatpush.bf16.msra.mxu0 %v2689
    %4056 = vmatpush.bf16.msra.mxu0 %v2685
    %4057 = vmatpush.bf16.msra.mxu0 %v2681
    %4058 = vmatpush.bf16.msra.mxu0 %v2677
    %4059 = vmatpush.bf16.msra.mxu0 %v2673
    %4060 = vmatmul.bf16.gmra.mxu0 %v162
    %v4061 = vpop.f32.mrf.mxu0
    %v4062 = vadd.f32 %v4049, %v4061
    %v4063 = vpop.f32.mrf.mxu0
    %4064 = vdwg.mxu0
    %4065 = vmatpush.bf16.msra.mxu0 %v2733
    %4066 = vmatpush.bf16.msra.mxu0 %v2729
    %4067 = vmatpush.bf16.msra.mxu0 %v2725
    %4068 = vmatpush.bf16.msra.mxu0 %v2721
    %4069 = vmatpush.bf16.msra.mxu0 %v2717
    %4070 = vmatpush.bf16.msra.mxu0 %v2713
    %4071 = vmatpush.bf16.msra.mxu0 %v2709
    %4072 = vmatpush.bf16.msra.mxu0 %v2705
    %4073 = vmatmul.bf16.gmra.mxu0 %v163
    %v4074 = vpop.f32.mrf.mxu0
    %v4075 = vadd.f32 %v4062, %v4074
    %v4076 = vpop.f32.mrf.mxu0
    %4077 = vdwg.mxu0
    %v4078 = vmax.f32 %v3451, 0.0
    %v4079 = vmax.f32 %v3659, 0.0
    %v4080 = vmax.f32 %v3867, 0.0
    %v4081 = vmax.f32 %v4075, 0.0
    %v4082 = vpack.c.bf16 %v4078, %v4078
    %v4083 = vpack.c.bf16 %v4079, %v4079
    %v4084 = vpack.c.bf16 %v4080, %v4080
    %v4085 = vpack.c.bf16 %v4081, %v4081
    %v4086 = vld [vmem:[#allocation7] sm:$0xf]
    %v4087 = vld [vmem:[#allocation7 + $0x4] sm:$0xf]
    %v4088 = vld [vmem:[#allocation7 + $0x8] sm:$0xf]
    %v4089 = vld [vmem:[#allocation7 + $0xc] sm:$0xf]
    %v4090 = vld [vmem:[#allocation7 + $0x10] sm:$0xf]
    %v4091 = vld [vmem:[#allocation7 + $0x14] sm:$0xf]
    %v4092 = vld [vmem:[#allocation7 + $0x18] sm:$0xf]
    %v4093 = vld [vmem:[#allocation7 + $0x1c] sm:$0xf]
    %v4094 = vld [vmem:[#allocation7 + $0x20] sm:$0xf]
    %v4095 = vld [vmem:[#allocation7 + $0x24] sm:$0xf]
    %v4096 = vld [vmem:[#allocation7 + $0x28] sm:$0xf]
    %v4097 = vld [vmem:[#allocation7 + $0x2c] sm:$0xf]
    %v4098 = vld [vmem:[#allocation7 + $0x30] sm:$0xf]
    %v4099 = vld [vmem:[#allocation7 + $0x34] sm:$0xf]
    %v4100 = vld [vmem:[#allocation7 + $0x38] sm:$0xf]
    %v4101 = vld [vmem:[#allocation7 + $0x3c] sm:$0xf]
    %v4102 = vld [vmem:[#allocation7 + $0x40] sm:$0xf]
    %v4103 = vld [vmem:[#allocation7 + $0x44] sm:$0xf]
    %v4104 = vld [vmem:[#allocation7 + $0x48] sm:$0xf]
    %v4105 = vld [vmem:[#allocation7 + $0x4c] sm:$0xf]
    %v4106 = vld [vmem:[#allocation7 + $0x50] sm:$0xf]
    %v4107 = vld [vmem:[#allocation7 + $0x54] sm:$0xf]
    %v4108 = vld [vmem:[#allocation7 + $0x58] sm:$0xf]
    %v4109 = vld [vmem:[#allocation7 + $0x5c] sm:$0xf]
    %v4110 = vld [vmem:[#allocation7 + $0x60] sm:$0xf]
    %v4111 = vld [vmem:[#allocation7 + $0x64] sm:$0xf]
    %v4112 = vld [vmem:[#allocation7 + $0x68] sm:$0xf]
    %v4113 = vld [vmem:[#allocation7 + $0x6c] sm:$0xf]
    %v4114 = vld [vmem:[#allocation7 + $0x70] sm:$0xf]
    %v4115 = vld [vmem:[#allocation7 + $0x74] sm:$0xf]
    %v4116 = vld [vmem:[#allocation7 + $0x78] sm:$0xf]
    %v4117 = vld [vmem:[#allocation7 + $0x7c] sm:$0xf]
    %v4118 = vld [vmem:[#allocation7 + $0x80] sm:$0xf]
    %v4119 = vld [vmem:[#allocation7 + $0x84] sm:$0xf]
    %v4120 = vld [vmem:[#allocation7 + $0x88] sm:$0xf]
    %v4121 = vld [vmem:[#allocation7 + $0x8c] sm:$0xf]
    %v4122 = vld [vmem:[#allocation7 + $0x90] sm:$0xf]
    %v4123 = vld [vmem:[#allocation7 + $0x94] sm:$0xf]
    %v4124 = vld [vmem:[#allocation7 + $0x98] sm:$0xf]
    %v4125 = vld [vmem:[#allocation7 + $0x9c] sm:$0xf]
    %v4126 = vld [vmem:[#allocation7 + $0xa0] sm:$0xf]
    %v4127 = vld [vmem:[#allocation7 + $0xa4] sm:$0xf]
    %v4128 = vld [vmem:[#allocation7 + $0xa8] sm:$0xf]
    %v4129 = vld [vmem:[#allocation7 + $0xac] sm:$0xf]
    %v4130 = vld [vmem:[#allocation7 + $0xb0] sm:$0xf]
    %v4131 = vld [vmem:[#allocation7 + $0xb4] sm:$0xf]
    %v4132 = vld [vmem:[#allocation7 + $0xb8] sm:$0xf]
    %v4133 = vld [vmem:[#allocation7 + $0xbc] sm:$0xf]
    %v4134 = vld [vmem:[#allocation7 + $0xc0] sm:$0xf]
    %v4135 = vld [vmem:[#allocation7 + $0xc4] sm:$0xf]
    %v4136 = vld [vmem:[#allocation7 + $0xc8] sm:$0xf]
    %v4137 = vld [vmem:[#allocation7 + $0xcc] sm:$0xf]
    %v4138 = vld [vmem:[#allocation7 + $0xd0] sm:$0xf]
    %v4139 = vld [vmem:[#allocation7 + $0xd4] sm:$0xf]
    %v4140 = vld [vmem:[#allocation7 + $0xd8] sm:$0xf]
    %v4141 = vld [vmem:[#allocation7 + $0xdc] sm:$0xf]
    %v4142 = vld [vmem:[#allocation7 + $0xe0] sm:$0xf]
    %v4143 = vld [vmem:[#allocation7 + $0xe4] sm:$0xf]
    %v4144 = vld [vmem:[#allocation7 + $0xe8] sm:$0xf]
    %v4145 = vld [vmem:[#allocation7 + $0xec] sm:$0xf]
    %v4146 = vld [vmem:[#allocation7 + $0xf0] sm:$0xf]
    %v4147 = vld [vmem:[#allocation7 + $0xf4] sm:$0xf]
    %v4148 = vld [vmem:[#allocation7 + $0xf8] sm:$0xf]
    %v4149 = vld [vmem:[#allocation7 + $0xfc] sm:$0xf]
    %v4150 = vld [vmem:[#allocation9] sm:$0x1]
    %v4152 = vperm.slane %v4150, 0
    %v4218 = vunpack.c.l.b16 %v4086
    %v4219 = vunpack.c.l.b16 %v4087
    %v4220 = vunpack.c.l.b16 %v4088
    %v4221 = vunpack.c.l.b16 %v4089
    %v4222 = vunpack.c.l.b16 %v4090
    %v4223 = vunpack.c.l.b16 %v4091
    %v4224 = vunpack.c.l.b16 %v4092
    %v4225 = vunpack.c.l.b16 %v4093
    %v4226 = vunpack.c.l.b16 %v4094
    %v4227 = vunpack.c.l.b16 %v4095
    %v4228 = vunpack.c.l.b16 %v4096
    %v4229 = vunpack.c.l.b16 %v4097
    %v4230 = vunpack.c.l.b16 %v4098
    %v4231 = vunpack.c.l.b16 %v4099
    %v4232 = vunpack.c.l.b16 %v4100
    %v4233 = vunpack.c.l.b16 %v4101
    %v4234 = vunpack.c.l.b16 %v4102
    %v4235 = vunpack.c.l.b16 %v4103
    %v4236 = vunpack.c.l.b16 %v4104
    %v4237 = vunpack.c.l.b16 %v4105
    %v4238 = vunpack.c.l.b16 %v4106
    %v4239 = vunpack.c.l.b16 %v4107
    %v4240 = vunpack.c.l.b16 %v4108
    %v4241 = vunpack.c.l.b16 %v4109
    %v4242 = vunpack.c.l.b16 %v4110
    %v4243 = vunpack.c.l.b16 %v4111
    %v4244 = vunpack.c.l.b16 %v4112
    %v4245 = vunpack.c.l.b16 %v4113
    %v4246 = vunpack.c.l.b16 %v4114
    %v4247 = vunpack.c.l.b16 %v4115
    %v4248 = vunpack.c.l.b16 %v4116
    %v4249 = vunpack.c.l.b16 %v4117
    %v4250 = vunpack.c.l.b16 %v4118
    %v4251 = vunpack.c.l.b16 %v4119
    %v4252 = vunpack.c.l.b16 %v4120
    %v4253 = vunpack.c.l.b16 %v4121
    %v4254 = vunpack.c.l.b16 %v4122
    %v4255 = vunpack.c.l.b16 %v4123
    %v4256 = vunpack.c.l.b16 %v4124
    %v4257 = vunpack.c.l.b16 %v4125
    %v4258 = vunpack.c.l.b16 %v4126
    %v4259 = vunpack.c.l.b16 %v4127
    %v4260 = vunpack.c.l.b16 %v4128
    %v4261 = vunpack.c.l.b16 %v4129
    %v4262 = vunpack.c.l.b16 %v4130
    %v4263 = vunpack.c.l.b16 %v4131
    %v4264 = vunpack.c.l.b16 %v4132
    %v4265 = vunpack.c.l.b16 %v4133
    %v4266 = vunpack.c.l.b16 %v4134
    %v4267 = vunpack.c.l.b16 %v4135
    %v4268 = vunpack.c.l.b16 %v4136
    %v4269 = vunpack.c.l.b16 %v4137
    %v4270 = vunpack.c.l.b16 %v4138
    %v4271 = vunpack.c.l.b16 %v4139
    %v4272 = vunpack.c.l.b16 %v4140
    %v4273 = vunpack.c.l.b16 %v4141
    %v4274 = vunpack.c.l.b16 %v4142
    %v4275 = vunpack.c.l.b16 %v4143
    %v4276 = vunpack.c.l.b16 %v4144
    %v4277 = vunpack.c.l.b16 %v4145
    %v4278 = vunpack.c.l.b16 %v4146
    %v4279 = vunpack.c.l.b16 %v4147
    %v4280 = vunpack.c.l.b16 %v4148
    %v4281 = vunpack.c.l.b16 %v4149
    %v4282 = vpack.c.b16 %v4219, %v4218
    %v4283 = vpack.c.b16 %v4221, %v4220
    %v4284 = vpack.c.b16 %v4223, %v4222
    %v4285 = vpack.c.b16 %v4225, %v4224
    %v4286 = vpack.c.b16 %v4227, %v4226
    %v4287 = vpack.c.b16 %v4229, %v4228
    %v4288 = vpack.c.b16 %v4231, %v4230
    %v4289 = vpack.c.b16 %v4233, %v4232
    %v4290 = vpack.c.b16 %v4235, %v4234
    %v4291 = vpack.c.b16 %v4237, %v4236
    %v4292 = vpack.c.b16 %v4239, %v4238
    %v4293 = vpack.c.b16 %v4241, %v4240
    %v4294 = vpack.c.b16 %v4243, %v4242
    %v4295 = vpack.c.b16 %v4245, %v4244
    %v4296 = vpack.c.b16 %v4247, %v4246
    %v4297 = vpack.c.b16 %v4249, %v4248
    %v4298 = vpack.c.b16 %v4251, %v4250
    %v4299 = vpack.c.b16 %v4253, %v4252
    %v4300 = vpack.c.b16 %v4255, %v4254
    %v4301 = vpack.c.b16 %v4257, %v4256
    %v4302 = vpack.c.b16 %v4259, %v4258
    %v4303 = vpack.c.b16 %v4261, %v4260
    %v4304 = vpack.c.b16 %v4263, %v4262
    %v4305 = vpack.c.b16 %v4265, %v4264
    %v4306 = vpack.c.b16 %v4267, %v4266
    %v4307 = vpack.c.b16 %v4269, %v4268
    %v4308 = vpack.c.b16 %v4271, %v4270
    %v4309 = vpack.c.b16 %v4273, %v4272
    %v4310 = vpack.c.b16 %v4275, %v4274
    %v4311 = vpack.c.b16 %v4277, %v4276
    %v4312 = vpack.c.b16 %v4279, %v4278
    %v4313 = vpack.c.b16 %v4281, %v4280
    %4346 = vmatpush.bf16.msra.mxu0 %v4289
    %4347 = vmatpush.bf16.msra.mxu0 %v4288
    %4348 = vmatpush.bf16.msra.mxu0 %v4287
    %4349 = vmatpush.bf16.msra.mxu0 %v4286
    %4350 = vmatpush.bf16.msra.mxu0 %v4285
    %4351 = vmatpush.bf16.msra.mxu0 %v4284
    %4352 = vmatpush.bf16.msra.mxu0 %v4283
    %4353 = vmatpush.bf16.msra.mxu0 %v4282
    %4354 = vmatmul.bf16.gmra.mxu0 %v4082
    %v4355 = vpop.f32.mrf.mxu0
    %v4356 = vadd.f32 %v4152, %v4355
    %v4357 = vpop.f32.mrf.mxu0
    %4358 = vdwg.mxu0
    %4359 = vmatpush.bf16.msra.mxu0 %v4297
    %4360 = vmatpush.bf16.msra.mxu0 %v4296
    %4361 = vmatpush.bf16.msra.mxu0 %v4295
    %4362 = vmatpush.bf16.msra.mxu0 %v4294
    %4363 = vmatpush.bf16.msra.mxu0 %v4293
    %4364 = vmatpush.bf16.msra.mxu0 %v4292
    %4365 = vmatpush.bf16.msra.mxu0 %v4291
    %4366 = vmatpush.bf16.msra.mxu0 %v4290
    %4367 = vmatmul.bf16.gmra.mxu0 %v4083
    %v4368 = vpop.f32.mrf.mxu0
    %v4369 = vadd.f32 %v4356, %v4368
    %v4370 = vpop.f32.mrf.mxu0
    %4371 = vdwg.mxu0
    %4372 = vmatpush.bf16.msra.mxu0 %v4305
    %4373 = vmatpush.bf16.msra.mxu0 %v4304
    %4374 = vmatpush.bf16.msra.mxu0 %v4303
    %4375 = vmatpush.bf16.msra.mxu0 %v4302
    %4376 = vmatpush.bf16.msra.mxu0 %v4301
    %4377 = vmatpush.bf16.msra.mxu0 %v4300
    %4378 = vmatpush.bf16.msra.mxu0 %v4299
    %4379 = vmatpush.bf16.msra.mxu0 %v4298
    %4380 = vmatmul.bf16.gmra.mxu0 %v4084
    %v4381 = vpop.f32.mrf.mxu0
    %v4382 = vadd.f32 %v4369, %v4381
    %v4383 = vpop.f32.mrf.mxu0
    %4384 = vdwg.mxu0
    %4385 = vmatpush.bf16.msra.mxu0 %v4313
    %4386 = vmatpush.bf16.msra.mxu0 %v4312
    %4387 = vmatpush.bf16.msra.mxu0 %v4311
    %4388 = vmatpush.bf16.msra.mxu0 %v4310
    %4389 = vmatpush.bf16.msra.mxu0 %v4309
    %4390 = vmatpush.bf16.msra.mxu0 %v4308
    %4391 = vmatpush.bf16.msra.mxu0 %v4307
    %4392 = vmatpush.bf16.msra.mxu0 %v4306
    %4393 = vmatmul.bf16.gmra.mxu0 %v4085
    %v4394 = vpop.f32.mrf.mxu0
    %v4395 = vadd.f32 %v4382, %v4394
    %v4396 = vpop.f32.mrf.mxu0
    %4397 = vdwg.mxu0
    %v4398 = vmax.f32 %v4395, 0.0
    %v4399 = vpack.c.bf16 %v4398, %v4398
    %v4400 = vld [vmem:[%s5] sm:$0xf]
    %v4401 = vld [vmem:[%s5 + $0x4] sm:$0xf]
    %v4402 = vld [vmem:[%s5 + $0x8] sm:$0xf]
    %v4403 = vld [vmem:[%s5 + $0xc] sm:$0xf]
    %v4404 = vld [vmem:[%s5 + $0x10] sm:$0xf]
    %v4405 = vld [vmem:[%s5 + $0x14] sm:$0xf]
    %v4406 = vld [vmem:[%s5 + $0x18] sm:$0xf]
    %v4407 = vld [vmem:[%s5 + $0x1c] sm:$0xf]
    %v4408 = vld [vmem:[%s5 + $0x20] sm:$0xf]
    %v4409 = vld [vmem:[%s5 + $0x24] sm:$0xf]
    %v4410 = vld [vmem:[%s5 + $0x28] sm:$0xf]
    %v4411 = vld [vmem:[%s5 + $0x2c] sm:$0xf]
    %v4412 = vld [vmem:[%s5 + $0x30] sm:$0xf]
    %v4413 = vld [vmem:[%s5 + $0x34] sm:$0xf]
    %v4414 = vld [vmem:[%s5 + $0x38] sm:$0xf]
    %v4415 = vld [vmem:[%s5 + $0x3c] sm:$0xf]
    %v4416 = vld [vmem:[#allocation10] sm:$0x1]
    %v4418 = vperm.slane %v4416, 0
    %v4436 = vunpack.c.l.b16 %v4400
    %v4437 = vunpack.c.l.b16 %v4401
    %v4438 = vunpack.c.l.b16 %v4402
    %v4439 = vunpack.c.l.b16 %v4403
    %v4440 = vunpack.c.l.b16 %v4404
    %v4441 = vunpack.c.l.b16 %v4405
    %v4442 = vunpack.c.l.b16 %v4406
    %v4443 = vunpack.c.l.b16 %v4407
    %v4444 = vunpack.c.l.b16 %v4408
    %v4445 = vunpack.c.l.b16 %v4409
    %v4446 = vunpack.c.l.b16 %v4410
    %v4447 = vunpack.c.l.b16 %v4411
    %v4448 = vunpack.c.l.b16 %v4412
    %v4449 = vunpack.c.l.b16 %v4413
    %v4450 = vunpack.c.l.b16 %v4414
    %v4451 = vunpack.c.l.b16 %v4415
    %v4452 = vpack.c.b16 %v4437, %v4436
    %v4453 = vpack.c.b16 %v4439, %v4438
    %v4454 = vpack.c.b16 %v4441, %v4440
    %v4455 = vpack.c.b16 %v4443, %v4442
    %v4456 = vpack.c.b16 %v4445, %v4444
    %v4457 = vpack.c.b16 %v4447, %v4446
    %v4458 = vpack.c.b16 %v4449, %v4448
    %v4459 = vpack.c.b16 %v4451, %v4450
    %4468 = vmatpush.bf16.msra.mxu0 %v4459
    %4469 = vmatpush.bf16.msra.mxu0 %v4458
    %4470 = vmatpush.bf16.msra.mxu0 %v4457
    %4471 = vmatpush.bf16.msra.mxu0 %v4456
    %4472 = vmatpush.bf16.msra.mxu0 %v4455
    %4473 = vmatpush.bf16.msra.mxu0 %v4454
    %4474 = vmatpush.bf16.msra.mxu0 %v4453
    %4475 = vmatpush.bf16.msra.mxu0 %v4452
    %4476 = vmatmul.bf16.gmra.mxu0 %v4399
    %v4477 = vpop.f32.mrf.mxu0
    %v4478 = vadd.f32 %v4418, %v4477
    %v4479 = vpop.f32.mrf.mxu0
    %4480 = vdwg.mxu0
    %v4481 = vmax.f32 %v4478, 0.0
    %v4482 = vpack.c.bf16 %v4481, %v4481
    %v4483 = vld [vmem:[%s7] sm:$0xf]
    %v4484 = vld [vmem:[%s7 + $0x4] sm:$0xf]
    %v4485 = vld [vmem:[%s7 + $0x8] sm:$0xf]
    %v4486 = vld [vmem:[%s7 + $0xc] sm:$0xf]
    %v4487 = vld [vmem:[%s7 + $0x10] sm:$0xf]
    %v4488 = vld [vmem:[%s7 + $0x14] sm:$0xf]
    %v4489 = vld [vmem:[%s7 + $0x18] sm:$0xf]
    %v4490 = vld [vmem:[%s7 + $0x1c] sm:$0xf]
    %v4491 = vld [vmem:[#allocation12] sm:$0x1]
    %v4493 = vperm.slane %v4491, 0
    %v4503 = vunpack.c.l.b16 %v4483
    %v4504 = vunpack.c.l.b16 %v4484
    %v4505 = vunpack.c.l.b16 %v4485
    %v4506 = vunpack.c.l.b16 %v4486
    %v4507 = vunpack.c.l.b16 %v4487
    %v4508 = vunpack.c.l.b16 %v4488
    %v4509 = vunpack.c.l.b16 %v4489
    %v4510 = vunpack.c.l.b16 %v4490
    %v4511 = vpack.c.b16 %v4504, %v4503
    %v4512 = vpack.c.b16 %v4506, %v4505
    %v4513 = vpack.c.b16 %v4508, %v4507
    %v4514 = vpack.c.b16 %v4510, %v4509
    %vm4519 = vcmask 523264
    %v4521 = vsel %vm4519, %v4482, 0
    %4523 = vmatpush.bf16.msra.mxu0 0
    %4524 = vmatpush.bf16.msra.mxu0 0
    %4525 = vmatpush.bf16.msra.mxu0 0
    %4526 = vmatpush.bf16.msra.mxu0 0
    %4527 = vmatpush.bf16.msra.mxu0 %v4514
    %4528 = vmatpush.bf16.msra.mxu0 %v4513
    %4529 = vmatpush.bf16.msra.mxu0 %v4512
    %4530 = vmatpush.bf16.msra.mxu0 %v4511
    %4531 = vmatmul.bf16.gmra.mxu0 %v4521
    %v4532 = vpop.f32.mrf.mxu0
    %v4533 = vadd.f32 %v4493, %v4532
    %v4534 = vpop.f32.mrf.mxu0
    %4535 = vdwg.mxu0
    %vm4536 = vcmask 72704
    %v4537 = vsel %vm4536, %v4533, -inf
    %4538 = vmax.xlane.f32.xlu0 %v4537
    %v4539 = vpop.xlane.xlu0 %4538
    %v4540 = vlaneseq
    %v4541 = vand.u32 %v4540, 127
    %vm4542 = vcmp.eq.f32.partialorder %v4533, %v4539
    %v4543 = vsel %vm4542, %v4541, 2147483647
    %v4544 = vsel %vm4536, %v4543, 2147483647
    %v4545 = vand.u32 %v4544, 65535
    %v4546 = vshra.s32 %v4544, 16
    %v4547 = vcvt.s32.f32 %v4545
    %v4548 = vcvt.s32.f32 %v4546
    %4549 = vmin.xlane.f32.xlu0 %v4548
    %v4550 = vpop.xlane.xlu0 %4549
    %vm4551 = vcmp.eq.f32.partialorder %v4548, %v4550
    %v4552 = vsel %vm4551, %v4547, inf
    %4553 = vmin.xlane.f32.xlu0 %v4552
    %v4554 = vpop.xlane.xlu0 %4553
    %v4555 = vcvt.f32.s32 %v4554
    %v4556 = vcvt.f32.s32 %v4550
    %v4557 = vshll.u32 %v4556, 16
    %v4558 = vadd.s32 %v4557, %v4555
    %4560 = vrot.lane.b32.xlu0 %v4533, 1
    %v4561 = vpop.permute.xlu0 %4560
    %vm4563 = vcmp.gt.f32.partialorder %v4533, %v4561
    %v4564 = vsel %vm4563, 1, 0
    %4565 = vrot.lane.b32.xlu0 %v4564, 118
    %v4566 = vpop.permute.xlu0 %4565
    %vm4567 = vcmask 7168
    %v4568 = vsel %vm4567, %v4566, %v4558
    %vm4569 = vcmask 15360
    %4570 = vst.msk [vmem:[%s9] sm:$0xff] %vm4569, %v4568
    // Predicated region
    $region66: #{tpu_custom_call.1} parent=1 // pred_check
      _
    $region67: #{tpu_custom_call.1} parent=1 // pred_check_branch
      %4572 = sbr.rel (0) target = $region69
    $region68: #{tpu_custom_call.1} parent=1 // pred_region
      _
    $region69: #{tpu_custom_call.1} parent=1 // pred_fallthru
      _
    // Predicated region
    $region70: #{tpu_custom_call.1} parent=1 // pred_check
      _
    $region71: #{tpu_custom_call.1} parent=1 // pred_check_branch
      %4574 = sbr.rel (0) target = $region73
    $region72: #{tpu_custom_call.1} parent=1 // pred_region
      _
    $region73: #{tpu_custom_call.1} parent=1 // pred_fallthru
      _
    %4575 = vsyncpa [#allocation3], 1
    %4576 = vsyncpa [#allocation5], 1
    %4577 = vsyncpa [#allocation8], 1
    %4578 = vsyncpa [#allocation11], 1

</llo_original>
